<compile_context>
chip_gen: v6e
topology: v6e:2x2x1
jax: 0.10.0
libtpu: 0.0.40
codegen_flags: <defaults>
</compile_context>

<pallas_src>
import functools
import math

import jax
import jax.numpy as jnp
from jax.experimental import pallas as pl
from jax.experimental.pallas import tpu as pltpu


# ----------------------------------------------------------------------------
# tile-size / VMEM helpers
# ----------------------------------------------------------------------------
def _row_tile(m, target=512):
    """Largest divisor of m <= target, preferring MXU-shaped multiples of 256,
    then 128, then 8.  No artificial >=2-step split (that is pure per-step
    overhead on v5e's single TensorCore; multi-step grids arise naturally once
    m > target)."""
    for step in (256, 128, 8):
        cands = [t for t in range(step, min(m, target) + 1, step) if m % t == 0]
        if cands:
            return max(cands)
    return m


def _ff_tile(d_ff, target=512):
    """d_ff reduction tile: largest multiple of 256 (then 128) dividing d_ff."""
    for step in (256, 128):
        cands = [t for t in range(step, min(d_ff, target) + 1, step) if d_ff % t == 0]
        if cands:
            return max(cands)
    return d_ff


def _vmem_cap_bytes():
    """Hardware VMEM capacity (64 MiB on v7x, 128 MiB on v5e/v6e)."""
    try:
        return int(pltpu.get_tpu_info().vmem_capacity_bytes)
    except Exception:
        return 64 * 1024 * 1024  # conservative fallback (v7x per-TC capacity)


# ----------------------------------------------------------------------------
# shared in-kernel math (all f32; torch-parity LayerNorm: unbiased std, eps on std)
# ----------------------------------------------------------------------------
def _layernorm_f32(x, a, b, eps=1e-6):
    d = x.shape[-1]
    mean = jnp.mean(x, axis=-1, keepdims=True)
    xc = x - mean
    var = jnp.sum(xc * xc, axis=-1, keepdims=True) / float(d - 1)   # torch.std (unbiased)
    return a * xc / (jnp.sqrt(var) + eps) + b


def _attn_core(q, k, v, mask, num_heads):
    """q (tq,d), k/v (tk,d), mask (1|tq, tk) int.  All heads per call; static
    lane slices per head; output written back lane-dense as (tq, d)."""
    q = q.astype(jnp.float32)
    k = k.astype(jnp.float32)
    v = v.astype(jnp.float32)
    d = q.shape[-1]
    dh = d // num_heads
    scale = 1.0 / math.sqrt(dh)
    outs = []
    for h in range(num_heads):
        qh = q[:, h * dh:(h + 1) * dh]
        kh = k[:, h * dh:(h + 1) * dh]
        vh = v[:, h * dh:(h + 1) * dh]
        s = jax.lax.dot_general(qh, kh, (((1,), (1,)), ((), ())),
                                preferred_element_type=jnp.float32) * scale
        s = jnp.where(mask != 0, s, jnp.float32(-1e9))
        m = jnp.max(s, axis=-1, keepdims=True)
        p = jnp.exp(s - m)
        p = p / jnp.sum(p, axis=-1, keepdims=True)
        # TODO(synk): attention dropout is identity (inference mode).
        outs.append(jnp.dot(p, vh, preferred_element_type=jnp.float32))
    return jnp.concatenate(outs, axis=-1)                        # (tq, d)


# ----------------------------------------------------------------------------
# fused LayerNorm + Linear  (y = LN(x) @ W + b) — used for QKV / Q projections
# ----------------------------------------------------------------------------
def _ln_linear_kernel(x_ref, a_ref, b_ref, w_ref, bias_ref, o_ref):
    x = x_ref[...].astype(jnp.float32)
    xn = _layernorm_f32(x, a_ref[...].astype(jnp.float32),
                        b_ref[...].astype(jnp.float32))
    # cast back to the operand dtype so bf16 inputs/weights use native MXU.
    y = jnp.dot(xn.astype(w_ref.dtype), w_ref[...],
                preferred_element_type=jnp.float32)
    o_ref[...] = (y + bias_ref[...].astype(jnp.float32)).astype(o_ref.dtype)


def fused_ln_linear(x2, ln_a, ln_b, w_t, bias):
    m, d = x2.shape
    n = w_t.shape[1]
    tm = _row_tile(m)
    itemsize = x2.dtype.itemsize
    cost = pl.CostEstimate(flops=2 * m * d * n + 8 * m * d, transcendentals=0,
                           bytes_accessed=(m * d + d * n + m * n + 2 * d + n) * itemsize)
    # NOTE: the constant weight/bias/LN-scale operands (index_map == (0,0)) could
    # be single-buffered via pipeline_mode=pl.Buffered(1) to halve their VMEM
    # footprint on v7x's 64 MiB once d_model is large.
    return pl.pallas_call(
        _ln_linear_kernel,
        out_shape=jax.ShapeDtypeStruct((m, n), x2.dtype),
        grid_spec=pltpu.PrefetchScalarGridSpec(
            num_scalar_prefetch=0,
            grid=(m // tm,),
            in_specs=[
                pl.BlockSpec((tm, d), lambda i: (i, 0)),
                pl.BlockSpec((1, d), lambda i: (0, 0)),
                pl.BlockSpec((1, d), lambda i: (0, 0)),
                pl.BlockSpec((d, n), lambda i: (0, 0)),
                pl.BlockSpec((1, n), lambda i: (0, 0)),
            ],
            out_specs=pl.BlockSpec((tm, n), lambda i: (i, 0)),
        ),
        compiler_params=pltpu.CompilerParams(dimension_semantics=("parallel",)),
        cost_estimate=cost,
    )(x2, ln_a.reshape(1, d), ln_b.reshape(1, d), w_t, bias.reshape(1, n))


# ----------------------------------------------------------------------------
# plain Linear (memory K|V projection) and Linear + residual (out projection)
# ----------------------------------------------------------------------------
def _linear_kernel(x_ref, w_ref, b_ref, o_ref):
    y = jnp.dot(x_ref[...], w_ref[...], preferred_element_type=jnp.float32)
    o_ref[...] = (y + b_ref[...].astype(jnp.float32)).astype(o_ref.dtype)


def linear(x2, w_t, bias):
    m, k = x2.shape
    n = w_t.shape[1]
    tm = _row_tile(m)
    itemsize = x2.dtype.itemsize
    cost = pl.CostEstimate(flops=2 * m * k * n, transcendentals=0,
                           bytes_accessed=(m * k + k * n + m * n + n) * itemsize)
    return pl.pallas_call(
        _linear_kernel,
        out_shape=jax.ShapeDtypeStruct((m, n), x2.dtype),
        grid_spec=pltpu.PrefetchScalarGridSpec(
            num_scalar_prefetch=0,
            grid=(m // tm,),
            in_specs=[
                pl.BlockSpec((tm, k), lambda i: (i, 0)),
                pl.BlockSpec((k, n), lambda i: (0, 0)),
                pl.BlockSpec((1, n), lambda i: (0, 0)),
            ],
            out_specs=pl.BlockSpec((tm, n), lambda i: (i, 0)),
        ),
        compiler_params=pltpu.CompilerParams(dimension_semantics=("parallel",)),
        cost_estimate=cost,
    )(x2, w_t, bias.reshape(1, n))


def _linear_residual_kernel(x_ref, res_ref, w_ref, b_ref, o_ref):
    y = jnp.dot(x_ref[...], w_ref[...], preferred_element_type=jnp.float32)
    y = y + b_ref[...].astype(jnp.float32) + res_ref[...].astype(jnp.float32)
    o_ref[...] = y.astype(o_ref.dtype)


def linear_residual(x2, res2, w_t, bias):
    m, k = x2.shape
    n = w_t.shape[1]
    tm = _row_tile(m)
    itemsize = x2.dtype.itemsize
    cost = pl.CostEstimate(flops=2 * m * k * n, transcendentals=0,
                           bytes_accessed=(m * k + m * n + k * n + m * n + n) * itemsize)
    return pl.pallas_call(
        _linear_residual_kernel,
        out_shape=jax.ShapeDtypeStruct((m, n), x2.dtype),
        grid_spec=pltpu.PrefetchScalarGridSpec(
            num_scalar_prefetch=0,
            grid=(m // tm,),
            in_specs=[
                pl.BlockSpec((tm, k), lambda i: (i, 0)),
                pl.BlockSpec((tm, n), lambda i: (i, 0)),
                pl.BlockSpec((k, n), lambda i: (0, 0)),
                pl.BlockSpec((1, n), lambda i: (0, 0)),
            ],
            out_specs=pl.BlockSpec((tm, n), lambda i: (i, 0)),
        ),
        compiler_params=pltpu.CompilerParams(dimension_semantics=("parallel",)),
        cost_estimate=cost,
    )(x2, res2, w_t, bias.reshape(1, n))


# ----------------------------------------------------------------------------
# attention cores: one batch (all heads) per grid step, (b, t, d) layout
# ----------------------------------------------------------------------------
def _self_mha_kernel(qkv_ref, mask_ref, o_ref, *, num_heads, d):
    qkv = qkv_ref[0]                                   # (t, 3d), lane-dense
    q = qkv[:, 0:d]
    k = qkv[:, d:2 * d]
    v = qkv[:, 2 * d:3 * d]
    o_ref[0] = _attn_core(q, k, v, mask_ref[0], num_heads).astype(o_ref.dtype)


def _cross_mha_kernel(q_ref, kv_ref, mask_ref, o_ref, *, num_heads, d):
    q = q_ref[0]                                       # (tq, d)
    kv = kv_ref[0]                                     # (tk, 2d)
    k = kv[:, 0:d]
    v = kv[:, d:2 * d]
    o_ref[0] = _attn_core(q, k, v, mask_ref[0], num_heads).astype(o_ref.dtype)


def _attn_cost(b, tq, tk, d, num_heads, itemsize, q_width, kv_width):
    return pl.CostEstimate(
        flops=4 * b * tq * tk * d,
        transcendentals=b * num_heads * tq * tk,
        bytes_accessed=(b * tq * q_width + b * tk * kv_width + b * tq * d) * itemsize)


def mha_self(qkv, mask, *, num_heads):
    b, t, d3 = qkv.shape
    d = d3 // 3
    mask = mask.astype(jnp.int32)                      # original shape, never broadcast
    mb, mq, mk = mask.shape
    mask_map = (lambda i: (0, 0, 0)) if mb == 1 else (lambda i: (i, 0, 0))
    kernel = functools.partial(_self_mha_kernel, num_heads=num_heads, d=d)
    return pl.pallas_call(
        kernel,
        out_shape=jax.ShapeDtypeStruct((b, t, d), qkv.dtype),
        grid_spec=pltpu.PrefetchScalarGridSpec(
            num_scalar_prefetch=0,
            grid=(b,),
            in_specs=[
                pl.BlockSpec((1, t, d3), lambda i: (i, 0, 0)),
                pl.BlockSpec((1, mq, mk), mask_map),
            ],
            out_specs=pl.BlockSpec((1, t, d), lambda i: (i, 0, 0)),
        ),
        compiler_params=pltpu.CompilerParams(dimension_semantics=("parallel",)),
        cost_estimate=_attn_cost(b, t, t, d, num_heads, qkv.dtype.itemsize, d3, d3),
    )(qkv, mask)


def mha_cross(q, kv, mask, *, num_heads):
    b, tq, d = q.shape
    tk = kv.shape[1]
    mask = mask.astype(jnp.int32)
    mb, mq, mk = mask.shape
    mask_map = (lambda i: (0, 0, 0)) if mb == 1 else (lambda i: (i, 0, 0))
    kernel = functools.partial(_cross_mha_kernel, num_heads=num_heads, d=d)
    return pl.pallas_call(
        kernel,
        out_shape=jax.ShapeDtypeStruct((b, tq, d), q.dtype),
        grid_spec=pltpu.PrefetchScalarGridSpec(
            num_scalar_prefetch=0,
            grid=(b,),
            in_specs=[
                pl.BlockSpec((1, tq, d), lambda i: (i, 0, 0)),
                pl.BlockSpec((1, tk, 2 * d), lambda i: (i, 0, 0)),
                pl.BlockSpec((1, mq, mk), mask_map),
            ],
            out_specs=pl.BlockSpec((1, tq, d), lambda i: (i, 0, 0)),
        ),
        compiler_params=pltpu.CompilerParams(dimension_semantics=("parallel",)),
        cost_estimate=_attn_cost(b, tq, tk, d, num_heads, q.dtype.itemsize, d, 2 * d),
    )(q, kv, mask)


# ----------------------------------------------------------------------------
# fused mod_controller + LN4 + FFN + residual, d_ff-tiled with f32 accumulator
# ----------------------------------------------------------------------------
def _gated_ffn_kernel(att_ref, attr_ref, rela_ref, q_ref, lna_ref, lnb_ref,
                      w1_ref, b1_ref, w2_ref, b2_ref, o_ref,
                      xln_ref, xmod_ref, acc_ref):
    k = pl.program_id(1)

    @pl.when(k == 0)
    def _():
        q = q_ref[...].astype(jnp.float32)
        ma = att_ref[...].astype(jnp.float32)
        mb = attr_ref[...].astype(jnp.float32)
        mc = rela_ref[...].astype(jnp.float32)
        d = q.shape[-1]
        scale = 1.0 / math.sqrt(d)
        sa = jnp.sum(q * ma, axis=-1, keepdims=True) * scale
        sb = jnp.sum(q * mb, axis=-1, keepdims=True) * scale
        sc = jnp.sum(q * mc, axis=-1, keepdims=True) * scale
        mx = jnp.maximum(jnp.maximum(sa, sb), sc)
        ea = jnp.exp(sa - mx)
        eb = jnp.exp(sb - mx)
        ec = jnp.exp(sc - mx)
        inv = 1.0 / (ea + eb + ec)
        xmod = ma * (ea * inv) + mb * (eb * inv) + mc * (ec * inv)
        xmod_ref[...] = xmod                                          # residual base
        xln = _layernorm_f32(xmod, lna_ref[...].astype(jnp.float32),
                             lnb_ref[...].astype(jnp.float32))
        xln_ref[...] = xln.astype(xln_ref.dtype)                      # matmul operand
        acc_ref[...] = jnp.zeros_like(acc_ref)

    h = jnp.dot(xln_ref[...], w1_ref[...], preferred_element_type=jnp.float32)
    h = jnp.maximum(h + b1_ref[...].astype(jnp.float32), 0.0)
    # TODO(synk): FFN dropout is identity (inference); training would draw a
    # keep-mask with pltpu.prng_seed / pltpu.prng_random_bits here.
    # Intentional: h is cast to the weight dtype (bf16 when running bf16) so the
    # second matmul also uses native MXU throughput; exact no-op for f32.
    acc_ref[...] += jnp.dot(h.astype(w2_ref.dtype), w2_ref[...],
                            preferred_element_type=jnp.float32)

    @pl.when(k == pl.num_programs(1) - 1)
    def _():
        y = acc_ref[...] + b2_ref[...].astype(jnp.float32) + xmod_ref[...]
        o_ref[...] = y.astype(o_ref.dtype)


def gated_ffn_residual(att2, attr2, rela2, q2, ln_a, ln_b, w1_t, b1, w2_t, b2):
    m, d = q2.shape
    d_ff = w1_t.shape[1]
    tm = _row_tile(m)
    tf = _ff_tile(d_ff)
    itemsize = q2.dtype.itemsize
    # rough budget: 4 gate inputs + output (double-buffered), weight slices, scratch
    vmem_bytes = (
        4 * 2 * tm * d * itemsize
        + 2 * tm * d * itemsize
        + 2 * (d * tf + tf + tf * d + d) * itemsize
        + tm * d * itemsize + 2 * tm * d * 4
    )
    # v7x-safe: never exceed 3/4 of the physical VMEM capacity (64 MiB on v7x).
    vmem_limit = min(int(0.75 * _vmem_cap_bytes()),
                     max(32 * 1024 * 1024, 2 * vmem_bytes))
    cost = pl.CostEstimate(
        flops=4 * m * d * d_ff + 12 * m * d,
        transcendentals=4 * m,
        bytes_accessed=(5 * m * d + 2 * d * d_ff + d_ff + 3 * d) * itemsize)
    row_spec = pl.BlockSpec((tm, d), lambda i, k: (i, 0))
    return pl.pallas_call(
        _gated_ffn_kernel,
        out_shape=jax.ShapeDtypeStruct((m, d), q2.dtype),
        grid_spec=pltpu.PrefetchScalarGridSpec(
            num_scalar_prefetch=0,
            grid=(m // tm, d_ff // tf),
            in_specs=[
                row_spec, row_spec, row_spec, row_spec,           # x_att, x_attr, x_rela, x
                pl.BlockSpec((1, d), lambda i, k: (0, 0)),        # LN4 scale
                pl.BlockSpec((1, d), lambda i, k: (0, 0)),        # LN4 shift
                pl.BlockSpec((d, tf), lambda i, k: (0, k)),       # W1^T slice
                pl.BlockSpec((1, tf), lambda i, k: (0, k)),       # b1 slice
                pl.BlockSpec((tf, d), lambda i, k: (k, 0)),       # W2^T slice
                pl.BlockSpec((1, d), lambda i, k: (0, 0)),        # b2 (finalize only)
            ],
            out_specs=pl.BlockSpec((tm, d), lambda i, k: (i, 0)),
            scratch_shapes=[
                pltpu.VMEM((tm, d), q2.dtype),      # LN4(mod_controller(x))
                pltpu.VMEM((tm, d), jnp.float32),   # mod_controller(x) residual
                pltpu.VMEM((tm, d), jnp.float32),   # f32 accumulator
            ],
        ),
        compiler_params=pltpu.CompilerParams(
            dimension_semantics=("parallel", "arbitrary"),
            vmem_limit_bytes=vmem_limit,
        ),
        cost_estimate=cost,
    )(att2, attr2, rela2, q2, ln_a.reshape(1, d), ln_b.reshape(1, d),
      w1_t, b1.reshape(1, d_ff), w2_t, b2.reshape(1, d))


# ----------------------------------------------------------------------------
# DecoderLayer forward
# ----------------------------------------------------------------------------
@functools.partial(jax.jit, static_argnames=("num_heads",))
def decoder_layer_forward(params, x, memory_att, memory_attr, memory_rela,
                          mask_att, mask_attr, mask_rela, tgt_mask, *, num_heads):
    b, t, d = x.shape

    def self_attention_block(xin):
        p = params["self_attn"]
        ln = params["ln"][0]
        # fused Q|K|V projection (one lane-dense (d, 3d) matmul, LN fused in).
        wqkv = jnp.concatenate([p["wq"], p["wk"], p["wv"]], axis=1)
        bqkv = jnp.concatenate([p["bq"], p["bk"], p["bv"]], axis=0)
        qkv = fused_ln_linear(xin.reshape(b * t, d), ln["a"], ln["b"], wqkv, bqkv)
        ctx = mha_self(qkv.reshape(b, t, 3 * d), tgt_mask, num_heads=num_heads)
        return linear_residual(ctx.reshape(b * t, d), xin.reshape(b * t, d),
                               p["wo"], p["bo"]).reshape(b, t, d)

    def cross_attention_block(xin, mem, mask, p, ln):
        tmem = mem.shape[1]
        q = fused_ln_linear(xin.reshape(b * t, d), ln["a"], ln["b"], p["wq"], p["bq"])
        wkv = jnp.concatenate([p["wk"], p["wv"]], axis=1)        # fused K|V
        bkv = jnp.concatenate([p["bk"], p["bv"]], axis=0)
        kv = linear(mem.reshape(b * tmem, d), wkv, bkv)
        ctx = mha_cross(q.reshape(b, t, d), kv.reshape(b, tmem, 2 * d), mask,
                        num_heads=num_heads)
        return linear_residual(ctx.reshape(b * t, d), xin.reshape(b * t, d),
                               p["wo"], p["bo"]).reshape(b, t, d)

    # sublayer 0: masked self-attention (LN + QKV fused, residual fused)
    x = self_attention_block(x)

    # sublayers 1-3: three cross-attentions over the three memories
    x_att = cross_attention_block(x, memory_att, mask_att,
                                  params["src_attn_att"], params["ln"][1])
    x_attr = cross_attention_block(x, memory_attr, mask_attr,
                                   params["src_attn_attr"], params["ln"][2])
    x_rela = cross_attention_block(x, memory_rela, mask_rela,
                                   params["src_attn_rela"], params["ln"][3])

    # sublayer 4: mod_controller gate + LN4 + FFN + residual, all in one kernel
    f = params["ffn"]
    ln4 = params["ln"][4]
    y = gated_ffn_residual(x_att.reshape(b * t, d), x_attr.reshape(b * t, d),
                           x_rela.reshape(b * t, d), x.reshape(b * t, d),
                           ln4["a"], ln4["b"], f["w1"], f["b1"], f["w2"], f["b2"])
    return y.reshape(b, t, d)


# ----------------------------------------------------------------------------
# Parameter init (weights stored transposed: (in, out))
# ----------------------------------------------------------------------------
def init_params(key, d_model, d_ff, dtype=jnp.float32):
    keys = iter(jax.random.split(key, 64))

    def linear_p(fan_in, fan_out):
        lim = 1.0 / math.sqrt(fan_in)
        w = jax.random.uniform(next(keys), (fan_in, fan_out), dtype, -lim, lim)
        bb = jax.random.uniform(next(keys), (fan_out,), dtype, -lim, lim)
        return w, bb

    def attn_p():
        wq, bq = linear_p(d_model, d_model)
        wk, bk = linear_p(d_model, d_model)
        wv, bv = linear_p(d_model, d_model)
        wo, bo = linear_p(d_model, d_model)
        return dict(wq=wq, bq=bq, wk=wk, bk=bk, wv=wv, bv=bv, wo=wo, bo=bo)

    w1, b1 = linear_p(d_model, d_ff)
    w2, b2 = linear_p(d_ff, d_model)

    return dict(
        ln=[dict(a=1.0 + 0.1 * jax.random.normal(next(keys), (d_model,), dtype),
                 b=0.1 * jax.random.normal(next(keys), (d_model,), dtype))
            for _ in range(5)],
        self_attn=attn_p(),
        src_attn_att=attn_p(),
        src_attn_attr=attn_p(),
        src_attn_rela=attn_p(),
        ffn=dict(w1=w1, b1=b1, w2=w2, b2=b2),
    )


# ----------------------------------------------------------------------------
# Pure-JAX reference (mirrors the PyTorch module, dropout = identity)
# ----------------------------------------------------------------------------
def _ref_layernorm(x, a, b, eps=1e-6):
    mean = x.mean(-1, keepdims=True)
    var = ((x - mean) ** 2).sum(-1, keepdims=True) / (x.shape[-1] - 1)
    return a * (x - mean) / (jnp.sqrt(var) + eps) + b


def _ref_attention(p, q, k, v, mask, num_heads):
    b, tq, d = q.shape
    tk = k.shape[1]
    dh = d // num_heads

    def proj(x, w, bb, t):
        return (x.reshape(-1, d) @ w + bb).reshape(b, t, num_heads, dh).transpose(0, 2, 1, 3)

    qh, kh, vh = (proj(q, p["wq"], p["bq"], tq), proj(k, p["wk"], p["bk"], tk),
                  proj(v, p["wv"], p["bv"], tk))
    s = jnp.einsum("bhqd,bhkd->bhqk", qh, kh) / math.sqrt(dh)
    m = jnp.broadcast_to(mask, (b, tq, tk))[:, None, :, :]
    s = jnp.where(m != 0, s, -1e9)
    ctx = jnp.einsum("bhqk,bhkd->bhqd", jax.nn.softmax(s, axis=-1), vh)
    ctx = ctx.transpose(0, 2, 1, 3).reshape(b, tq, d)
    return ctx @ p["wo"] + p["bo"]


def _ref_mod_controller(m_att, m_attr, m_rela, query):
    m = jnp.stack((m_att, m_attr, m_rela), axis=3)                 # (b, t, d, 3)
    scores = jnp.einsum("btd,btdj->btj", query, m) / math.sqrt(query.shape[-1])
    w = jax.nn.softmax(scores, axis=-1)
    return jnp.einsum("btdj,btj->btd", m, w)


def _ref_decoder_layer(params, x, ma, mb, mc, mask_a, mask_b, mask_c, tgt_mask, num_heads):
    def ln(i, y):
        return _ref_layernorm(y, params["ln"][i]["a"], params["ln"][i]["b"])
    xn = ln(0, x)
    x = x + _ref_attention(params["self_attn"], xn, xn, xn, tgt_mask, num_heads)
    x_att = x + _ref_attention(params["src_attn_att"], ln(1, x), ma, ma, mask_a, num_heads)
    x_attr = x + _ref_attention(params["src_attn_attr"], ln(2, x), mb, mb, mask_b, num_heads)
    x_rela = x + _ref_attention(params["src_attn_rela"], ln(3, x), mc, mc, mask_c, num_heads)
    x = _ref_mod_controller(x_att, x_attr, x_rela, x)
    f = params["ffn"]
    h = jnp.maximum(ln(4, x) @ f["w1"] + f["b1"], 0.0)
    return x + h @ f["w2"] + f["b2"]


# ----------------------------------------------------------------------------
if __name__ == "__main__":
    key = jax.random.PRNGKey(0)
    batch, seq, mem_len = 2, 8, 8
    d_model, d_ff, num_heads = 128, 256, 4        # lane-dense feature dims (x128)

    k_x, k_ma, k_mb, k_mc, k_m1, k_m2, k_m3, k_p = jax.random.split(key, 8)
    x = jax.random.normal(k_x, (batch, seq, d_model), jnp.float32)
    mem_att = jax.random.normal(k_ma, (batch, mem_len, d_model), jnp.float32)
    mem_attr = jax.random.normal(k_mb, (batch, mem_len, d_model), jnp.float32)
    mem_rela = jax.random.normal(k_mc, (batch, mem_len, d_model), jnp.float32)

    # masks: 1 = attend, 0 = masked (causal target mask, random source padding).
    # They are passed in their original un-broadcast shapes.
    tgt_mask = jnp.tril(jnp.ones((seq, seq), jnp.int32))[None]            # (1, Tq, Tq)
    mask_att = (jax.random.uniform(k_m1, (batch, 1, mem_len)) > 0.2).astype(jnp.int32)
    mask_attr = (jax.random.uniform(k_m2, (batch, 1, mem_len)) > 0.2).astype(jnp.int32)
    mask_rela = (jax.random.uniform(k_m3, (batch, 1, mem_len)) > 0.2).astype(jnp.int32)

    params = init_params(k_p, d_model, d_ff)

    # ---- f32 run: exact parity with the PyTorch-equivalent reference --------
    y = decoder_layer_forward(params, x, mem_att, mem_attr, mem_rela,
                              mask_att, mask_attr, mask_rela, tgt_mask,
                              num_heads=num_heads)
    jax.block_until_ready(y)

    ref = _ref_decoder_layer(params, x, mem_att, mem_attr, mem_rela,
                             mask_att, mask_attr, mask_rela, tgt_mask, num_heads)
    assert y.shape == (batch, seq, d_model)
    err = float(jnp.max(jnp.abs(y - ref)))
    assert jnp.allclose(y, ref, atol=2e-4, rtol=2e-4), err

    # ---- bf16 run (v6e/v7x feedback): bf16 operands on the MXU, f32 accum ---
    def _to_bf16(tree):
        return jax.tree_util.tree_map(
            lambda a: a.astype(jnp.bfloat16)
            if jnp.issubdtype(a.dtype, jnp.floating) else a, tree)

    y_bf16 = decoder_layer_forward(_to_bf16(params), x.astype(jnp.bfloat16),
                                   mem_att.astype(jnp.bfloat16),
                                   mem_attr.astype(jnp.bfloat16),
                                   mem_rela.astype(jnp.bfloat16),
                                   mask_att, mask_attr, mask_rela, tgt_mask,
                                   num_heads=num_heads)
    jax.block_until_ready(y_bf16)
    assert y_bf16.shape == (batch, seq, d_model)
    y_bf16_f32 = y_bf16.astype(jnp.float32)
    assert bool(jnp.isfinite(y_bf16_f32).all())
    assert float(jnp.max(jnp.abs(y_bf16_f32 - ref))) < 1.0

    print("KERNEL_OK")
</pallas_src>

<mosaic_0001>
module attributes {stable_mosaic.version = 11 : i64} {
  func.func @_ln_linear_kernel(%arg0: i32, %arg1: memref<16x128xf32, #tpu.memory_space<vmem>>, %arg2: memref<1x128xf32, #tpu.memory_space<vmem>>, %arg3: memref<1x128xf32, #tpu.memory_space<vmem>>, %arg4: memref<128x384xf32, #tpu.memory_space<vmem>>, %arg5: memref<1x384xf32, #tpu.memory_space<vmem>>, %arg6: memref<16x384xf32, #tpu.memory_space<vmem>>) attributes {dimension_semantics = [#tpu.dimension_semantics<parallel>], iteration_bounds = array<i64: 1>, scalar_prefetch = 0 : i64, scratch_operands = 0 : i64, tpu.core_type = #tpu.core_type<tc>, window_params = [{transform_indices = @transform_0, window_bounds = array<i64: 16, 128>}, {pipeline_mode = #tpu.pipeline_mode<synchronous>, transform_indices = @transform_1, window_bounds = array<i64: 1, 128>}, {pipeline_mode = #tpu.pipeline_mode<synchronous>, transform_indices = @transform_2, window_bounds = array<i64: 1, 128>}, {pipeline_mode = #tpu.pipeline_mode<synchronous>, transform_indices = @transform_3, window_bounds = array<i64: 128, 384>}, {pipeline_mode = #tpu.pipeline_mode<synchronous>, transform_indices = @transform_4, window_bounds = array<i64: 1, 384>}, {transform_indices = @transform_5, window_bounds = array<i64: 16, 384>}]} {
    %c0 = arith.constant 0 : index
    %c0_0 = arith.constant 0 : index
    %0 = vector.load %arg1[%c0, %c0_0] : memref<16x128xf32, #tpu.memory_space<vmem>>, vector<16x128xf32>
    %c0_1 = arith.constant 0 : index
    %c0_2 = arith.constant 0 : index
    %1 = vector.load %arg2[%c0_1, %c0_2] : memref<1x128xf32, #tpu.memory_space<vmem>>, vector<1x128xf32>
    %c0_3 = arith.constant 0 : index
    %c0_4 = arith.constant 0 : index
    %2 = vector.load %arg3[%c0_3, %c0_4] : memref<1x128xf32, #tpu.memory_space<vmem>>, vector<1x128xf32>
    %cst = arith.constant dense<0.000000e+00> : vector<16xf32>
    %3 = vector.multi_reduction <add>, %0, %cst [1] : vector<16x128xf32> to vector<16xf32>
    %4 = vector.shape_cast %3 : vector<16xf32> to vector<16x1xf32>
    %cst_5 = arith.constant 1.280000e+02 : f32
    %5 = vector.broadcast %cst_5 : f32 to vector<16x1xf32>
    %6 = arith.divf %4, %5 : vector<16x1xf32>
    %7 = vector.broadcast %6 : vector<16x1xf32> to vector<16x128xf32>
    %8 = arith.subf %0, %7 : vector<16x128xf32>
    %9 = arith.mulf %8, %8 : vector<16x128xf32>
    %cst_6 = arith.constant dense<0.000000e+00> : vector<16xf32>
    %10 = vector.multi_reduction <add>, %9, %cst_6 [1] : vector<16x128xf32> to vector<16xf32>
    %11 = vector.shape_cast %10 : vector<16xf32> to vector<16x1xf32>
    %cst_7 = arith.constant 1.270000e+02 : f32
    %12 = vector.broadcast %cst_7 : f32 to vector<16x1xf32>
    %13 = arith.divf %11, %12 : vector<16x1xf32>
    %14 = vector.broadcast %1 : vector<1x128xf32> to vector<16x128xf32>
    %15 = arith.mulf %14, %8 : vector<16x128xf32>
    %16 = math.sqrt %13 : vector<16x1xf32>
    %cst_8 = arith.constant 9.99999997E-7 : f32
    %17 = vector.broadcast %cst_8 : f32 to vector<16x1xf32>
    %18 = arith.addf %16, %17 : vector<16x1xf32>
    %19 = vector.broadcast %18 : vector<16x1xf32> to vector<16x128xf32>
    %20 = arith.divf %15, %19 : vector<16x128xf32>
    %21 = vector.broadcast %2 : vector<1x128xf32> to vector<16x128xf32>
    %22 = arith.addf %20, %21 : vector<16x128xf32>
    %c0_9 = arith.constant 0 : index
    %c0_10 = arith.constant 0 : index
    %23 = vector.load %arg4[%c0_9, %c0_10] : memref<128x384xf32, #tpu.memory_space<vmem>>, vector<128x384xf32>
    %cst_11 = arith.constant dense<0.000000e+00> : vector<16x384xf32>
    %24 = tpu.matmul %22, %23, %cst_11 {dimension_numbers = #tpu.dot_dimension_numbers<[1], [0], [0], [1], [0, 0, 1, 1], [], []>} : vector<16x128xf32>, vector<128x384xf32>, vector<16x384xf32> -> vector<16x384xf32>
    %c0_12 = arith.constant 0 : index
    %c0_13 = arith.constant 0 : index
    %25 = vector.load %arg5[%c0_12, %c0_13] : memref<1x384xf32, #tpu.memory_space<vmem>>, vector<1x384xf32>
    %26 = vector.broadcast %25 : vector<1x384xf32> to vector<16x384xf32>
    %27 = arith.addf %24, %26 : vector<16x384xf32>
    %c0_14 = arith.constant 0 : index
    %c0_15 = arith.constant 0 : index
    %28 = vector.load %arg6[%c0_14, %c0_15] : memref<16x384xf32, #tpu.memory_space<vmem>>, vector<16x384xf32>
    tpu.vector_store %arg6[%c0_14, %c0_15], %27 {strides = array<i32>} : memref<16x384xf32, #tpu.memory_space<vmem>>, vector<16x384xf32>,
    return
  }
  func.func @transform_0(%arg0: i32) -> (i32, i32) {
    %c0_i32 = arith.constant 0 : i32
    %c0_i32_0 = arith.constant 0 : i32
    return %arg0, %c0_i32 : i32, i32
  }
  func.func @transform_1(%arg0: i32) -> (i32, i32) {
    %c0_i32 = arith.constant 0 : i32
    %c0_i32_0 = arith.constant 0 : i32
    %c0_i32_1 = arith.constant 0 : i32
    return %c0_i32, %c0_i32_0 : i32, i32
  }
  func.func @transform_2(%arg0: i32) -> (i32, i32) {
    %c0_i32 = arith.constant 0 : i32
    %c0_i32_0 = arith.constant 0 : i32
    %c0_i32_1 = arith.constant 0 : i32
    return %c0_i32, %c0_i32_0 : i32, i32
  }
  func.func @transform_3(%arg0: i32) -> (i32, i32) {
    %c0_i32 = arith.constant 0 : i32
    %c0_i32_0 = arith.constant 0 : i32
    %c0_i32_1 = arith.constant 0 : i32
    return %c0_i32, %c0_i32_0 : i32, i32
  }
  func.func @transform_4(%arg0: i32) -> (i32, i32) {
    %c0_i32 = arith.constant 0 : i32
    %c0_i32_0 = arith.constant 0 : i32
    %c0_i32_1 = arith.constant 0 : i32
    return %c0_i32, %c0_i32_0 : i32, i32
  }
  func.func @transform_5(%arg0: i32) -> (i32, i32) {
    %c0_i32 = arith.constant 0 : i32
    %c0_i32_0 = arith.constant 0 : i32
    return %arg0, %c0_i32 : i32, i32
  }
}

module attributes {stable_mosaic.version = 11 : i64} {
  func.func @_linear_residual_kernel(%arg0: i32, %arg1: memref<16x128xf32, #tpu.memory_space<vmem>>, %arg2: memref<16x128xf32, #tpu.memory_space<vmem>>, %arg3: memref<128x128xf32, #tpu.memory_space<vmem>>, %arg4: memref<1x128xf32, #tpu.memory_space<vmem>>, %arg5: memref<16x128xf32, #tpu.memory_space<vmem>>) attributes {dimension_semantics = [#tpu.dimension_semantics<parallel>], iteration_bounds = array<i64: 1>, scalar_prefetch = 0 : i64, scratch_operands = 0 : i64, tpu.core_type = #tpu.core_type<tc>, window_params = [{transform_indices = @transform_0, window_bounds = array<i64: 16, 128>}, {transform_indices = @transform_1, window_bounds = array<i64: 16, 128>}, {pipeline_mode = #tpu.pipeline_mode<synchronous>, transform_indices = @transform_2, window_bounds = array<i64: 128, 128>}, {pipeline_mode = #tpu.pipeline_mode<synchronous>, transform_indices = @transform_3, window_bounds = array<i64: 1, 128>}, {transform_indices = @transform_4, window_bounds = array<i64: 16, 128>}]} {
    %c0 = arith.constant 0 : index
    %c0_0 = arith.constant 0 : index
    %0 = vector.load %arg1[%c0, %c0_0] : memref<16x128xf32, #tpu.memory_space<vmem>>, vector<16x128xf32>
    %c0_1 = arith.constant 0 : index
    %c0_2 = arith.constant 0 : index
    %1 = vector.load %arg3[%c0_1, %c0_2] : memref<128x128xf32, #tpu.memory_space<vmem>>, vector<128x128xf32>
    %cst = arith.constant dense<0.000000e+00> : vector<16x128xf32>
    %2 = tpu.matmul %0, %1, %cst {dimension_numbers = #tpu.dot_dimension_numbers<[1], [0], [0], [1], [0, 0, 1, 1], [], []>} : vector<16x128xf32>, vector<128x128xf32>, vector<16x128xf32> -> vector<16x128xf32>
    %c0_3 = arith.constant 0 : index
    %c0_4 = arith.constant 0 : index
    %3 = vector.load %arg4[%c0_3, %c0_4] : memref<1x128xf32, #tpu.memory_space<vmem>>, vector<1x128xf32>
    %4 = vector.broadcast %3 : vector<1x128xf32> to vector<16x128xf32>
    %5 = arith.addf %2, %4 : vector<16x128xf32>
    %c0_5 = arith.constant 0 : index
    %c0_6 = arith.constant 0 : index
    %6 = vector.load %arg2[%c0_5, %c0_6] : memref<16x128xf32, #tpu.memory_space<vmem>>, vector<16x128xf32>
    %7 = arith.addf %5, %6 : vector<16x128xf32>
    %c0_7 = arith.constant 0 : index
    %c0_8 = arith.constant 0 : index
    %8 = vector.load %arg5[%c0_7, %c0_8] : memref<16x128xf32, #tpu.memory_space<vmem>>, vector<16x128xf32>
    tpu.vector_store %arg5[%c0_7, %c0_8], %7 {strides = array<i32>} : memref<16x128xf32, #tpu.memory_space<vmem>>, vector<16x128xf32>,
    return
  }
  func.func @transform_0(%arg0: i32) -> (i32, i32) {
    %c0_i32 = arith.constant 0 : i32
    %c0_i32_0 = arith.constant 0 : i32
    return %arg0, %c0_i32 : i32, i32
  }
  func.func @transform_1(%arg0: i32) -> (i32, i32) {
    %c0_i32 = arith.constant 0 : i32
    %c0_i32_0 = arith.constant 0 : i32
    return %arg0, %c0_i32 : i32, i32
  }
  func.func @transform_2(%arg0: i32) -> (i32, i32) {
    %c0_i32 = arith.constant 0 : i32
    %c0_i32_0 = arith.constant 0 : i32
    %c0_i32_1 = arith.constant 0 : i32
    return %c0_i32, %c0_i32_0 : i32, i32
  }
  func.func @transform_3(%arg0: i32) -> (i32, i32) {
    %c0_i32 = arith.constant 0 : i32
    %c0_i32_0 = arith.constant 0 : i32
    %c0_i32_1 = arith.constant 0 : i32
    return %c0_i32, %c0_i32_0 : i32, i32
  }
  func.func @transform_4(%arg0: i32) -> (i32, i32) {
    %c0_i32 = arith.constant 0 : i32
    %c0_i32_0 = arith.constant 0 : i32
    return %arg0, %c0_i32 : i32, i32
  }
}

module attributes {stable_mosaic.version = 11 : i64} {
  func.func @_ln_linear_kernel(%arg0: i32, %arg1: memref<16x128xf32, #tpu.memory_space<vmem>>, %arg2: memref<1x128xf32, #tpu.memory_space<vmem>>, %arg3: memref<1x128xf32, #tpu.memory_space<vmem>>, %arg4: memref<128x128xf32, #tpu.memory_space<vmem>>, %arg5: memref<1x128xf32, #tpu.memory_space<vmem>>, %arg6: memref<16x128xf32, #tpu.memory_space<vmem>>) attributes {dimension_semantics = [#tpu.dimension_semantics<parallel>], iteration_bounds = array<i64: 1>, scalar_prefetch = 0 : i64, scratch_operands = 0 : i64, tpu.core_type = #tpu.core_type<tc>, window_params = [{transform_indices = @transform_0, window_bounds = array<i64: 16, 128>}, {pipeline_mode = #tpu.pipeline_mode<synchronous>, transform_indices = @transform_1, window_bounds = array<i64: 1, 128>}, {pipeline_mode = #tpu.pipeline_mode<synchronous>, transform_indices = @transform_2, window_bounds = array<i64: 1, 128>}, {pipeline_mode = #tpu.pipeline_mode<synchronous>, transform_indices = @transform_3, window_bounds = array<i64: 128, 128>}, {pipeline_mode = #tpu.pipeline_mode<synchronous>, transform_indices = @transform_4, window_bounds = array<i64: 1, 128>}, {transform_indices = @transform_5, window_bounds = array<i64: 16, 128>}]} {
    %c0 = arith.constant 0 : index
    %c0_0 = arith.constant 0 : index
    %0 = vector.load %arg1[%c0, %c0_0] : memref<16x128xf32, #tpu.memory_space<vmem>>, vector<16x128xf32>
    %c0_1 = arith.constant 0 : index
    %c0_2 = arith.constant 0 : index
    %1 = vector.load %arg2[%c0_1, %c0_2] : memref<1x128xf32, #tpu.memory_space<vmem>>, vector<1x128xf32>
    %c0_3 = arith.constant 0 : index
    %c0_4 = arith.constant 0 : index
    %2 = vector.load %arg3[%c0_3, %c0_4] : memref<1x128xf32, #tpu.memory_space<vmem>>, vector<1x128xf32>
    %cst = arith.constant dense<0.000000e+00> : vector<16xf32>
    %3 = vector.multi_reduction <add>, %0, %cst [1] : vector<16x128xf32> to vector<16xf32>
    %4 = vector.shape_cast %3 : vector<16xf32> to vector<16x1xf32>
    %cst_5 = arith.constant 1.280000e+02 : f32
    %5 = vector.broadcast %cst_5 : f32 to vector<16x1xf32>
    %6 = arith.divf %4, %5 : vector<16x1xf32>
    %7 = vector.broadcast %6 : vector<16x1xf32> to vector<16x128xf32>
    %8 = arith.subf %0, %7 : vector<16x128xf32>
    %9 = arith.mulf %8, %8 : vector<16x128xf32>
    %cst_6 = arith.constant dense<0.000000e+00> : vector<16xf32>
    %10 = vector.multi_reduction <add>, %9, %cst_6 [1] : vector<16x128xf32> to vector<16xf32>
    %11 = vector.shape_cast %10 : vector<16xf32> to vector<16x1xf32>
    %cst_7 = arith.constant 1.270000e+02 : f32
    %12 = vector.broadcast %cst_7 : f32 to vector<16x1xf32>
    %13 = arith.divf %11, %12 : vector<16x1xf32>
    %14 = vector.broadcast %1 : vector<1x128xf32> to vector<16x128xf32>
    %15 = arith.mulf %14, %8 : vector<16x128xf32>
    %16 = math.sqrt %13 : vector<16x1xf32>
    %cst_8 = arith.constant 9.99999997E-7 : f32
    %17 = vector.broadcast %cst_8 : f32 to vector<16x1xf32>
    %18 = arith.addf %16, %17 : vector<16x1xf32>
    %19 = vector.broadcast %18 : vector<16x1xf32> to vector<16x128xf32>
    %20 = arith.divf %15, %19 : vector<16x128xf32>
    %21 = vector.broadcast %2 : vector<1x128xf32> to vector<16x128xf32>
    %22 = arith.addf %20, %21 : vector<16x128xf32>
    %c0_9 = arith.constant 0 : index
    %c0_10 = arith.constant 0 : index
    %23 = vector.load %arg4[%c0_9, %c0_10] : memref<128x128xf32, #tpu.memory_space<vmem>>, vector<128x128xf32>
    %cst_11 = arith.constant dense<0.000000e+00> : vector<16x128xf32>
    %24 = tpu.matmul %22, %23, %cst_11 {dimension_numbers = #tpu.dot_dimension_numbers<[1], [0], [0], [1], [0, 0, 1, 1], [], []>} : vector<16x128xf32>, vector<128x128xf32>, vector<16x128xf32> -> vector<16x128xf32>
    %c0_12 = arith.constant 0 : index
    %c0_13 = arith.constant 0 : index
    %25 = vector.load %arg5[%c0_12, %c0_13] : memref<1x128xf32, #tpu.memory_space<vmem>>, vector<1x128xf32>
    %26 = vector.broadcast %25 : vector<1x128xf32> to vector<16x128xf32>
    %27 = arith.addf %24, %26 : vector<16x128xf32>
    %c0_14 = arith.constant 0 : index
    %c0_15 = arith.constant 0 : index
    %28 = vector.load %arg6[%c0_14, %c0_15] : memref<16x128xf32, #tpu.memory_space<vmem>>, vector<16x128xf32>
    tpu.vector_store %arg6[%c0_14, %c0_15], %27 {strides = array<i32>} : memref<16x128xf32, #tpu.memory_space<vmem>>, vector<16x128xf32>,
    return
  }
  func.func @transform_0(%arg0: i32) -> (i32, i32) {
    %c0_i32 = arith.constant 0 : i32
    %c0_i32_0 = arith.constant 0 : i32
    return %arg0, %c0_i32 : i32, i32
  }
  func.func @transform_1(%arg0: i32) -> (i32, i32) {
    %c0_i32 = arith.constant 0 : i32
    %c0_i32_0 = arith.constant 0 : i32
    %c0_i32_1 = arith.constant 0 : i32
    return %c0_i32, %c0_i32_0 : i32, i32
  }
  func.func @transform_2(%arg0: i32) -> (i32, i32) {
    %c0_i32 = arith.constant 0 : i32
    %c0_i32_0 = arith.constant 0 : i32
    %c0_i32_1 = arith.constant 0 : i32
    return %c0_i32, %c0_i32_0 : i32, i32
  }
  func.func @transform_3(%arg0: i32) -> (i32, i32) {
    %c0_i32 = arith.constant 0 : i32
    %c0_i32_0 = arith.constant 0 : i32
    %c0_i32_1 = arith.constant 0 : i32
    return %c0_i32, %c0_i32_0 : i32, i32
  }
  func.func @transform_4(%arg0: i32) -> (i32, i32) {
    %c0_i32 = arith.constant 0 : i32
    %c0_i32_0 = arith.constant 0 : i32
    %c0_i32_1 = arith.constant 0 : i32
    return %c0_i32, %c0_i32_0 : i32, i32
  }
  func.func @transform_5(%arg0: i32) -> (i32, i32) {
    %c0_i32 = arith.constant 0 : i32
    %c0_i32_0 = arith.constant 0 : i32
    return %arg0, %c0_i32 : i32, i32
  }
}

module attributes {stable_mosaic.version = 11 : i64} {
  func.func @_self_mha_kernel(%arg0: i32, %arg1: memref<1x8x384xf32, #tpu.memory_space<vmem>>, %arg2: memref<1x8x8xi32, #tpu.memory_space<vmem>>, %arg3: memref<1x8x128xf32, #tpu.memory_space<vmem>>) attributes {dimension_semantics = [#tpu.dimension_semantics<parallel>], iteration_bounds = array<i64: 2>, scalar_prefetch = 0 : i64, scratch_operands = 0 : i64, tpu.core_type = #tpu.core_type<tc>, window_params = [{transform_indices = @transform_0, window_bounds = array<i64: 1, 8, 384>}, {pipeline_mode = #tpu.pipeline_mode<synchronous>, transform_indices = @transform_1, window_bounds = array<i64: 1, 8, 8>}, {transform_indices = @transform_2, window_bounds = array<i64: 1, 8, 128>}]} {
    %c0 = arith.constant 0 : index
    %c0_0 = arith.constant 0 : index
    %c0_1 = arith.constant 0 : index
    %0 = vector.load %arg1[%c0, %c0_0, %c0_1] : memref<1x8x384xf32, #tpu.memory_space<vmem>>, vector<1x8x384xf32>
    %1 = vector.shape_cast %0 : vector<1x8x384xf32> to vector<8x384xf32>
    %2 = vector.extract_strided_slice %1 {offsets = [0, 0], sizes = [8, 128], strides = [1, 1]} : vector<8x384xf32> to vector<8x128xf32>
    %3 = vector.extract_strided_slice %1 {offsets = [0, 128], sizes = [8, 128], strides = [1, 1]} : vector<8x384xf32> to vector<8x128xf32>
    %4 = vector.extract_strided_slice %1 {offsets = [0, 256], sizes = [8, 128], strides = [1, 1]} : vector<8x384xf32> to vector<8x128xf32>
    %c0_2 = arith.constant 0 : index
    %c0_3 = arith.constant 0 : index
    %c0_4 = arith.constant 0 : index
    %5 = vector.load %arg2[%c0_2, %c0_3, %c0_4] : memref<1x8x8xi32, #tpu.memory_space<vmem>>, vector<1x8x8xi32>
    %6 = vector.shape_cast %5 : vector<1x8x8xi32> to vector<8x8xi32>
    %7 = vector.extract_strided_slice %2 {offsets = [0, 0], sizes = [8, 32], strides = [1, 1]} : vector<8x128xf32> to vector<8x32xf32>
    %8 = vector.extract_strided_slice %3 {offsets = [0, 0], sizes = [8, 32], strides = [1, 1]} : vector<8x128xf32> to vector<8x32xf32>
    %9 = vector.extract_strided_slice %4 {offsets = [0, 0], sizes = [8, 32], strides = [1, 1]} : vector<8x128xf32> to vector<8x32xf32>
    %cst = arith.constant dense<0.000000e+00> : vector<8x8xf32>
    %10 = tpu.matmul %7, %8, %cst {dimension_numbers = #tpu.dot_dimension_numbers<[1], [1], [0], [0], [0, 0, 1, 0], [], []>} : vector<8x32xf32>, vector<8x32xf32>, vector<8x8xf32> -> vector<8x8xf32>
    %cst_5 = arith.constant 0.176776692 : f32
    %11 = vector.broadcast %cst_5 : f32 to vector<8x8xf32>
    %12 = arith.mulf %10, %11 : vector<8x8xf32>
    %c0_i32 = arith.constant 0 : i32
    %13 = vector.broadcast %c0_i32 : i32 to vector<8x8xi32>
    %14 = arith.cmpi ne, %6, %13 : vector<8x8xi32>
    %cst_6 = arith.constant -1.000000e+09 : f32
    %15 = vector.broadcast %cst_6 : f32 to vector<8x8xf32>
    %16 = arith.select %14, %12, %15 : vector<8x8xi1>, vector<8x8xf32>
    %cst_7 = arith.constant dense<0xFF800000> : vector<8xf32>
    %17 = vector.multi_reduction <maximumf>, %16, %cst_7 [1] : vector<8x8xf32> to vector<8xf32>
    %18 = vector.shape_cast %17 : vector<8xf32> to vector<8x1xf32>
    %19 = vector.broadcast %18 : vector<8x1xf32> to vector<8x8xf32>
    %20 = arith.subf %16, %19 : vector<8x8xf32>
    %21 = math.exp %20 : vector<8x8xf32>
    %cst_8 = arith.constant dense<0.000000e+00> : vector<8xf32>
    %22 = vector.multi_reduction <add>, %21, %cst_8 [1] : vector<8x8xf32> to vector<8xf32>
    %23 = vector.shape_cast %22 : vector<8xf32> to vector<8x1xf32>
    %24 = vector.broadcast %23 : vector<8x1xf32> to vector<8x8xf32>
    %25 = arith.divf %21, %24 : vector<8x8xf32>
    %cst_9 = arith.constant dense<0.000000e+00> : vector<8x32xf32>
    %26 = tpu.matmul %25, %9, %cst_9 {dimension_numbers = #tpu.dot_dimension_numbers<[1], [0], [0], [1], [0, 0, 1, 1], [], []>} : vector<8x8xf32>, vector<8x32xf32>, vector<8x32xf32> -> vector<8x32xf32>
    %27 = vector.extract_strided_slice %2 {offsets = [0, 32], sizes = [8, 32], strides = [1, 1]} : vector<8x128xf32> to vector<8x32xf32>
    %28 = vector.extract_strided_slice %3 {offsets = [0, 32], sizes = [8, 32], strides = [1, 1]} : vector<8x128xf32> to vector<8x32xf32>
    %29 = vector.extract_strided_slice %4 {offsets = [0, 32], sizes = [8, 32], strides = [1, 1]} : vector<8x128xf32> to vector<8x32xf32>
    %cst_10 = arith.constant dense<0.000000e+00> : vector<8x8xf32>
    %30 = tpu.matmul %27, %28, %cst_10 {dimension_numbers = #tpu.dot_dimension_numbers<[1], [1], [0], [0], [0, 0, 1, 0], [], []>} : vector<8x32xf32>, vector<8x32xf32>, vector<8x8xf32> -> vector<8x8xf32>
    %cst_11 = arith.constant 0.176776692 : f32
    %31 = vector.broadcast %cst_11 : f32 to vector<8x8xf32>
    %32 = arith.mulf %30, %31 : vector<8x8xf32>
    %c0_i32_12 = arith.constant 0 : i32
    %33 = vector.broadcast %c0_i32_12 : i32 to vector<8x8xi32>
    %34 = arith.cmpi ne, %6, %33 : vector<8x8xi32>
    %cst_13 = arith.constant -1.000000e+09 : f32
    %35 = vector.broadcast %cst_13 : f32 to vector<8x8xf32>
    %36 = arith.select %34, %32, %35 : vector<8x8xi1>, vector<8x8xf32>
    %cst_14 = arith.constant dense<0xFF800000> : vector<8xf32>
    %37 = vector.multi_reduction <maximumf>, %36, %cst_14 [1] : vector<8x8xf32> to vector<8xf32>
    %38 = vector.shape_cast %37 : vector<8xf32> to vector<8x1xf32>
    %39 = vector.broadcast %38 : vector<8x1xf32> to vector<8x8xf32>
    %40 = arith.subf %36, %39 : vector<8x8xf32>
    %41 = math.exp %40 : vector<8x8xf32>
    %cst_15 = arith.constant dense<0.000000e+00> : vector<8xf32>
    %42 = vector.multi_reduction <add>, %41, %cst_15 [1] : vector<8x8xf32> to vector<8xf32>
    %43 = vector.shape_cast %42 : vector<8xf32> to vector<8x1xf32>
    %44 = vector.broadcast %43 : vector<8x1xf32> to vector<8x8xf32>
    %45 = arith.divf %41, %44 : vector<8x8xf32>
    %cst_16 = arith.constant dense<0.000000e+00> : vector<8x32xf32>
    %46 = tpu.matmul %45, %29, %cst_16 {dimension_numbers = #tpu.dot_dimension_numbers<[1], [0], [0], [1], [0, 0, 1, 1], [], []>} : vector<8x8xf32>, vector<8x32xf32>, vector<8x32xf32> -> vector<8x32xf32>
    %47 = vector.extract_strided_slice %2 {offsets = [0, 64], sizes = [8, 32], strides = [1, 1]} : vector<8x128xf32> to vector<8x32xf32>
    %48 = vector.extract_strided_slice %3 {offsets = [0, 64], sizes = [8, 32], strides = [1, 1]} : vector<8x128xf32> to vector<8x32xf32>
    %49 = vector.extract_strided_slice %4 {offsets = [0, 64], sizes = [8, 32], strides = [1, 1]} : vector<8x128xf32> to vector<8x32xf32>
    %cst_17 = arith.constant dense<0.000000e+00> : vector<8x8xf32>
    %50 = tpu.matmul %47, %48, %cst_17 {dimension_numbers = #tpu.dot_dimension_numbers<[1], [1], [0], [0], [0, 0, 1, 0], [], []>} : vector<8x32xf32>, vector<8x32xf32>, vector<8x8xf32> -> vector<8x8xf32>
    %cst_18 = arith.constant 0.176776692 : f32
    %51 = vector.broadcast %cst_18 : f32 to vector<8x8xf32>
    %52 = arith.mulf %50, %51 : vector<8x8xf32>
    %c0_i32_19 = arith.constant 0 : i32
    %53 = vector.broadcast %c0_i32_19 : i32 to vector<8x8xi32>
    %54 = arith.cmpi ne, %6, %53 : vector<8x8xi32>
    %cst_20 = arith.constant -1.000000e+09 : f32
    %55 = vector.broadcast %cst_20 : f32 to vector<8x8xf32>
    %56 = arith.select %54, %52, %55 : vector<8x8xi1>, vector<8x8xf32>
    %cst_21 = arith.constant dense<0xFF800000> : vector<8xf32>
    %57 = vector.multi_reduction <maximumf>, %56, %cst_21 [1] : vector<8x8xf32> to vector<8xf32>
    %58 = vector.shape_cast %57 : vector<8xf32> to vector<8x1xf32>
    %59 = vector.broadcast %58 : vector<8x1xf32> to vector<8x8xf32>
    %60 = arith.subf %56, %59 : vector<8x8xf32>
    %61 = math.exp %60 : vector<8x8xf32>
    %cst_22 = arith.constant dense<0.000000e+00> : vector<8xf32>
    %62 = vector.multi_reduction <add>, %61, %cst_22 [1] : vector<8x8xf32> to vector<8xf32>
    %63 = vector.shape_cast %62 : vector<8xf32> to vector<8x1xf32>
    %64 = vector.broadcast %63 : vector<8x1xf32> to vector<8x8xf32>
    %65 = arith.divf %61, %64 : vector<8x8xf32>
    %cst_23 = arith.constant dense<0.000000e+00> : vector<8x32xf32>
    %66 = tpu.matmul %65, %49, %cst_23 {dimension_numbers = #tpu.dot_dimension_numbers<[1], [0], [0], [1], [0, 0, 1, 1], [], []>} : vector<8x8xf32>, vector<8x32xf32>, vector<8x32xf32> -> vector<8x32xf32>
    %67 = vector.extract_strided_slice %2 {offsets = [0, 96], sizes = [8, 32], strides = [1, 1]} : vector<8x128xf32> to vector<8x32xf32>
    %68 = vector.extract_strided_slice %3 {offsets = [0, 96], sizes = [8, 32], strides = [1, 1]} : vector<8x128xf32> to vector<8x32xf32>
    %69 = vector.extract_strided_slice %4 {offsets = [0, 96], sizes = [8, 32], strides = [1, 1]} : vector<8x128xf32> to vector<8x32xf32>
    %cst_24 = arith.constant dense<0.000000e+00> : vector<8x8xf32>
    %70 = tpu.matmul %67, %68, %cst_24 {dimension_numbers = #tpu.dot_dimension_numbers<[1], [1], [0], [0], [0, 0, 1, 0], [], []>} : vector<8x32xf32>, vector<8x32xf32>, vector<8x8xf32> -> vector<8x8xf32>
    %cst_25 = arith.constant 0.176776692 : f32
    %71 = vector.broadcast %cst_25 : f32 to vector<8x8xf32>
    %72 = arith.mulf %70, %71 : vector<8x8xf32>
    %c0_i32_26 = arith.constant 0 : i32
    %73 = vector.broadcast %c0_i32_26 : i32 to vector<8x8xi32>
    %74 = arith.cmpi ne, %6, %73 : vector<8x8xi32>
    %cst_27 = arith.constant -1.000000e+09 : f32
    %75 = vector.broadcast %cst_27 : f32 to vector<8x8xf32>
    %76 = arith.select %74, %72, %75 : vector<8x8xi1>, vector<8x8xf32>
    %cst_28 = arith.constant dense<0xFF800000> : vector<8xf32>
    %77 = vector.multi_reduction <maximumf>, %76, %cst_28 [1] : vector<8x8xf32> to vector<8xf32>
    %78 = vector.shape_cast %77 : vector<8xf32> to vector<8x1xf32>
    %79 = vector.broadcast %78 : vector<8x1xf32> to vector<8x8xf32>
    %80 = arith.subf %76, %79 : vector<8x8xf32>
    %81 = math.exp %80 : vector<8x8xf32>
    %cst_29 = arith.constant dense<0.000000e+00> : vector<8xf32>
    %82 = vector.multi_reduction <add>, %81, %cst_29 [1] : vector<8x8xf32> to vector<8xf32>
    %83 = vector.shape_cast %82 : vector<8xf32> to vector<8x1xf32>
    %84 = vector.broadcast %83 : vector<8x1xf32> to vector<8x8xf32>
    %85 = arith.divf %81, %84 : vector<8x8xf32>
    %cst_30 = arith.constant dense<0.000000e+00> : vector<8x32xf32>
    %86 = tpu.matmul %85, %69, %cst_30 {dimension_numbers = #tpu.dot_dimension_numbers<[1], [0], [0], [1], [0, 0, 1, 1], [], []>} : vector<8x8xf32>, vector<8x32xf32>, vector<8x32xf32> -> vector<8x32xf32>
    %87 = tpu.concatenate %26, %46, %66, %86 in 1 : vector<8x32xf32>, vector<8x32xf32>, vector<8x32xf32>, vector<8x32xf32> -> vector<8x128xf32>
    %c0_31 = arith.constant 0 : index
    %c0_32 = arith.constant 0 : index
    %c0_33 = arith.constant 0 : index
    %88 = vector.load %arg3[%c0_31, %c0_32, %c0_33] : memref<1x8x128xf32, #tpu.memory_space<vmem>>, vector<1x8x128xf32>
    %89 = vector.shape_cast %88 : vector<1x8x128xf32> to vector<8x128xf32>
    %90 = vector.shape_cast %87 : vector<8x128xf32> to vector<1x8x128xf32>
    tpu.vector_store %arg3[%c0_31, %c0_32, %c0_33], %90 {strides = array<i32>} : memref<1x8x128xf32, #tpu.memory_space<vmem>>, vector<1x8x128xf32>,
    return
  }
  func.func @transform_0(%arg0: i32) -> (i32, i32, i32) {
    %c0_i32 = arith.constant 0 : i32
    %c0_i32_0 = arith.constant 0 : i32
    %c0_i32_1 = arith.constant 0 : i32
    return %arg0, %c0_i32, %c0_i32_0 : i32, i32, i32
  }
  func.func @transform_1(%arg0: i32) -> (i32, i32, i32) {
    %c0_i32 = arith.constant 0 : i32
    %c0_i32_0 = arith.constant 0 : i32
    %c0_i32_1 = arith.constant 0 : i32
    %c0_i32_2 = arith.constant 0 : i32
    return %c0_i32, %c0_i32_0, %c0_i32_1 : i32, i32, i32
  }
  func.func @transform_2(%arg0: i32) -> (i32, i32, i32) {
    %c0_i32 = arith.constant 0 : i32
    %c0_i32_0 = arith.constant 0 : i32
    %c0_i32_1 = arith.constant 0 : i32
    return %arg0, %c0_i32, %c0_i32_0 : i32, i32, i32
  }
}

module attributes {stable_mosaic.version = 11 : i64} {
  func.func @_cross_mha_kernel(%arg0: i32, %arg1: memref<1x8x128xf32, #tpu.memory_space<vmem>>, %arg2: memref<1x8x256xf32, #tpu.memory_space<vmem>>, %arg3: memref<1x1x8xi32, #tpu.memory_space<vmem>>, %arg4: memref<1x8x128xf32, #tpu.memory_space<vmem>>) attributes {dimension_semantics = [#tpu.dimension_semantics<parallel>], iteration_bounds = array<i64: 2>, scalar_prefetch = 0 : i64, scratch_operands = 0 : i64, tpu.core_type = #tpu.core_type<tc>, window_params = [{transform_indices = @transform_0, window_bounds = array<i64: 1, 8, 128>}, {transform_indices = @transform_1, window_bounds = array<i64: 1, 8, 256>}, {transform_indices = @transform_2, window_bounds = array<i64: 1, 1, 8>}, {transform_indices = @transform_3, window_bounds = array<i64: 1, 8, 128>}]} {
    %c0 = arith.constant 0 : index
    %c0_0 = arith.constant 0 : index
    %c0_1 = arith.constant 0 : index
    %0 = vector.load %arg1[%c0, %c0_0, %c0_1] : memref<1x8x128xf32, #tpu.memory_space<vmem>>, vector<1x8x128xf32>
    %1 = vector.shape_cast %0 : vector<1x8x128xf32> to vector<8x128xf32>
    %c0_2 = arith.constant 0 : index
    %c0_3 = arith.constant 0 : index
    %c0_4 = arith.constant 0 : index
    %2 = vector.load %arg2[%c0_2, %c0_3, %c0_4] : memref<1x8x256xf32, #tpu.memory_space<vmem>>, vector<1x8x256xf32>
    %3 = vector.shape_cast %2 : vector<1x8x256xf32> to vector<8x256xf32>
    %4 = vector.extract_strided_slice %3 {offsets = [0, 0], sizes = [8, 128], strides = [1, 1]} : vector<8x256xf32> to vector<8x128xf32>
    %5 = vector.extract_strided_slice %3 {offsets = [0, 128], sizes = [8, 128], strides = [1, 1]} : vector<8x256xf32> to vector<8x128xf32>
    %c0_5 = arith.constant 0 : index
    %c0_6 = arith.constant 0 : index
    %c0_7 = arith.constant 0 : index
    %6 = vector.load %arg3[%c0_5, %c0_6, %c0_7] : memref<1x1x8xi32, #tpu.memory_space<vmem>>, vector<1x1x8xi32>
    %7 = vector.shape_cast %6 : vector<1x1x8xi32> to vector<1x8xi32>
    %8 = vector.extract_strided_slice %1 {offsets = [0, 0], sizes = [8, 32], strides = [1, 1]} : vector<8x128xf32> to vector<8x32xf32>
    %9 = vector.extract_strided_slice %4 {offsets = [0, 0], sizes = [8, 32], strides = [1, 1]} : vector<8x128xf32> to vector<8x32xf32>
    %10 = vector.extract_strided_slice %5 {offsets = [0, 0], sizes = [8, 32], strides = [1, 1]} : vector<8x128xf32> to vector<8x32xf32>
    %cst = arith.constant dense<0.000000e+00> : vector<8x8xf32>
    %11 = tpu.matmul %8, %9, %cst {dimension_numbers = #tpu.dot_dimension_numbers<[1], [1], [0], [0], [0, 0, 1, 0], [], []>} : vector<8x32xf32>, vector<8x32xf32>, vector<8x8xf32> -> vector<8x8xf32>
    %cst_8 = arith.constant 0.176776692 : f32
    %12 = vector.broadcast %cst_8 : f32 to vector<8x8xf32>
    %13 = arith.mulf %11, %12 : vector<8x8xf32>
    %c0_i32 = arith.constant 0 : i32
    %14 = vector.broadcast %c0_i32 : i32 to vector<1x8xi32>
    %15 = arith.cmpi ne, %7, %14 : vector<1x8xi32>
    %cst_9 = arith.constant -1.000000e+09 : f32
    %16 = vector.shape_cast %15 : vector<1x8xi1> to vector<1x8xi1>
    %17 = vector.broadcast %16 : vector<1x8xi1> to vector<8x8xi1>
    %18 = vector.broadcast %cst_9 : f32 to vector<8x8xf32>
    %19 = arith.select %17, %13, %18 : vector<8x8xi1>, vector<8x8xf32>
    %cst_10 = arith.constant dense<0xFF800000> : vector<8xf32>
    %20 = vector.multi_reduction <maximumf>, %19, %cst_10 [1] : vector<8x8xf32> to vector<8xf32>
    %21 = vector.shape_cast %20 : vector<8xf32> to vector<8x1xf32>
    %22 = vector.broadcast %21 : vector<8x1xf32> to vector<8x8xf32>
    %23 = arith.subf %19, %22 : vector<8x8xf32>
    %24 = math.exp %23 : vector<8x8xf32>
    %cst_11 = arith.constant dense<0.000000e+00> : vector<8xf32>
    %25 = vector.multi_reduction <add>, %24, %cst_11 [1] : vector<8x8xf32> to vector<8xf32>
    %26 = vector.shape_cast %25 : vector<8xf32> to vector<8x1xf32>
    %27 = vector.broadcast %26 : vector<8x1xf32> to vector<8x8xf32>
    %28 = arith.divf %24, %27 : vector<8x8xf32>
    %cst_12 = arith.constant dense<0.000000e+00> : vector<8x32xf32>
    %29 = tpu.matmul %28, %10, %cst_12 {dimension_numbers = #tpu.dot_dimension_numbers<[1], [0], [0], [1], [0, 0, 1, 1], [], []>} : vector<8x8xf32>, vector<8x32xf32>, vector<8x32xf32> -> vector<8x32xf32>
    %30 = vector.extract_strided_slice %1 {offsets = [0, 32], sizes = [8, 32], strides = [1, 1]} : vector<8x128xf32> to vector<8x32xf32>
    %31 = vector.extract_strided_slice %4 {offsets = [0, 32], sizes = [8, 32], strides = [1, 1]} : vector<8x128xf32> to vector<8x32xf32>
    %32 = vector.extract_strided_slice %5 {offsets = [0, 32], sizes = [8, 32], strides = [1, 1]} : vector<8x128xf32> to vector<8x32xf32>
    %cst_13 = arith.constant dense<0.000000e+00> : vector<8x8xf32>
    %33 = tpu.matmul %30, %31, %cst_13 {dimension_numbers = #tpu.dot_dimension_numbers<[1], [1], [0], [0], [0, 0, 1, 0], [], []>} : vector<8x32xf32>, vector<8x32xf32>, vector<8x8xf32> -> vector<8x8xf32>
    %cst_14 = arith.constant 0.176776692 : f32
    %34 = vector.broadcast %cst_14 : f32 to vector<8x8xf32>
    %35 = arith.mulf %33, %34 : vector<8x8xf32>
    %c0_i32_15 = arith.constant 0 : i32
    %36 = vector.broadcast %c0_i32_15 : i32 to vector<1x8xi32>
    %37 = arith.cmpi ne, %7, %36 : vector<1x8xi32>
    %cst_16 = arith.constant -1.000000e+09 : f32
    %38 = vector.shape_cast %37 : vector<1x8xi1> to vector<1x8xi1>
    %39 = vector.broadcast %38 : vector<1x8xi1> to vector<8x8xi1>
    %40 = vector.broadcast %cst_16 : f32 to vector<8x8xf32>
    %41 = arith.select %39, %35, %40 : vector<8x8xi1>, vector<8x8xf32>
    %cst_17 = arith.constant dense<0xFF800000> : vector<8xf32>
    %42 = vector.multi_reduction <maximumf>, %41, %cst_17 [1] : vector<8x8xf32> to vector<8xf32>
    %43 = vector.shape_cast %42 : vector<8xf32> to vector<8x1xf32>
    %44 = vector.broadcast %43 : vector<8x1xf32> to vector<8x8xf32>
    %45 = arith.subf %41, %44 : vector<8x8xf32>
    %46 = math.exp %45 : vector<8x8xf32>
    %cst_18 = arith.constant dense<0.000000e+00> : vector<8xf32>
    %47 = vector.multi_reduction <add>, %46, %cst_18 [1] : vector<8x8xf32> to vector<8xf32>
    %48 = vector.shape_cast %47 : vector<8xf32> to vector<8x1xf32>
    %49 = vector.broadcast %48 : vector<8x1xf32> to vector<8x8xf32>
    %50 = arith.divf %46, %49 : vector<8x8xf32>
    %cst_19 = arith.constant dense<0.000000e+00> : vector<8x32xf32>
    %51 = tpu.matmul %50, %32, %cst_19 {dimension_numbers = #tpu.dot_dimension_numbers<[1], [0], [0], [1], [0, 0, 1, 1], [], []>} : vector<8x8xf32>, vector<8x32xf32>, vector<8x32xf32> -> vector<8x32xf32>
    %52 = vector.extract_strided_slice %1 {offsets = [0, 64], sizes = [8, 32], strides = [1, 1]} : vector<8x128xf32> to vector<8x32xf32>
    %53 = vector.extract_strided_slice %4 {offsets = [0, 64], sizes = [8, 32], strides = [1, 1]} : vector<8x128xf32> to vector<8x32xf32>
    %54 = vector.extract_strided_slice %5 {offsets = [0, 64], sizes = [8, 32], strides = [1, 1]} : vector<8x128xf32> to vector<8x32xf32>
    %cst_20 = arith.constant dense<0.000000e+00> : vector<8x8xf32>
    %55 = tpu.matmul %52, %53, %cst_20 {dimension_numbers = #tpu.dot_dimension_numbers<[1], [1], [0], [0], [0, 0, 1, 0], [], []>} : vector<8x32xf32>, vector<8x32xf32>, vector<8x8xf32> -> vector<8x8xf32>
    %cst_21 = arith.constant 0.176776692 : f32
    %56 = vector.broadcast %cst_21 : f32 to vector<8x8xf32>
    %57 = arith.mulf %55, %56 : vector<8x8xf32>
    %c0_i32_22 = arith.constant 0 : i32
    %58 = vector.broadcast %c0_i32_22 : i32 to vector<1x8xi32>
    %59 = arith.cmpi ne, %7, %58 : vector<1x8xi32>
    %cst_23 = arith.constant -1.000000e+09 : f32
    %60 = vector.shape_cast %59 : vector<1x8xi1> to vector<1x8xi1>
    %61 = vector.broadcast %60 : vector<1x8xi1> to vector<8x8xi1>
    %62 = vector.broadcast %cst_23 : f32 to vector<8x8xf32>
    %63 = arith.select %61, %57, %62 : vector<8x8xi1>, vector<8x8xf32>
    %cst_24 = arith.constant dense<0xFF800000> : vector<8xf32>
    %64 = vector.multi_reduction <maximumf>, %63, %cst_24 [1] : vector<8x8xf32> to vector<8xf32>
    %65 = vector.shape_cast %64 : vector<8xf32> to vector<8x1xf32>
    %66 = vector.broadcast %65 : vector<8x1xf32> to vector<8x8xf32>
    %67 = arith.subf %63, %66 : vector<8x8xf32>
    %68 = math.exp %67 : vector<8x8xf32>
    %cst_25 = arith.constant dense<0.000000e+00> : vector<8xf32>
    %69 = vector.multi_reduction <add>, %68, %cst_25 [1] : vector<8x8xf32> to vector<8xf32>
    %70 = vector.shape_cast %69 : vector<8xf32> to vector<8x1xf32>
    %71 = vector.broadcast %70 : vector<8x1xf32> to vector<8x8xf32>
    %72 = arith.divf %68, %71 : vector<8x8xf32>
    %cst_26 = arith.constant dense<0.000000e+00> : vector<8x32xf32>
    %73 = tpu.matmul %72, %54, %cst_26 {dimension_numbers = #tpu.dot_dimension_numbers<[1], [0], [0], [1], [0, 0, 1, 1], [], []>} : vector<8x8xf32>, vector<8x32xf32>, vector<8x32xf32> -> vector<8x32xf32>
    %74 = vector.extract_strided_slice %1 {offsets = [0, 96], sizes = [8, 32], strides = [1, 1]} : vector<8x128xf32> to vector<8x32xf32>
    %75 = vector.extract_strided_slice %4 {offsets = [0, 96], sizes = [8, 32], strides = [1, 1]} : vector<8x128xf32> to vector<8x32xf32>
    %76 = vector.extract_strided_slice %5 {offsets = [0, 96], sizes = [8, 32], strides = [1, 1]} : vector<8x128xf32> to vector<8x32xf32>
    %cst_27 = arith.constant dense<0.000000e+00> : vector<8x8xf32>
    %77 = tpu.matmul %74, %75, %cst_27 {dimension_numbers = #tpu.dot_dimension_numbers<[1], [1], [0], [0], [0, 0, 1, 0], [], []>} : vector<8x32xf32>, vector<8x32xf32>, vector<8x8xf32> -> vector<8x8xf32>
    %cst_28 = arith.constant 0.176776692 : f32
    %78 = vector.broadcast %cst_28 : f32 to vector<8x8xf32>
    %79 = arith.mulf %77, %78 : vector<8x8xf32>
    %c0_i32_29 = arith.constant 0 : i32
    %80 = vector.broadcast %c0_i32_29 : i32 to vector<1x8xi32>
    %81 = arith.cmpi ne, %7, %80 : vector<1x8xi32>
    %cst_30 = arith.constant -1.000000e+09 : f32
    %82 = vector.shape_cast %81 : vector<1x8xi1> to vector<1x8xi1>
    %83 = vector.broadcast %82 : vector<1x8xi1> to vector<8x8xi1>
    %84 = vector.broadcast %cst_30 : f32 to vector<8x8xf32>
    %85 = arith.select %83, %79, %84 : vector<8x8xi1>, vector<8x8xf32>
    %cst_31 = arith.constant dense<0xFF800000> : vector<8xf32>
    %86 = vector.multi_reduction <maximumf>, %85, %cst_31 [1] : vector<8x8xf32> to vector<8xf32>
    %87 = vector.shape_cast %86 : vector<8xf32> to vector<8x1xf32>
    %88 = vector.broadcast %87 : vector<8x1xf32> to vector<8x8xf32>
    %89 = arith.subf %85, %88 : vector<8x8xf32>
    %90 = math.exp %89 : vector<8x8xf32>
    %cst_32 = arith.constant dense<0.000000e+00> : vector<8xf32>
    %91 = vector.multi_reduction <add>, %90, %cst_32 [1] : vector<8x8xf32> to vector<8xf32>
    %92 = vector.shape_cast %91 : vector<8xf32> to vector<8x1xf32>
    %93 = vector.broadcast %92 : vector<8x1xf32> to vector<8x8xf32>
    %94 = arith.divf %90, %93 : vector<8x8xf32>
    %cst_33 = arith.constant dense<0.000000e+00> : vector<8x32xf32>
    %95 = tpu.matmul %94, %76, %cst_33 {dimension_numbers = #tpu.dot_dimension_numbers<[1], [0], [0], [1], [0, 0, 1, 1], [], []>} : vector<8x8xf32>, vector<8x32xf32>, vector<8x32xf32> -> vector<8x32xf32>
    %96 = tpu.concatenate %29, %51, %73, %95 in 1 : vector<8x32xf32>, vector<8x32xf32>, vector<8x32xf32>, vector<8x32xf32> -> vector<8x128xf32>
    %c0_34 = arith.constant 0 : index
    %c0_35 = arith.constant 0 : index
    %c0_36 = arith.constant 0 : index
    %97 = vector.load %arg4[%c0_34, %c0_35, %c0_36] : memref<1x8x128xf32, #tpu.memory_space<vmem>>, vector<1x8x128xf32>
    %98 = vector.shape_cast %97 : vector<1x8x128xf32> to vector<8x128xf32>
    %99 = vector.shape_cast %96 : vector<8x128xf32> to vector<1x8x128xf32>
    tpu.vector_store %arg4[%c0_34, %c0_35, %c0_36], %99 {strides = array<i32>} : memref<1x8x128xf32, #tpu.memory_space<vmem>>, vector<1x8x128xf32>,
    return
  }
  func.func @transform_0(%arg0: i32) -> (i32, i32, i32) {
    %c0_i32 = arith.constant 0 : i32
    %c0_i32_0 = arith.constant 0 : i32
    %c0_i32_1 = arith.constant 0 : i32
    return %arg0, %c0_i32, %c0_i32_0 : i32, i32, i32
  }
  func.func @transform_1(%arg0: i32) -> (i32, i32, i32) {
    %c0_i32 = arith.constant 0 : i32
    %c0_i32_0 = arith.constant 0 : i32
    %c0_i32_1 = arith.constant 0 : i32
    return %arg0, %c0_i32, %c0_i32_0 : i32, i32, i32
  }
  func.func @transform_2(%arg0: i32) -> (i32, i32, i32) {
    %c0_i32 = arith.constant 0 : i32
    %c0_i32_0 = arith.constant 0 : i32
    %c0_i32_1 = arith.constant 0 : i32
    return %arg0, %c0_i32, %c0_i32_0 : i32, i32, i32
  }
  func.func @transform_3(%arg0: i32) -> (i32, i32, i32) {
    %c0_i32 = arith.constant 0 : i32
    %c0_i32_0 = arith.constant 0 : i32
    %c0_i32_1 = arith.constant 0 : i32
    return %arg0, %c0_i32, %c0_i32_0 : i32, i32, i32
  }
}

module attributes {stable_mosaic.version = 11 : i64} {
  func.func @_gated_ffn_kernel(%arg0: i32, %arg1: i32, %arg2: memref<16x128xf32, #tpu.memory_space<vmem>>, %arg3: memref<16x128xf32, #tpu.memory_space<vmem>>, %arg4: memref<16x128xf32, #tpu.memory_space<vmem>>, %arg5: memref<16x128xf32, #tpu.memory_space<vmem>>, %arg6: memref<1x128xf32, #tpu.memory_space<vmem>>, %arg7: memref<1x128xf32, #tpu.memory_space<vmem>>, %arg8: memref<128x256xf32, #tpu.memory_space<vmem>>, %arg9: memref<1x256xf32, #tpu.memory_space<vmem>>, %arg10: memref<256x128xf32, #tpu.memory_space<vmem>>, %arg11: memref<1x128xf32, #tpu.memory_space<vmem>>, %arg12: memref<16x128xf32, #tpu.memory_space<vmem>>, %arg13: memref<16x128xf32, #tpu.memory_space<vmem>>, %arg14: memref<16x128xf32, #tpu.memory_space<vmem>>, %arg15: memref<16x128xf32, #tpu.memory_space<vmem>>) attributes {dimension_semantics = [#tpu.dimension_semantics<parallel>, #tpu.dimension_semantics<arbitrary>], iteration_bounds = array<i64: 1, 1>, scalar_prefetch = 0 : i64, scratch_operands = 3 : i64, tpu.core_type = #tpu.core_type<tc>, window_params = [{transform_indices = @transform_0, window_bounds = array<i64: 16, 128>}, {transform_indices = @transform_1, window_bounds = array<i64: 16, 128>}, {transform_indices = @transform_2, window_bounds = array<i64: 16, 128>}, {transform_indices = @transform_3, window_bounds = array<i64: 16, 128>}, {pipeline_mode = #tpu.pipeline_mode<synchronous>, transform_indices = @transform_4, window_bounds = array<i64: 1, 128>}, {pipeline_mode = #tpu.pipeline_mode<synchronous>, transform_indices = @transform_5, window_bounds = array<i64: 1, 128>}, {transform_indices = @transform_6, window_bounds = array<i64: 128, 256>}, {transform_indices = @transform_7, window_bounds = array<i64: 1, 256>}, {transform_indices = @transform_8, window_bounds = array<i64: 256, 128>}, {pipeline_mode = #tpu.pipeline_mode<synchronous>, transform_indices = @transform_9, window_bounds = array<i64: 1, 128>}, {transform_indices = @transform_10, window_bounds = array<i64: 16, 128>}]} {
    %c0_i32 = arith.constant 0 : i32
    %0 = arith.cmpi eq, %arg1, %c0_i32 : i32
    %1 = arith.extui %0 : i1 to i32
    %c0_i32_0 = arith.constant 0 : i32
    %2 = arith.cmpi ne, %1, %c0_i32_0 : i32
    scf.if %2 {
      %c0_16 = arith.constant 0 : index
      %c0_17 = arith.constant 0 : index
      %19 = vector.load %arg5[%c0_16, %c0_17] : memref<16x128xf32, #tpu.memory_space<vmem>>, vector<16x128xf32>
      %c0_18 = arith.constant 0 : index
      %c0_19 = arith.constant 0 : index
      %20 = vector.load %arg2[%c0_18, %c0_19] : memref<16x128xf32, #tpu.memory_space<vmem>>, vector<16x128xf32>
      %c0_20 = arith.constant 0 : index
      %c0_21 = arith.constant 0 : index
      %21 = vector.load %arg3[%c0_20, %c0_21] : memref<16x128xf32, #tpu.memory_space<vmem>>, vector<16x128xf32>
      %c0_22 = arith.constant 0 : index
      %c0_23 = arith.constant 0 : index
      %22 = vector.load %arg4[%c0_22, %c0_23] : memref<16x128xf32, #tpu.memory_space<vmem>>, vector<16x128xf32>
      %23 = arith.mulf %19, %20 : vector<16x128xf32>
      %cst_24 = arith.constant dense<0.000000e+00> : vector<16xf32>
      %24 = vector.multi_reduction <add>, %23, %cst_24 [1] : vector<16x128xf32> to vector<16xf32>
      %25 = vector.shape_cast %24 : vector<16xf32> to vector<16x1xf32>
      %cst_25 = arith.constant 0.0883883461 : f32
      %26 = vector.broadcast %cst_25 : f32 to vector<16x1xf32>
      %27 = arith.mulf %25, %26 : vector<16x1xf32>
      %28 = arith.mulf %19, %21 : vector<16x128xf32>
      %cst_26 = arith.constant dense<0.000000e+00> : vector<16xf32>
      %29 = vector.multi_reduction <add>, %28, %cst_26 [1] : vector<16x128xf32> to vector<16xf32>
      %30 = vector.shape_cast %29 : vector<16xf32> to vector<16x1xf32>
      %cst_27 = arith.constant 0.0883883461 : f32
      %31 = vector.broadcast %cst_27 : f32 to vector<16x1xf32>
      %32 = arith.mulf %30, %31 : vector<16x1xf32>
      %33 = arith.mulf %19, %22 : vector<16x128xf32>
      %cst_28 = arith.constant dense<0.000000e+00> : vector<16xf32>
      %34 = vector.multi_reduction <add>, %33, %cst_28 [1] : vector<16x128xf32> to vector<16xf32>
      %35 = vector.shape_cast %34 : vector<16xf32> to vector<16x1xf32>
      %cst_29 = arith.constant 0.0883883461 : f32
      %36 = vector.broadcast %cst_29 : f32 to vector<16x1xf32>
      %37 = arith.mulf %35, %36 : vector<16x1xf32>
      %38 = arith.maximumf %27, %32 : vector<16x1xf32>
      %39 = arith.maximumf %38, %37 : vector<16x1xf32>
      %40 = arith.subf %27, %39 : vector<16x1xf32>
      %41 = math.exp %40 : vector<16x1xf32>
      %42 = arith.subf %32, %39 : vector<16x1xf32>
      %43 = math.exp %42 : vector<16x1xf32>
      %44 = arith.subf %37, %39 : vector<16x1xf32>
      %45 = math.exp %44 : vector<16x1xf32>
      %46 = arith.addf %41, %43 : vector<16x1xf32>
      %47 = arith.addf %46, %45 : vector<16x1xf32>
      %cst_30 = arith.constant 1.000000e+00 : f32
      %48 = vector.broadcast %cst_30 : f32 to vector<16x1xf32>
      %49 = arith.divf %48, %47 : vector<16x1xf32>
      %50 = arith.mulf %41, %49 : vector<16x1xf32>
      %51 = vector.broadcast %50 : vector<16x1xf32> to vector<16x128xf32>
      %52 = arith.mulf %20, %51 : vector<16x128xf32>
      %53 = arith.mulf %43, %49 : vector<16x1xf32>
      %54 = vector.broadcast %53 : vector<16x1xf32> to vector<16x128xf32>
      %55 = arith.mulf %21, %54 : vector<16x128xf32>
      %56 = arith.addf %52, %55 : vector<16x128xf32>
      %57 = arith.mulf %45, %49 : vector<16x1xf32>
      %58 = vector.broadcast %57 : vector<16x1xf32> to vector<16x128xf32>
      %59 = arith.mulf %22, %58 : vector<16x128xf32>
      %60 = arith.addf %56, %59 : vector<16x128xf32>
      %c0_31 = arith.constant 0 : index
      %c0_32 = arith.constant 0 : index
      %61 = vector.load %arg14[%c0_31, %c0_32] : memref<16x128xf32, #tpu.memory_space<vmem>>, vector<16x128xf32>
      tpu.vector_store %arg14[%c0_31, %c0_32], %60 {strides = array<i32>} : memref<16x128xf32, #tpu.memory_space<vmem>>, vector<16x128xf32>,
      %c0_33 = arith.constant 0 : index
      %c0_34 = arith.constant 0 : index
      %62 = vector.load %arg6[%c0_33, %c0_34] : memref<1x128xf32, #tpu.memory_space<vmem>>, vector<1x128xf32>
      %c0_35 = arith.constant 0 : index
      %c0_36 = arith.constant 0 : index
      %63 = vector.load %arg7[%c0_35, %c0_36] : memref<1x128xf32, #tpu.memory_space<vmem>>, vector<1x128xf32>
      %cst_37 = arith.constant dense<0.000000e+00> : vector<16xf32>
      %64 = vector.multi_reduction <add>, %60, %cst_37 [1] : vector<16x128xf32> to vector<16xf32>
      %65 = vector.shape_cast %64 : vector<16xf32> to vector<16x1xf32>
      %cst_38 = arith.constant 1.280000e+02 : f32
      %66 = vector.broadcast %cst_38 : f32 to vector<16x1xf32>
      %67 = arith.divf %65, %66 : vector<16x1xf32>
      %68 = vector.broadcast %67 : vector<16x1xf32> to vector<16x128xf32>
      %69 = arith.subf %60, %68 : vector<16x128xf32>
      %70 = arith.mulf %69, %69 : vector<16x128xf32>
      %cst_39 = arith.constant dense<0.000000e+00> : vector<16xf32>
      %71 = vector.multi_reduction <add>, %70, %cst_39 [1] : vector<16x128xf32> to vector<16xf32>
      %72 = vector.shape_cast %71 : vector<16xf32> to vector<16x1xf32>
      %cst_40 = arith.constant 1.270000e+02 : f32
      %73 = vector.broadcast %cst_40 : f32 to vector<16x1xf32>
      %74 = arith.divf %72, %73 : vector<16x1xf32>
      %75 = vector.broadcast %62 : vector<1x128xf32> to vector<16x128xf32>
      %76 = arith.mulf %75, %69 : vector<16x128xf32>
      %77 = math.sqrt %74 : vector<16x1xf32>
      %cst_41 = arith.constant 9.99999997E-7 : f32
      %78 = vector.broadcast %cst_41 : f32 to vector<16x1xf32>
      %79 = arith.addf %77, %78 : vector<16x1xf32>
      %80 = vector.broadcast %79 : vector<16x1xf32> to vector<16x128xf32>
      %81 = arith.divf %76, %80 : vector<16x128xf32>
      %82 = vector.broadcast %63 : vector<1x128xf32> to vector<16x128xf32>
      %83 = arith.addf %81, %82 : vector<16x128xf32>
      %c0_42 = arith.constant 0 : index
      %c0_43 = arith.constant 0 : index
      %84 = vector.load %arg13[%c0_42, %c0_43] : memref<16x128xf32, #tpu.memory_space<vmem>>, vector<16x128xf32>
      tpu.vector_store %arg13[%c0_42, %c0_43], %83 {strides = array<i32>} : memref<16x128xf32, #tpu.memory_space<vmem>>, vector<16x128xf32>,
      %cst_44 = arith.constant 0.000000e+00 : f32
      %85 = vector.broadcast %cst_44 : f32 to vector<16x128xf32>
      %c0_45 = arith.constant 0 : index
      %c0_46 = arith.constant 0 : index
      %86 = vector.load %arg15[%c0_45, %c0_46] : memref<16x128xf32, #tpu.memory_space<vmem>>, vector<16x128xf32>
      tpu.vector_store %arg15[%c0_45, %c0_46], %85 {strides = array<i32>} : memref<16x128xf32, #tpu.memory_space<vmem>>, vector<16x128xf32>,
    } else {
    }
    %c0 = arith.constant 0 : index
    %c0_1 = arith.constant 0 : index
    %3 = vector.load %arg13[%c0, %c0_1] : memref<16x128xf32, #tpu.memory_space<vmem>>, vector<16x128xf32>
    %c0_2 = arith.constant 0 : index
    %c0_3 = arith.constant 0 : index
    %4 = vector.load %arg8[%c0_2, %c0_3] : memref<128x256xf32, #tpu.memory_space<vmem>>, vector<128x256xf32>
    %cst = arith.constant dense<0.000000e+00> : vector<16x256xf32>
    %5 = tpu.matmul %3, %4, %cst {dimension_numbers = #tpu.dot_dimension_numbers<[1], [0], [0], [1], [0, 0, 1, 1], [], []>} : vector<16x128xf32>, vector<128x256xf32>, vector<16x256xf32> -> vector<16x256xf32>
    %c0_4 = arith.constant 0 : index
    %c0_5 = arith.constant 0 : index
    %6 = vector.load %arg9[%c0_4, %c0_5] : memref<1x256xf32, #tpu.memory_space<vmem>>, vector<1x256xf32>
    %7 = vector.broadcast %6 : vector<1x256xf32> to vector<16x256xf32>
    %8 = arith.addf %5, %7 : vector<16x256xf32>
    %cst_6 = arith.constant 0.000000e+00 : f32
    %9 = vector.broadcast %cst_6 : f32 to vector<16x256xf32>
    %10 = arith.maximumf %8, %9 : vector<16x256xf32>
    %c0_7 = arith.constant 0 : index
    %c0_8 = arith.constant 0 : index
    %11 = vector.load %arg15[%c0_7, %c0_8] : memref<16x128xf32, #tpu.memory_space<vmem>>, vector<16x128xf32>
    %c0_9 = arith.constant 0 : index
    %c0_10 = arith.constant 0 : index
    %12 = vector.load %arg10[%c0_9, %c0_10] : memref<256x128xf32, #tpu.memory_space<vmem>>, vector<256x128xf32>
    %cst_11 = arith.constant dense<0.000000e+00> : vector<16x128xf32>
    %13 = tpu.matmul %10, %12, %cst_11 {dimension_numbers = #tpu.dot_dimension_numbers<[1], [0], [0], [1], [0, 0, 1, 1], [], []>} : vector<16x256xf32>, vector<256x128xf32>, vector<16x128xf32> -> vector<16x128xf32>
    %14 = arith.addf %11, %13 : vector<16x128xf32>
    %c0_12 = arith.constant 0 : index
    %c0_13 = arith.constant 0 : index
    %15 = vector.load %arg15[%c0_12, %c0_13] : memref<16x128xf32, #tpu.memory_space<vmem>>, vector<16x128xf32>
    tpu.vector_store %arg15[%c0_12, %c0_13], %14 {strides = array<i32>} : memref<16x128xf32, #tpu.memory_space<vmem>>, vector<16x128xf32>,
    %c0_i32_14 = arith.constant 0 : i32
    %16 = arith.cmpi eq, %arg1, %c0_i32_14 : i32
    %17 = arith.extui %16 : i1 to i32
    %c0_i32_15 = arith.constant 0 : i32
    %18 = arith.cmpi ne, %17, %c0_i32_15 : i32
    scf.if %18 {
      %c0_16 = arith.constant 0 : index
      %c0_17 = arith.constant 0 : index
      %19 = vector.load %arg15[%c0_16, %c0_17] : memref<16x128xf32, #tpu.memory_space<vmem>>, vector<16x128xf32>
      %c0_18 = arith.constant 0 : index
      %c0_19 = arith.constant 0 : index
      %20 = vector.load %arg11[%c0_18, %c0_19] : memref<1x128xf32, #tpu.memory_space<vmem>>, vector<1x128xf32>
      %21 = vector.broadcast %20 : vector<1x128xf32> to vector<16x128xf32>
      %22 = arith.addf %19, %21 : vector<16x128xf32>
      %c0_20 = arith.constant 0 : index
      %c0_21 = arith.constant 0 : index
      %23 = vector.load %arg14[%c0_20, %c0_21] : memref<16x128xf32, #tpu.memory_space<vmem>>, vector<16x128xf32>
      %24 = arith.addf %22, %23 : vector<16x128xf32>
      %c0_22 = arith.constant 0 : index
      %c0_23 = arith.constant 0 : index
      %25 = vector.load %arg12[%c0_22, %c0_23] : memref<16x128xf32, #tpu.memory_space<vmem>>, vector<16x128xf32>
      tpu.vector_store %arg12[%c0_22, %c0_23], %24 {strides = array<i32>} : memref<16x128xf32, #tpu.memory_space<vmem>>, vector<16x128xf32>,
    } else {
    }
    return
  }
  func.func @transform_0(%arg0: i32, %arg1: i32) -> (i32, i32) {
    %c0_i32 = arith.constant 0 : i32
    %c0_i32_0 = arith.constant 0 : i32
    return %arg0, %c0_i32 : i32, i32
  }
  func.func @transform_1(%arg0: i32, %arg1: i32) -> (i32, i32) {
    %c0_i32 = arith.constant 0 : i32
    %c0_i32_0 = arith.constant 0 : i32
    return %arg0, %c0_i32 : i32, i32
  }
  func.func @transform_2(%arg0: i32, %arg1: i32) -> (i32, i32) {
    %c0_i32 = arith.constant 0 : i32
    %c0_i32_0 = arith.constant 0 : i32
    return %arg0, %c0_i32 : i32, i32
  }
  func.func @transform_3(%arg0: i32, %arg1: i32) -> (i32, i32) {
    %c0_i32 = arith.constant 0 : i32
    %c0_i32_0 = arith.constant 0 : i32
    return %arg0, %c0_i32 : i32, i32
  }
  func.func @transform_4(%arg0: i32, %arg1: i32) -> (i32, i32) {
    %c0_i32 = arith.constant 0 : i32
    %c0_i32_0 = arith.constant 0 : i32
    %c0_i32_1 = arith.constant 0 : i32
    return %c0_i32, %c0_i32_0 : i32, i32
  }
  func.func @transform_5(%arg0: i32, %arg1: i32) -> (i32, i32) {
    %c0_i32 = arith.constant 0 : i32
    %c0_i32_0 = arith.constant 0 : i32
    %c0_i32_1 = arith.constant 0 : i32
    return %c0_i32, %c0_i32_0 : i32, i32
  }
  func.func @transform_6(%arg0: i32, %arg1: i32) -> (i32, i32) {
    %c0_i32 = arith.constant 0 : i32
    %c0_i32_0 = arith.constant 0 : i32
    return %c0_i32, %arg1 : i32, i32
  }
  func.func @transform_7(%arg0: i32, %arg1: i32) -> (i32, i32) {
    %c0_i32 = arith.constant 0 : i32
    %c0_i32_0 = arith.constant 0 : i32
    return %c0_i32, %arg1 : i32, i32
  }
  func.func @transform_8(%arg0: i32, %arg1: i32) -> (i32, i32) {
    %c0_i32 = arith.constant 0 : i32
    %c0_i32_0 = arith.constant 0 : i32
    return %arg1, %c0_i32 : i32, i32
  }
  func.func @transform_9(%arg0: i32, %arg1: i32) -> (i32, i32) {
    %c0_i32 = arith.constant 0 : i32
    %c0_i32_0 = arith.constant 0 : i32
    %c0_i32_1 = arith.constant 0 : i32
    return %c0_i32, %c0_i32_0 : i32, i32
  }
  func.func @transform_10(%arg0: i32, %arg1: i32) -> (i32, i32) {
    %c0_i32 = arith.constant 0 : i32
    %c0_i32_0 = arith.constant 0 : i32
    return %arg0, %c0_i32 : i32, i32
  }
}

module attributes {stable_mosaic.version = 11 : i64} {
  func.func @_linear_kernel(%arg0: i32, %arg1: memref<16x128xf32, #tpu.memory_space<vmem>>, %arg2: memref<128x256xf32, #tpu.memory_space<vmem>>, %arg3: memref<1x256xf32, #tpu.memory_space<vmem>>, %arg4: memref<16x256xf32, #tpu.memory_space<vmem>>) attributes {dimension_semantics = [#tpu.dimension_semantics<parallel>], iteration_bounds = array<i64: 1>, scalar_prefetch = 0 : i64, scratch_operands = 0 : i64, tpu.core_type = #tpu.core_type<tc>, window_params = [{transform_indices = @transform_0, window_bounds = array<i64: 16, 128>}, {pipeline_mode = #tpu.pipeline_mode<synchronous>, transform_indices = @transform_1, window_bounds = array<i64: 128, 256>}, {pipeline_mode = #tpu.pipeline_mode<synchronous>, transform_indices = @transform_2, window_bounds = array<i64: 1, 256>}, {transform_indices = @transform_3, window_bounds = array<i64: 16, 256>}]} {
    %c0 = arith.constant 0 : index
    %c0_0 = arith.constant 0 : index
    %0 = vector.load %arg1[%c0, %c0_0] : memref<16x128xf32, #tpu.memory_space<vmem>>, vector<16x128xf32>
    %c0_1 = arith.constant 0 : index
    %c0_2 = arith.constant 0 : index
    %1 = vector.load %arg2[%c0_1, %c0_2] : memref<128x256xf32, #tpu.memory_space<vmem>>, vector<128x256xf32>
    %cst = arith.constant dense<0.000000e+00> : vector<16x256xf32>
    %2 = tpu.matmul %0, %1, %cst {dimension_numbers = #tpu.dot_dimension_numbers<[1], [0], [0], [1], [0, 0, 1, 1], [], []>} : vector<16x128xf32>, vector<128x256xf32>, vector<16x256xf32> -> vector<16x256xf32>
    %c0_3 = arith.constant 0 : index
    %c0_4 = arith.constant 0 : index
    %3 = vector.load %arg3[%c0_3, %c0_4] : memref<1x256xf32, #tpu.memory_space<vmem>>, vector<1x256xf32>
    %4 = vector.broadcast %3 : vector<1x256xf32> to vector<16x256xf32>
    %5 = arith.addf %2, %4 : vector<16x256xf32>
    %c0_5 = arith.constant 0 : index
    %c0_6 = arith.constant 0 : index
    %6 = vector.load %arg4[%c0_5, %c0_6] : memref<16x256xf32, #tpu.memory_space<vmem>>, vector<16x256xf32>
    tpu.vector_store %arg4[%c0_5, %c0_6], %5 {strides = array<i32>} : memref<16x256xf32, #tpu.memory_space<vmem>>, vector<16x256xf32>,
    return
  }
  func.func @transform_0(%arg0: i32) -> (i32, i32) {
    %c0_i32 = arith.constant 0 : i32
    %c0_i32_0 = arith.constant 0 : i32
    return %arg0, %c0_i32 : i32, i32
  }
  func.func @transform_1(%arg0: i32) -> (i32, i32) {
    %c0_i32 = arith.constant 0 : i32
    %c0_i32_0 = arith.constant 0 : i32
    %c0_i32_1 = arith.constant 0 : i32
    return %c0_i32, %c0_i32_0 : i32, i32
  }
  func.func @transform_2(%arg0: i32) -> (i32, i32) {
    %c0_i32 = arith.constant 0 : i32
    %c0_i32_0 = arith.constant 0 : i32
    %c0_i32_1 = arith.constant 0 : i32
    return %c0_i32, %c0_i32_0 : i32, i32
  }
  func.func @transform_3(%arg0: i32) -> (i32, i32) {
    %c0_i32 = arith.constant 0 : i32
    %c0_i32_0 = arith.constant 0 : i32
    return %arg0, %c0_i32 : i32, i32
  }
}

</mosaic_0001>

<llo_original>
// kernel: decoder_layer_forward.18
$region0: #{decoder_layer_forward.18}
  #allocation0 [shape = 'u32[]', space=smem, size = 0x4, offset = 0x4, fixed_abs, tag = 'smem constant byte address 0x4 - core index']
  #allocation1 [shape = 'u32[144,128]{1,0:T(1,128)}', space=vmem, size = 0x12000, scoped, tag = 'internal scratch']
  %s0 = inlined_call_operand.vmem [shape: f32[16,128], index: 0, kind: input, shape index: {}]
  %s1 = inlined_call_operand.vmem [shape: f32[16,128], index: 1, kind: input, shape index: {}]
  %s2 = inlined_call_operand.vmem [shape: f32[128,128], index: 2, kind: input, shape index: {}]
  %s3 = inlined_call_operand.vmem [shape: f32[1,128], index: 3, kind: input, shape index: {}]
  %s4 = inlined_call_operand.vmem [shape: f32[16,128], index: 4, kind: output, shape index: {}]
  %s5 = sld [smem:[#allocation0]]
  $region26: #{decoder_layer_forward.18} parent=0
    _
  %s7 = ssub.s32 1, %s5
  %s8 = scalar_select 0, %s7, %s5
  // Predicated region
  $region2: #{decoder_layer_forward.18} parent=0 // pred_check
    _
  $region3: #{decoder_layer_forward.18} parent=0 // pred_check_branch
    %10 = sbr.rel (0) target = $region5
  $region4: #{decoder_layer_forward.18} parent=0 // pred_region
    _
  $region5: #{decoder_layer_forward.18} parent=0 // pred_fallthru
    _
  // Predicated region
  $region6: #{decoder_layer_forward.18} parent=0 // pred_check
    _
  $region7: #{decoder_layer_forward.18} parent=0 // pred_check_branch
    %12 = sbr.rel (0) target = $region9
  $region8: #{decoder_layer_forward.18} parent=0 // pred_region
    _
  $region9: #{decoder_layer_forward.18} parent=0 // pred_fallthru
    _
  // Predicated region
  $region10: #{decoder_layer_forward.18} parent=0 // pred_check
    _
  $region11: #{decoder_layer_forward.18} parent=0 // pred_check_branch
    %14 = sbr.rel (0) target = $region13
  $region12: #{decoder_layer_forward.18} parent=0 // pred_region
    _
  $region13: #{decoder_layer_forward.18} parent=0 // pred_fallthru
    _
  // Predicated region
  $region14: #{decoder_layer_forward.18} parent=0 // pred_check
    _
  $region15: #{decoder_layer_forward.18} parent=0 // pred_check_branch
    %16 = sbr.rel (0) target = $region17
  $region16: #{decoder_layer_forward.18} parent=0 // pred_region
    _
  $region17: #{decoder_layer_forward.18} parent=0 // pred_fallthru
    _
  %v17 = vld [vmem:[%s0] sm:$0xff]
  %v18 = vld [vmem:[%s0 + $0x8] sm:$0xff]
  %v19 = vld [vmem:[%s2] sm:$0xff]
  %v20 = vld [vmem:[%s2 + $0x8] sm:$0xff]
  %v21 = vld [vmem:[%s2 + $0x10] sm:$0xff]
  %v22 = vld [vmem:[%s2 + $0x18] sm:$0xff]
  %v23 = vld [vmem:[%s2 + $0x20] sm:$0xff]
  %v24 = vld [vmem:[%s2 + $0x28] sm:$0xff]
  %v25 = vld [vmem:[%s2 + $0x30] sm:$0xff]
  %v26 = vld [vmem:[%s2 + $0x38] sm:$0xff]
  %v27 = vld [vmem:[%s2 + $0x40] sm:$0xff]
  %v28 = vld [vmem:[%s2 + $0x48] sm:$0xff]
  %v29 = vld [vmem:[%s2 + $0x50] sm:$0xff]
  %v30 = vld [vmem:[%s2 + $0x58] sm:$0xff]
  %v31 = vld [vmem:[%s2 + $0x60] sm:$0xff]
  %v32 = vld [vmem:[%s2 + $0x68] sm:$0xff]
  %v33 = vld [vmem:[%s2 + $0x70] sm:$0xff]
  %v34 = vld [vmem:[%s2 + $0x78] sm:$0xff]
  %v35 = vld [vmem:[%s3] sm:$0x1]
  %v37 = vlaneseq
  %v38 = vshrl.u32 %v37, 7
  %v39 = vsub.s32 0, %v38
  %v40 = vrot.slane %v35, %v39
  %42 = vmatprep.subr.mxu0 0.0
  %43 = vmatpush1.msra.mxu0 %v34
  %44 = vmatprep.subr.mxu0 0.0
  %45 = vmatpush1.msra.mxu0 %v33
  %46 = vmatprep.subr.mxu0 0.0
  %47 = vmatpush1.msra.mxu0 %v32
  %48 = vmatprep.subr.mxu0 0.0
  %49 = vmatpush1.msra.mxu0 %v31
  %50 = vmatprep.subr.mxu0 0.0
  %51 = vmatpush1.msra.mxu0 %v30
  %52 = vmatprep.subr.mxu0 0.0
  %53 = vmatpush1.msra.mxu0 %v29
  %54 = vmatprep.subr.mxu0 0.0
  %55 = vmatpush1.msra.mxu0 %v28
  %56 = vmatprep.subr.mxu0 0.0
  %57 = vmatpush1.msra.mxu0 %v27
  %58 = vmatprep.subr.mxu0 0.0
  %59 = vmatpush1.msra.mxu0 %v26
  %60 = vmatprep.subr.mxu0 0.0
  %61 = vmatpush1.msra.mxu0 %v25
  %62 = vmatprep.subr.mxu0 0.0
  %63 = vmatpush1.msra.mxu0 %v24
  %64 = vmatprep.subr.mxu0 0.0
  %65 = vmatpush1.msra.mxu0 %v23
  %66 = vmatprep.subr.mxu0 0.0
  %67 = vmatpush1.msra.mxu0 %v22
  %68 = vmatprep.subr.mxu0 0.0
  %69 = vmatpush1.msra.mxu0 %v21
  %70 = vmatprep.subr.mxu0 0.0
  %71 = vmatpush1.msra.mxu0 %v20
  %72 = vmatprep.subr.mxu0 0.0
  %73 = vmatpush1.msra.mxu0 %v19
  %74 = vmatprep.subr.mxu0 0.0
  %75 = vmatpush2.msra.mxu0 0.0
  %76 = vmatprep.subr.mxu0 0.0
  %77 = vmatpush2.msra.mxu0 0.0
  %78 = vmatprep.subr.mxu0 0.0
  %79 = vmatpush2.msra.mxu0 0.0
  %80 = vmatprep.subr.mxu0 0.0
  %81 = vmatpush2.msra.mxu0 0.0
  %82 = vmatprep.subr.mxu0 0.0
  %83 = vmatpush2.msra.mxu0 0.0
  %84 = vmatprep.subr.mxu0 0.0
  %85 = vmatpush2.msra.mxu0 0.0
  %86 = vmatprep.subr.mxu0 0.0
  %87 = vmatpush2.msra.mxu0 0.0
  %88 = vmatprep.subr.mxu0 0.0
  %89 = vmatpush2.msra.mxu0 0.0
  %90 = vmatprep.subr.mxu0 0.0
  %91 = vmatpush2.msra.mxu0 0.0
  %92 = vmatprep.subr.mxu0 0.0
  %93 = vmatpush2.msra.mxu0 0.0
  %94 = vmatprep.subr.mxu0 0.0
  %95 = vmatpush2.msra.mxu0 0.0
  %96 = vmatprep.subr.mxu0 0.0
  %97 = vmatpush2.msra.mxu0 0.0
  %98 = vmatprep.subr.mxu0 0.0
  %99 = vmatpush2.msra.mxu0 0.0
  %100 = vmatprep.subr.mxu0 0.0
  %101 = vmatpush2.msra.mxu0 0.0
  %102 = vmatprep.subr.mxu0 0.0
  %103 = vmatpush2.msra.mxu0 0.0
  %104 = vmatprep.subr.mxu0 0.0
  %105 = vmatpush2.msra.mxu0 0.0
  %106 = vmatprep.mubr.f32.mxu0 0.0
  %107 = vmatmul.mubr.f32.gmra.mxu0 %v17
  %v108 = vpop.f32.mrf.mxu0
  %v109 = vadd.f32 %v40, %v108
  %v110 = vpop.f32.mrf.mxu0
  %111 = vmatprep.mubr.f32.mxu0 0.0
  %112 = vmatmul.mubr.f32.gmra.mxu0 %v18
  %v113 = vpop.f32.mrf.mxu0
  %v114 = vadd.f32 %v40, %v113
  %v115 = vpop.f32.mrf.mxu0
  %116 = vdwg.mxu0
  %v117 = vld [vmem:[%s1] sm:$0xff]
  %v118 = vld [vmem:[%s1 + $0x8] sm:$0xff]
  %v119 = vadd.f32 %v109, %v117
  %v120 = vadd.f32 %v114, %v118
  %121 = vst [vmem:[%s4] sm:$0xff] %v119
  %122 = vst [vmem:[%s4 + $0x8] sm:$0xff] %v120
  // Predicated region
  $region18: #{decoder_layer_forward.18} parent=0 // pred_check
    _
  $region19: #{decoder_layer_forward.18} parent=0 // pred_check_branch
    %124 = sbr.rel (0) target = $region21
  $region20: #{decoder_layer_forward.18} parent=0 // pred_region
    _
  $region21: #{decoder_layer_forward.18} parent=0 // pred_fallthru
    _
  // Predicated region
  $region22: #{decoder_layer_forward.18} parent=0 // pred_check
    _
  $region23: #{decoder_layer_forward.18} parent=0 // pred_check_branch
    %126 = sbr.rel (0) target = $region25
  $region24: #{decoder_layer_forward.18} parent=0 // pred_region
    _
  $region25: #{decoder_layer_forward.18} parent=0 // pred_fallthru
    _

// kernel: decoder_layer_forward.16
$region0: #{decoder_layer_forward.16}
  #allocation0 [shape = 'u32[]', space=smem, size = 0x4, offset = 0x4, fixed_abs, tag = 'smem constant byte address 0x4 - core index']
  #allocation1 [shape = 'u32[144,128]{1,0:T(1,128)}', space=vmem, size = 0x12000, scoped, tag = 'internal scratch']
  %s0 = inlined_call_operand.vmem [shape: f32[16,128], index: 0, kind: input, shape index: {}]
  %s1 = inlined_call_operand.vmem [shape: f32[1,128], index: 1, kind: input, shape index: {}]
  %s2 = inlined_call_operand.vmem [shape: f32[1,128], index: 2, kind: input, shape index: {}]
  %s3 = inlined_call_operand.vmem [shape: f32[128,384], index: 3, kind: input, shape index: {}]
  %s4 = inlined_call_operand.vmem [shape: f32[1,384], index: 4, kind: input, shape index: {}]
  %s5 = inlined_call_operand.vmem [shape: f32[16,384], index: 5, kind: output, shape index: {}]
  %s6 = sld [smem:[#allocation0]]
  $region30: #{decoder_layer_forward.16} parent=0
    _
  %s8 = ssub.s32 1, %s6
  %s9 = scalar_select 0, %s8, %s6
  // Predicated region
  $region2: #{decoder_layer_forward.16} parent=0 // pred_check
    _
  $region3: #{decoder_layer_forward.16} parent=0 // pred_check_branch
    %11 = sbr.rel (0) target = $region5
  $region4: #{decoder_layer_forward.16} parent=0 // pred_region
    _
  $region5: #{decoder_layer_forward.16} parent=0 // pred_fallthru
    _
  // Predicated region
  $region6: #{decoder_layer_forward.16} parent=0 // pred_check
    _
  $region7: #{decoder_layer_forward.16} parent=0 // pred_check_branch
    %13 = sbr.rel (0) target = $region9
  $region8: #{decoder_layer_forward.16} parent=0 // pred_region
    _
  $region9: #{decoder_layer_forward.16} parent=0 // pred_fallthru
    _
  // Predicated region
  $region10: #{decoder_layer_forward.16} parent=0 // pred_check
    _
  $region11: #{decoder_layer_forward.16} parent=0 // pred_check_branch
    %15 = sbr.rel (0) target = $region13
  $region12: #{decoder_layer_forward.16} parent=0 // pred_region
    _
  $region13: #{decoder_layer_forward.16} parent=0 // pred_fallthru
    _
  // Predicated region
  $region14: #{decoder_layer_forward.16} parent=0 // pred_check
    _
  $region15: #{decoder_layer_forward.16} parent=0 // pred_check_branch
    %17 = sbr.rel (0) target = $region17
  $region16: #{decoder_layer_forward.16} parent=0 // pred_region
    _
  $region17: #{decoder_layer_forward.16} parent=0 // pred_fallthru
    _
  // Predicated region
  $region18: #{decoder_layer_forward.16} parent=0 // pred_check
    _
  $region19: #{decoder_layer_forward.16} parent=0 // pred_check_branch
    %19 = sbr.rel (0) target = $region21
  $region20: #{decoder_layer_forward.16} parent=0 // pred_region
    _
  $region21: #{decoder_layer_forward.16} parent=0 // pred_fallthru
    _
  %v20 = vld [vmem:[%s0] sm:$0xff]
  %v21 = vld [vmem:[%s0 + $0x8] sm:$0xff]
  %v22 = vld [vmem:[%s1] sm:$0x1]
  %v23 = vld [vmem:[%s2] sm:$0x1]
  %24 = vadd.xlane.f32.xlu0 %v20
  %v25 = vpop.xlane.xlu0 %24
  %26 = vadd.xlane.f32.xlu0 %v21
  %v27 = vpop.xlane.xlu0 %26
  %v28 = vrcp.pop 128.0
  %v29 = vmul.f32 %v25, %v28
  %v30 = vmul.f32 %v27, %v28
  %v31 = vsub.f32 %v20, %v29
  %v32 = vsub.f32 %v21, %v30
  %v33 = vmul.f32 %v31, %v31
  %v34 = vmul.f32 %v32, %v32
  %35 = vadd.xlane.f32.xlu0 %v33
  %v36 = vpop.xlane.xlu0 %35
  %37 = vadd.xlane.f32.xlu0 %v34
  %v38 = vpop.xlane.xlu0 %37
  %v39 = vrcp.pop 127.0
  %v40 = vmul.f32 %v36, %v39
  %v41 = vmul.f32 %v38, %v39
  %v43 = vlaneseq
  %v44 = vshrl.u32 %v43, 7
  %v45 = vsub.s32 0, %v44
  %v46 = vrot.slane %v22, %v45
  %v48 = vmul.f32 %v46, %v31
  %v49 = vmul.f32 %v46, %v32
  %v50 = vrsqrt.pop %v40
  %v51 = vmul.f32 %v40, %v50
  %vm52 = vcmp.eq.f32.partialorder %v40, inf
  %v53 = vsel %vm52, %v40, %v51
  %vm54 = vcmp.eq.f32.partialorder %v40, 0.0
  %v55 = vand.u32 %v40, 2147483648
  %v56 = vsel %vm54, %v55, %v53
  %v57 = vrsqrt.pop %v41
  %v58 = vmul.f32 %v41, %v57
  %vm59 = vcmp.eq.f32.partialorder %v41, inf
  %v60 = vsel %vm59, %v41, %v58
  %vm61 = vcmp.eq.f32.partialorder %v41, 0.0
  %v62 = vand.u32 %v41, 2147483648
  %v63 = vsel %vm61, %v62, %v60
  %v64 = vadd.f32 %v56, 1e-06
  %v65 = vadd.f32 %v63, 1e-06
  %v66 = vrcp.pop %v64
  %v67 = vmul.f32 %v48, %v66
  %v68 = vrcp.pop %v65
  %v69 = vmul.f32 %v49, %v68
  %v71 = vlaneseq
  %v72 = vshrl.u32 %v71, 7
  %v73 = vsub.s32 0, %v72
  %v74 = vrot.slane %v23, %v73
  %v76 = vadd.f32 %v67, %v74
  %v77 = vadd.f32 %v69, %v74
  %v78 = vld [vmem:[%s3] sm:$0xff]
  %v79 = vld [vmem:[%s3 + $0x8] sm:$0xff]
  %v80 = vld [vmem:[%s3 + $0x10] sm:$0xff]
  %v81 = vld [vmem:[%s3 + $0x18] sm:$0xff]
  %v82 = vld [vmem:[%s3 + $0x20] sm:$0xff]
  %v83 = vld [vmem:[%s3 + $0x28] sm:$0xff]
  %v84 = vld [vmem:[%s3 + $0x30] sm:$0xff]
  %v85 = vld [vmem:[%s3 + $0x38] sm:$0xff]
  %v86 = vld [vmem:[%s3 + $0x40] sm:$0xff]
  %v87 = vld [vmem:[%s3 + $0x48] sm:$0xff]
  %v88 = vld [vmem:[%s3 + $0x50] sm:$0xff]
  %v89 = vld [vmem:[%s3 + $0x58] sm:$0xff]
  %v90 = vld [vmem:[%s3 + $0x60] sm:$0xff]
  %v91 = vld [vmem:[%s3 + $0x68] sm:$0xff]
  %v92 = vld [vmem:[%s3 + $0x70] sm:$0xff]
  %v93 = vld [vmem:[%s3 + $0x78] sm:$0xff]
  %v94 = vld [vmem:[%s3 + $0x80] sm:$0xff]
  %v95 = vld [vmem:[%s3 + $0x88] sm:$0xff]
  %v96 = vld [vmem:[%s3 + $0x90] sm:$0xff]
  %v97 = vld [vmem:[%s3 + $0x98] sm:$0xff]
  %v98 = vld [vmem:[%s3 + $0xa0] sm:$0xff]
  %v99 = vld [vmem:[%s3 + $0xa8] sm:$0xff]
  %v100 = vld [vmem:[%s3 + $0xb0] sm:$0xff]
  %v101 = vld [vmem:[%s3 + $0xb8] sm:$0xff]
  %v102 = vld [vmem:[%s3 + $0xc0] sm:$0xff]
  %v103 = vld [vmem:[%s3 + $0xc8] sm:$0xff]
  %v104 = vld [vmem:[%s3 + $0xd0] sm:$0xff]
  %v105 = vld [vmem:[%s3 + $0xd8] sm:$0xff]
  %v106 = vld [vmem:[%s3 + $0xe0] sm:$0xff]
  %v107 = vld [vmem:[%s3 + $0xe8] sm:$0xff]
  %v108 = vld [vmem:[%s3 + $0xf0] sm:$0xff]
  %v109 = vld [vmem:[%s3 + $0xf8] sm:$0xff]
  %v110 = vld [vmem:[%s3 + $0x100] sm:$0xff]
  %v111 = vld [vmem:[%s3 + $0x108] sm:$0xff]
  %v112 = vld [vmem:[%s3 + $0x110] sm:$0xff]
  %v113 = vld [vmem:[%s3 + $0x118] sm:$0xff]
  %v114 = vld [vmem:[%s3 + $0x120] sm:$0xff]
  %v115 = vld [vmem:[%s3 + $0x128] sm:$0xff]
  %v116 = vld [vmem:[%s3 + $0x130] sm:$0xff]
  %v117 = vld [vmem:[%s3 + $0x138] sm:$0xff]
  %v118 = vld [vmem:[%s3 + $0x140] sm:$0xff]
  %v119 = vld [vmem:[%s3 + $0x148] sm:$0xff]
  %v120 = vld [vmem:[%s3 + $0x150] sm:$0xff]
  %v121 = vld [vmem:[%s3 + $0x158] sm:$0xff]
  %v122 = vld [vmem:[%s3 + $0x160] sm:$0xff]
  %v123 = vld [vmem:[%s3 + $0x168] sm:$0xff]
  %v124 = vld [vmem:[%s3 + $0x170] sm:$0xff]
  %v125 = vld [vmem:[%s3 + $0x178] sm:$0xff]
  %v126 = vld [vmem:[%s4] sm:$0x7]
  %v128 = vlaneseq
  %v129 = vshrl.u32 %v128, 7
  %v130 = vsub.s32 0, %v129
  %v131 = vrot.slane %v126, %v130
  %v132 = vlaneseq
  %v133 = vshrl.u32 %v132, 7
  %v134 = vsub.s32 1, %v133
  %v135 = vrot.slane %v126, %v134
  %v136 = vlaneseq
  %v137 = vshrl.u32 %v136, 7
  %v138 = vsub.s32 2, %v137
  %v139 = vrot.slane %v126, %v138
  %143 = vmatprep.subr.mxu0 %v124
  %144 = vmatpush1.msra.mxu0 %v123
  %145 = vmatprep.subr.mxu0 %v121
  %146 = vmatpush1.msra.mxu0 %v120
  %147 = vmatprep.subr.mxu0 %v118
  %148 = vmatpush1.msra.mxu0 %v117
  %149 = vmatprep.subr.mxu0 %v115
  %150 = vmatpush1.msra.mxu0 %v114
  %151 = vmatprep.subr.mxu0 %v112
  %152 = vmatpush1.msra.mxu0 %v111
  %153 = vmatprep.subr.mxu0 %v109
  %154 = vmatpush1.msra.mxu0 %v108
  %155 = vmatprep.subr.mxu0 %v106
  %156 = vmatpush1.msra.mxu0 %v105
  %157 = vmatprep.subr.mxu0 %v103
  %158 = vmatpush1.msra.mxu0 %v102
  %159 = vmatprep.subr.mxu0 %v100
  %160 = vmatpush1.msra.mxu0 %v99
  %161 = vmatprep.subr.mxu0 %v97
  %162 = vmatpush1.msra.mxu0 %v96
  %163 = vmatprep.subr.mxu0 %v94
  %164 = vmatpush1.msra.mxu0 %v93
  %165 = vmatprep.subr.mxu0 %v91
  %166 = vmatpush1.msra.mxu0 %v90
  %167 = vmatprep.subr.mxu0 %v88
  %168 = vmatpush1.msra.mxu0 %v87
  %169 = vmatprep.subr.mxu0 %v85
  %170 = vmatpush1.msra.mxu0 %v84
  %171 = vmatprep.subr.mxu0 %v82
  %172 = vmatpush1.msra.mxu0 %v81
  %173 = vmatprep.subr.mxu0 %v79
  %174 = vmatpush1.msra.mxu0 %v78
  %175 = vmatprep.subr.mxu0 0.0
  %176 = vmatpush2.msra.mxu0 0.0
  %177 = vmatprep.subr.mxu0 0.0
  %178 = vmatpush2.msra.mxu0 0.0
  %179 = vmatprep.subr.mxu0 0.0
  %180 = vmatpush2.msra.mxu0 0.0
  %181 = vmatprep.subr.mxu0 0.0
  %182 = vmatpush2.msra.mxu0 0.0
  %183 = vmatprep.subr.mxu0 0.0
  %184 = vmatpush2.msra.mxu0 0.0
  %185 = vmatprep.subr.mxu0 0.0
  %186 = vmatpush2.msra.mxu0 0.0
  %187 = vmatprep.subr.mxu0 0.0
  %188 = vmatpush2.msra.mxu0 0.0
  %189 = vmatprep.subr.mxu0 0.0
  %190 = vmatpush2.msra.mxu0 0.0
  %191 = vmatprep.subr.mxu0 0.0
  %192 = vmatpush2.msra.mxu0 0.0
  %193 = vmatprep.subr.mxu0 0.0
  %194 = vmatpush2.msra.mxu0 0.0
  %195 = vmatprep.subr.mxu0 0.0
  %196 = vmatpush2.msra.mxu0 0.0
  %197 = vmatprep.subr.mxu0 0.0
  %198 = vmatpush2.msra.mxu0 0.0
  %199 = vmatprep.subr.mxu0 0.0
  %200 = vmatpush2.msra.mxu0 0.0
  %201 = vmatprep.subr.mxu0 0.0
  %202 = vmatpush2.msra.mxu0 0.0
  %203 = vmatprep.subr.mxu0 0.0
  %204 = vmatpush2.msra.mxu0 0.0
  %205 = vmatprep.subr.mxu0 0.0
  %206 = vmatpush2.msra.mxu0 0.0
  %207 = vmatprep.mubr.f32.mxu0 0.0
  %208 = vmatmul.mubr.f32.gmra.mxu0 %v76
  %v209 = vpop.f32.mrf.mxu0
  %v210 = vadd.f32 %v131, %v209
  %v211 = vpop.f32.mrf.mxu0
  %v212 = vadd.f32 %v135, %v211
  %213 = vmatprep.mubr.f32.mxu0 0.0
  %214 = vmatmul.mubr.f32.gmra.mxu0 %v77
  %v215 = vpop.f32.mrf.mxu0
  %v216 = vadd.f32 %v131, %v215
  %v217 = vpop.f32.mrf.mxu0
  %v218 = vadd.f32 %v135, %v217
  %219 = vdwg.mxu0
  %220 = vmatprep.subr.mxu0 0.0
  %221 = vmatpush1.msra.mxu0 %v125
  %222 = vmatprep.subr.mxu0 0.0
  %223 = vmatpush1.msra.mxu0 %v122
  %224 = vmatprep.subr.mxu0 0.0
  %225 = vmatpush1.msra.mxu0 %v119
  %226 = vmatprep.subr.mxu0 0.0
  %227 = vmatpush1.msra.mxu0 %v116
  %228 = vmatprep.subr.mxu0 0.0
  %229 = vmatpush1.msra.mxu0 %v113
  %230 = vmatprep.subr.mxu0 0.0
  %231 = vmatpush1.msra.mxu0 %v110
  %232 = vmatprep.subr.mxu0 0.0
  %233 = vmatpush1.msra.mxu0 %v107
  %234 = vmatprep.subr.mxu0 0.0
  %235 = vmatpush1.msra.mxu0 %v104
  %236 = vmatprep.subr.mxu0 0.0
  %237 = vmatpush1.msra.mxu0 %v101
  %238 = vmatprep.subr.mxu0 0.0
  %239 = vmatpush1.msra.mxu0 %v98
  %240 = vmatprep.subr.mxu0 0.0
  %241 = vmatpush1.msra.mxu0 %v95
  %242 = vmatprep.subr.mxu0 0.0
  %243 = vmatpush1.msra.mxu0 %v92
  %244 = vmatprep.subr.mxu0 0.0
  %245 = vmatpush1.msra.mxu0 %v89
  %246 = vmatprep.subr.mxu0 0.0
  %247 = vmatpush1.msra.mxu0 %v86
  %248 = vmatprep.subr.mxu0 0.0
  %249 = vmatpush1.msra.mxu0 %v83
  %250 = vmatprep.subr.mxu0 0.0
  %251 = vmatpush1.msra.mxu0 %v80
  %252 = vmatprep.subr.mxu0 0.0
  %253 = vmatpush2.msra.mxu0 0.0
  %254 = vmatprep.subr.mxu0 0.0
  %255 = vmatpush2.msra.mxu0 0.0
  %256 = vmatprep.subr.mxu0 0.0
  %257 = vmatpush2.msra.mxu0 0.0
  %258 = vmatprep.subr.mxu0 0.0
  %259 = vmatpush2.msra.mxu0 0.0
  %260 = vmatprep.subr.mxu0 0.0
  %261 = vmatpush2.msra.mxu0 0.0
  %262 = vmatprep.subr.mxu0 0.0
  %263 = vmatpush2.msra.mxu0 0.0
  %264 = vmatprep.subr.mxu0 0.0
  %265 = vmatpush2.msra.mxu0 0.0
  %266 = vmatprep.subr.mxu0 0.0
  %267 = vmatpush2.msra.mxu0 0.0
  %268 = vmatprep.subr.mxu0 0.0
  %269 = vmatpush2.msra.mxu0 0.0
  %270 = vmatprep.subr.mxu0 0.0
  %271 = vmatpush2.msra.mxu0 0.0
  %272 = vmatprep.subr.mxu0 0.0
  %273 = vmatpush2.msra.mxu0 0.0
  %274 = vmatprep.subr.mxu0 0.0
  %275 = vmatpush2.msra.mxu0 0.0
  %276 = vmatprep.subr.mxu0 0.0
  %277 = vmatpush2.msra.mxu0 0.0
  %278 = vmatprep.subr.mxu0 0.0
  %279 = vmatpush2.msra.mxu0 0.0
  %280 = vmatprep.subr.mxu0 0.0
  %281 = vmatpush2.msra.mxu0 0.0
  %282 = vmatprep.subr.mxu0 0.0
  %283 = vmatpush2.msra.mxu0 0.0
  %284 = vmatprep.mubr.f32.mxu0 0.0
  %285 = vmatmul.mubr.f32.gmra.mxu0 %v76
  %v286 = vpop.f32.mrf.mxu0
  %v287 = vadd.f32 %v139, %v286
  %v288 = vpop.f32.mrf.mxu0
  %289 = vmatprep.mubr.f32.mxu0 0.0
  %290 = vmatmul.mubr.f32.gmra.mxu0 %v77
  %v291 = vpop.f32.mrf.mxu0
  %v292 = vadd.f32 %v139, %v291
  %v293 = vpop.f32.mrf.mxu0
  %294 = vdwg.mxu0
  %295 = vst [vmem:[%s5] sm:$0xff] %v210
  %296 = vst [vmem:[%s5 + $0x8] sm:$0xff] %v212
  %297 = vst [vmem:[%s5 + $0x10] sm:$0xff] %v287
  %298 = vst [vmem:[%s5 + $0x18] sm:$0xff] %v216
  %299 = vst [vmem:[%s5 + $0x20] sm:$0xff] %v218
  %300 = vst [vmem:[%s5 + $0x28] sm:$0xff] %v292
  // Predicated region
  $region22: #{decoder_layer_forward.16} parent=0 // pred_check
    _
  $region23: #{decoder_layer_forward.16} parent=0 // pred_check_branch
    %302 = sbr.rel (0) target = $region25
  $region24: #{decoder_layer_forward.16} parent=0 // pred_region
    _
  $region25: #{decoder_layer_forward.16} parent=0 // pred_fallthru
    _
  // Predicated region
  $region26: #{decoder_layer_forward.16} parent=0 // pred_check
    _
  $region27: #{decoder_layer_forward.16} parent=0 // pred_check_branch
    %304 = sbr.rel (0) target = $region29
  $region28: #{decoder_layer_forward.16} parent=0 // pred_region
    _
  $region29: #{decoder_layer_forward.16} parent=0 // pred_fallthru
    _

// kernel: decoder_layer_forward.27
$region0: #{decoder_layer_forward.27}
  #allocation0 [shape = 'u32[]', space=smem, size = 0x4, offset = 0x4, fixed_abs, tag = 'smem constant byte address 0x4 - core index']
  #allocation1 [shape = 'u32[144,128]{1,0:T(1,128)}', space=vmem, size = 0x12000, scoped, tag = 'internal scratch']
  %s0 = inlined_call_operand.vmem [shape: f32[16,128], index: 0, kind: input, shape index: {}]
  %s1 = inlined_call_operand.vmem [shape: f32[1,128], index: 1, kind: input, shape index: {}]
  %s2 = inlined_call_operand.vmem [shape: f32[1,128], index: 2, kind: input, shape index: {}]
  %s3 = inlined_call_operand.vmem [shape: f32[128,128], index: 3, kind: input, shape index: {}]
  %s4 = inlined_call_operand.vmem [shape: f32[1,128], index: 4, kind: input, shape index: {}]
  %s5 = inlined_call_operand.vmem [shape: f32[16,128], index: 5, kind: output, shape index: {}]
  %s6 = sld [smem:[#allocation0]]
  $region30: #{decoder_layer_forward.27} parent=0
    _
  %s8 = ssub.s32 1, %s6
  %s9 = scalar_select 0, %s8, %s6
  // Predicated region
  $region2: #{decoder_layer_forward.27} parent=0 // pred_check
    _
  $region3: #{decoder_layer_forward.27} parent=0 // pred_check_branch
    %11 = sbr.rel (0) target = $region5
  $region4: #{decoder_layer_forward.27} parent=0 // pred_region
    _
  $region5: #{decoder_layer_forward.27} parent=0 // pred_fallthru
    _
  // Predicated region
  $region6: #{decoder_layer_forward.27} parent=0 // pred_check
    _
  $region7: #{decoder_layer_forward.27} parent=0 // pred_check_branch
    %13 = sbr.rel (0) target = $region9
  $region8: #{decoder_layer_forward.27} parent=0 // pred_region
    _
  $region9: #{decoder_layer_forward.27} parent=0 // pred_fallthru
    _
  // Predicated region
  $region10: #{decoder_layer_forward.27} parent=0 // pred_check
    _
  $region11: #{decoder_layer_forward.27} parent=0 // pred_check_branch
    %15 = sbr.rel (0) target = $region13
  $region12: #{decoder_layer_forward.27} parent=0 // pred_region
    _
  $region13: #{decoder_layer_forward.27} parent=0 // pred_fallthru
    _
  // Predicated region
  $region14: #{decoder_layer_forward.27} parent=0 // pred_check
    _
  $region15: #{decoder_layer_forward.27} parent=0 // pred_check_branch
    %17 = sbr.rel (0) target = $region17
  $region16: #{decoder_layer_forward.27} parent=0 // pred_region
    _
  $region17: #{decoder_layer_forward.27} parent=0 // pred_fallthru
    _
  // Predicated region
  $region18: #{decoder_layer_forward.27} parent=0 // pred_check
    _
  $region19: #{decoder_layer_forward.27} parent=0 // pred_check_branch
    %19 = sbr.rel (0) target = $region21
  $region20: #{decoder_layer_forward.27} parent=0 // pred_region
    _
  $region21: #{decoder_layer_forward.27} parent=0 // pred_fallthru
    _
  %v20 = vld [vmem:[%s0] sm:$0xff]
  %v21 = vld [vmem:[%s0 + $0x8] sm:$0xff]
  %v22 = vld [vmem:[%s1] sm:$0x1]
  %v23 = vld [vmem:[%s2] sm:$0x1]
  %24 = vadd.xlane.f32.xlu0 %v20
  %v25 = vpop.xlane.xlu0 %24
  %26 = vadd.xlane.f32.xlu0 %v21
  %v27 = vpop.xlane.xlu0 %26
  %v28 = vrcp.pop 128.0
  %v29 = vmul.f32 %v25, %v28
  %v30 = vmul.f32 %v27, %v28
  %v31 = vsub.f32 %v20, %v29
  %v32 = vsub.f32 %v21, %v30
  %v33 = vmul.f32 %v31, %v31
  %v34 = vmul.f32 %v32, %v32
  %35 = vadd.xlane.f32.xlu0 %v33
  %v36 = vpop.xlane.xlu0 %35
  %37 = vadd.xlane.f32.xlu0 %v34
  %v38 = vpop.xlane.xlu0 %37
  %v39 = vrcp.pop 127.0
  %v40 = vmul.f32 %v36, %v39
  %v41 = vmul.f32 %v38, %v39
  %v43 = vlaneseq
  %v44 = vshrl.u32 %v43, 7
  %v45 = vsub.s32 0, %v44
  %v46 = vrot.slane %v22, %v45
  %v48 = vmul.f32 %v46, %v31
  %v49 = vmul.f32 %v46, %v32
  %v50 = vrsqrt.pop %v40
  %v51 = vmul.f32 %v40, %v50
  %vm52 = vcmp.eq.f32.partialorder %v40, inf
  %v53 = vsel %vm52, %v40, %v51
  %vm54 = vcmp.eq.f32.partialorder %v40, 0.0
  %v55 = vand.u32 %v40, 2147483648
  %v56 = vsel %vm54, %v55, %v53
  %v57 = vrsqrt.pop %v41
  %v58 = vmul.f32 %v41, %v57
  %vm59 = vcmp.eq.f32.partialorder %v41, inf
  %v60 = vsel %vm59, %v41, %v58
  %vm61 = vcmp.eq.f32.partialorder %v41, 0.0
  %v62 = vand.u32 %v41, 2147483648
  %v63 = vsel %vm61, %v62, %v60
  %v64 = vadd.f32 %v56, 1e-06
  %v65 = vadd.f32 %v63, 1e-06
  %v66 = vrcp.pop %v64
  %v67 = vmul.f32 %v48, %v66
  %v68 = vrcp.pop %v65
  %v69 = vmul.f32 %v49, %v68
  %v71 = vlaneseq
  %v72 = vshrl.u32 %v71, 7
  %v73 = vsub.s32 0, %v72
  %v74 = vrot.slane %v23, %v73
  %v76 = vadd.f32 %v67, %v74
  %v77 = vadd.f32 %v69, %v74
  %v78 = vld [vmem:[%s3] sm:$0xff]
  %v79 = vld [vmem:[%s3 + $0x8] sm:$0xff]
  %v80 = vld [vmem:[%s3 + $0x10] sm:$0xff]
  %v81 = vld [vmem:[%s3 + $0x18] sm:$0xff]
  %v82 = vld [vmem:[%s3 + $0x20] sm:$0xff]
  %v83 = vld [vmem:[%s3 + $0x28] sm:$0xff]
  %v84 = vld [vmem:[%s3 + $0x30] sm:$0xff]
  %v85 = vld [vmem:[%s3 + $0x38] sm:$0xff]
  %v86 = vld [vmem:[%s3 + $0x40] sm:$0xff]
  %v87 = vld [vmem:[%s3 + $0x48] sm:$0xff]
  %v88 = vld [vmem:[%s3 + $0x50] sm:$0xff]
  %v89 = vld [vmem:[%s3 + $0x58] sm:$0xff]
  %v90 = vld [vmem:[%s3 + $0x60] sm:$0xff]
  %v91 = vld [vmem:[%s3 + $0x68] sm:$0xff]
  %v92 = vld [vmem:[%s3 + $0x70] sm:$0xff]
  %v93 = vld [vmem:[%s3 + $0x78] sm:$0xff]
  %v94 = vld [vmem:[%s4] sm:$0x1]
  %v96 = vlaneseq
  %v97 = vshrl.u32 %v96, 7
  %v98 = vsub.s32 0, %v97
  %v99 = vrot.slane %v94, %v98
  %101 = vmatprep.subr.mxu0 0.0
  %102 = vmatpush1.msra.mxu0 %v93
  %103 = vmatprep.subr.mxu0 0.0
  %104 = vmatpush1.msra.mxu0 %v92
  %105 = vmatprep.subr.mxu0 0.0
  %106 = vmatpush1.msra.mxu0 %v91
  %107 = vmatprep.subr.mxu0 0.0
  %108 = vmatpush1.msra.mxu0 %v90
  %109 = vmatprep.subr.mxu0 0.0
  %110 = vmatpush1.msra.mxu0 %v89
  %111 = vmatprep.subr.mxu0 0.0
  %112 = vmatpush1.msra.mxu0 %v88
  %113 = vmatprep.subr.mxu0 0.0
  %114 = vmatpush1.msra.mxu0 %v87
  %115 = vmatprep.subr.mxu0 0.0
  %116 = vmatpush1.msra.mxu0 %v86
  %117 = vmatprep.subr.mxu0 0.0
  %118 = vmatpush1.msra.mxu0 %v85
  %119 = vmatprep.subr.mxu0 0.0
  %120 = vmatpush1.msra.mxu0 %v84
  %121 = vmatprep.subr.mxu0 0.0
  %122 = vmatpush1.msra.mxu0 %v83
  %123 = vmatprep.subr.mxu0 0.0
  %124 = vmatpush1.msra.mxu0 %v82
  %125 = vmatprep.subr.mxu0 0.0
  %126 = vmatpush1.msra.mxu0 %v81
  %127 = vmatprep.subr.mxu0 0.0
  %128 = vmatpush1.msra.mxu0 %v80
  %129 = vmatprep.subr.mxu0 0.0
  %130 = vmatpush1.msra.mxu0 %v79
  %131 = vmatprep.subr.mxu0 0.0
  %132 = vmatpush1.msra.mxu0 %v78
  %133 = vmatprep.subr.mxu0 0.0
  %134 = vmatpush2.msra.mxu0 0.0
  %135 = vmatprep.subr.mxu0 0.0
  %136 = vmatpush2.msra.mxu0 0.0
  %137 = vmatprep.subr.mxu0 0.0
  %138 = vmatpush2.msra.mxu0 0.0
  %139 = vmatprep.subr.mxu0 0.0
  %140 = vmatpush2.msra.mxu0 0.0
  %141 = vmatprep.subr.mxu0 0.0
  %142 = vmatpush2.msra.mxu0 0.0
  %143 = vmatprep.subr.mxu0 0.0
  %144 = vmatpush2.msra.mxu0 0.0
  %145 = vmatprep.subr.mxu0 0.0
  %146 = vmatpush2.msra.mxu0 0.0
  %147 = vmatprep.subr.mxu0 0.0
  %148 = vmatpush2.msra.mxu0 0.0
  %149 = vmatprep.subr.mxu0 0.0
  %150 = vmatpush2.msra.mxu0 0.0
  %151 = vmatprep.subr.mxu0 0.0
  %152 = vmatpush2.msra.mxu0 0.0
  %153 = vmatprep.subr.mxu0 0.0
  %154 = vmatpush2.msra.mxu0 0.0
  %155 = vmatprep.subr.mxu0 0.0
  %156 = vmatpush2.msra.mxu0 0.0
  %157 = vmatprep.subr.mxu0 0.0
  %158 = vmatpush2.msra.mxu0 0.0
  %159 = vmatprep.subr.mxu0 0.0
  %160 = vmatpush2.msra.mxu0 0.0
  %161 = vmatprep.subr.mxu0 0.0
  %162 = vmatpush2.msra.mxu0 0.0
  %163 = vmatprep.subr.mxu0 0.0
  %164 = vmatpush2.msra.mxu0 0.0
  %165 = vmatprep.mubr.f32.mxu0 0.0
  %166 = vmatmul.mubr.f32.gmra.mxu0 %v76
  %v167 = vpop.f32.mrf.mxu0
  %v168 = vadd.f32 %v99, %v167
  %v169 = vpop.f32.mrf.mxu0
  %170 = vmatprep.mubr.f32.mxu0 0.0
  %171 = vmatmul.mubr.f32.gmra.mxu0 %v77
  %v172 = vpop.f32.mrf.mxu0
  %v173 = vadd.f32 %v99, %v172
  %v174 = vpop.f32.mrf.mxu0
  %175 = vdwg.mxu0
  %176 = vst [vmem:[%s5] sm:$0xff] %v168
  %177 = vst [vmem:[%s5 + $0x8] sm:$0xff] %v173
  // Predicated region
  $region22: #{decoder_layer_forward.27} parent=0 // pred_check
    _
  $region23: #{decoder_layer_forward.27} parent=0 // pred_check_branch
    %179 = sbr.rel (0) target = $region25
  $region24: #{decoder_layer_forward.27} parent=0 // pred_region
    _
  $region25: #{decoder_layer_forward.27} parent=0 // pred_fallthru
    _
  // Predicated region
  $region26: #{decoder_layer_forward.27} parent=0 // pred_check
    _
  $region27: #{decoder_layer_forward.27} parent=0 // pred_check_branch
    %181 = sbr.rel (0) target = $region29
  $region28: #{decoder_layer_forward.27} parent=0 // pred_region
    _
  $region29: #{decoder_layer_forward.27} parent=0 // pred_fallthru
    _

// kernel: decoder_layer_forward.17
$region0: #{decoder_layer_forward.17}
  #allocation0 [shape = 'u32[]', space=smem, size = 0x4, offset = 0x4, fixed_abs, tag = 'smem constant byte address 0x4 - core index']
  #allocation1 [shape = 'u32[144,128]{1,0:T(1,128)}', space=vmem, size = 0x12000, scoped, tag = 'internal scratch']
  %s0 = inlined_call_operand.vmem [shape: f32[2,8,384], index: 0, kind: input, shape index: {}]
  %s1 = inlined_call_operand.vmem [shape: s32[1,8,8], index: 1, kind: input, shape index: {}]
  %s2 = inlined_call_operand.vmem [shape: f32[2,8,128], index: 2, kind: output, shape index: {}]
  %s3 = sld [smem:[#allocation0]]
  $region41: #{decoder_layer_forward.17} parent=0
    _
  %s5 = ssub.s32 1, %s3
  %s6 = scalar_select 0, %s5, %s3
  loop: start=0, step=1, limit=4
  $region2: #{decoder_layer_forward.17} parent=0 // loop_pre_header
    _
  $region3: #{decoder_layer_forward.17} parent=0 // loop_header
    %s8 = sphi 0, %s12
    %p9 = scmp.ge.s32.totalorder %s8, 4
    %s18 = sphi 0, %s20
    %s21 = sphi 0, %s18
    %s22 = sphi 0, %s21
    %s38 = sphi 0, %s22
    %s42 = sphi 0, %s42
    %s44 = sphi 0, %s42
    %s45 = sphi 0, %s44
    %s59 = sphi 0, %s45
    %s65 = sphi 0, %s67
    %s68 = sphi 0, %s65
    %s69 = sphi 0, %s68
    %s85 = sphi 0, %s69
  $region4: #{decoder_layer_forward.17} parent=0 // loop_header_branch
    %11 = sbr.rel (%p9) target = $region8
  $region5: #{decoder_layer_forward.17} parent=0 // loop_body
    %s13 = ssub.s32 %s8, 1
    %s14 = ssub.s32 %s8, 2
    %s15 = sadd.s32 %s8, 1
    %s16 = ssub.s32 %s8, %s15
    %p17 = scmp.eq.s32.totalorder %s16, 0
    %s19 = sadd.s32 %s18, 1
    %s20 = scalar_select %p17, %s18, %s19
    %p23 = pneg %p17
    %p24 = scmp.eq.s32.totalorder %s8, 1
    %p25 = por %p23, %p24
    %p26 = scmp.ne.s32.totalorder %s18, %s21
    %p27 = scmp.eq.s32.totalorder %s8, 0
    %p28 = por %p26, %p27
    %p29 = scmp.ne.s32.totalorder %s18, %s21
    %p30 = scmp.eq.s32.totalorder %s13, 1
    %p31 = por %p29, %p30
    %p32 = scmp.ne.s32.totalorder %s21, %s22
    %p33 = scmp.eq.s32.totalorder %s13, 0
    %p34 = por %p32, %p33
    %p35 = scmp.ne.s32.totalorder %s21, %s22
    %p36 = scmp.eq.s32.totalorder %s14, 1
    %p37 = por %p35, %p36
    %p39 = scmp.ne.s32.totalorder %s22, %s38
    %p40 = scmp.eq.s32.totalorder %s14, 0
    %p41 = por %p39, %p40
    %s43 = sadd.s32 %s42, 1
    %p46 = scmp.eq.s32.totalorder %s8, 1
    %p47 = scmp.ne.s32.totalorder %s42, %s44
    %p48 = scmp.eq.s32.totalorder %s8, 0
    %p49 = por %p47, %p48
    %p50 = scmp.ne.s32.totalorder %s42, %s44
    %p51 = scmp.eq.s32.totalorder %s13, 1
    %p52 = por %p50, %p51
    %p53 = scmp.ne.s32.totalorder %s44, %s45
    %p54 = scmp.eq.s32.totalorder %s13, 0
    %p55 = por %p53, %p54
    %p56 = scmp.ne.s32.totalorder %s44, %s45
    %p57 = scmp.eq.s32.totalorder %s14, 1
    %p58 = por %p56, %p57
    %p60 = scmp.ne.s32.totalorder %s45, %s59
    %p61 = scmp.eq.s32.totalorder %s14, 0
    %p62 = por %p60, %p61
    %s63 = ssub.s32 %s8, %s15
    %p64 = scmp.eq.s32.totalorder %s63, 0
    %s66 = sadd.s32 %s65, 1
    %s67 = scalar_select %p64, %s65, %s66
    %p70 = pneg %p64
    %p71 = scmp.eq.s32.totalorder %s8, 1
    %p72 = por %p70, %p71
    %p73 = scmp.ne.s32.totalorder %s65, %s68
    %p74 = scmp.eq.s32.totalorder %s8, 0
    %p75 = por %p73, %p74
    %p76 = scmp.ne.s32.totalorder %s65, %s68
    %p77 = scmp.eq.s32.totalorder %s13, 1
    %p78 = por %p76, %p77
    %p79 = scmp.ne.s32.totalorder %s68, %s69
    %p80 = scmp.eq.s32.totalorder %s13, 0
    %p81 = por %p79, %p80
    %p82 = scmp.ne.s32.totalorder %s68, %s69
    %p83 = scmp.eq.s32.totalorder %s14, 1
    %p84 = por %p82, %p83
    %p86 = scmp.ne.s32.totalorder %s69, %s85
    %p87 = scmp.eq.s32.totalorder %s14, 0
    %p88 = por %p86, %p87
    %p89 = scmp.le.s32.totalorder 1, %s8
    %p90 = scmp.lt.s32.totalorder %s8, 3
    %p91 = pnand %p89, %p90
    %p92 = pneg %p91
    // Predicated region
    $region9: #{decoder_layer_forward.17} parent=5 // pred_check
      _
    $region10: #{decoder_layer_forward.17} parent=5 // pred_check_branch
      %94 = sbr.rel (%p91) target = $region12
    $region11: #{decoder_layer_forward.17} parent=5 // pred_region
      %s95 = ssub.s32 %s8, 1
      // Predicated region
      $region13: #{decoder_layer_forward.17} parent=11 // pred_check
        %p96 = pneg %p55
      $region14: #{decoder_layer_forward.17} parent=11 // pred_check_branch
        %98 = sbr.rel (%p96) target = $region16
      $region15: #{decoder_layer_forward.17} parent=11 // pred_region
        _
      $region16: #{decoder_layer_forward.17} parent=11 // pred_fallthru
        _
    $region12: #{decoder_layer_forward.17} parent=5 // pred_fallthru
      _
    %p99 = scmp.lt.s32.totalorder %s8, 2
    // Predicated region
    $region17: #{decoder_layer_forward.17} parent=5 // pred_check
      %p100 = pneg %p99
    $region18: #{decoder_layer_forward.17} parent=5 // pred_check_branch
      %102 = sbr.rel (%p100) target = $region20
    $region19: #{decoder_layer_forward.17} parent=5 // pred_region
      // Predicated region
      $region21: #{decoder_layer_forward.17} parent=19 // pred_check
        %p103 = pneg %p28
      $region22: #{decoder_layer_forward.17} parent=19 // pred_check_branch
        %105 = sbr.rel (%p103) target = $region24
      $region23: #{decoder_layer_forward.17} parent=19 // pred_region
        %p106 = scmp.lt.s32.totalorder %s8, 1
        %s107 = scalar_select %p106, %s8, 1
        %s108 = smul.addr %s107, 3
        %s109 = smul.addr %s108, 8
        %s110 = scalar_lea.vmem %s0, %s109
      $region24: #{decoder_layer_forward.17} parent=19 // pred_fallthru
        _
    $region20: #{decoder_layer_forward.17} parent=5 // pred_fallthru
      _
    %p111 = scmp.le.s32.totalorder 1, %s8
    %p112 = scmp.lt.s32.totalorder %s8, 3
    %p113 = pnand %p111, %p112
    %p114 = pneg %p113
    // Predicated region
    $region25: #{decoder_layer_forward.17} parent=5 // pred_check
      _
    $region26: #{decoder_layer_forward.17} parent=5 // pred_check_branch
      %116 = sbr.rel (%p113) target = $region28
    $region27: #{decoder_layer_forward.17} parent=5 // pred_region
      %s117 = ssub.s32 %s8, 1
      %p118 = scmp.lt.s32.totalorder %s13, 1
      %s119 = scalar_select %p118, %s13, 1
      %s120 = smul.addr %s119, 3
      %s121 = smul.addr %s120, 8
      %s122 = scalar_lea.vmem %s0, %s121
      %p123 = pneg %p34
      %p124 = pneg %p31
      %p125 = pneg %p55
      %p126 = pneg %p52
      %p127 = pneg %p81
      %p128 = pneg %p78
      %p129 = scmp.lt.s32.totalorder %s13, 1
      %s130 = scalar_select %p129, %s13, 1
      %s131 = smul.addr %s130, 8
      %s132 = scalar_lea.vmem %s2, %s131
      %p133 = scmp.lt.s32.totalorder %s13, 1
      %s134 = scalar_select %p133, %s13, 1
      %s135 = smul.addr %s134, 3
      %s136 = smul.addr %s135, 8
      %s137 = scalar_lea.vmem %s0, %s136
      %p138 = scmp.lt.s32.totalorder %s13, 1
      %s139 = scalar_select %p138, %s13, 1
      %s140 = smul.addr %s139, 8
      %s141 = scalar_lea.vmem %s2, %s140
      %v142 = vld [vmem:[%s137] sm:$0xff]
      %v143 = vld [vmem:[%s137 + $0x8] sm:$0xff]
      %v144 = vld [vmem:[%s137 + $0x10] sm:$0xff]
      %v145 = vld [vmem:[%s1] sm:$0xff]
      %vm146 = vcmask 261120
      %v148 = vsel %vm146, %v142, 0
      %v151 = vsel %vm146, %v143, 0
      %153 = vmatprep.subr.mxu0 0.0
      %154 = vmatpush1.xpose.msra.mxu0 0.0
      %155 = vmatprep.subr.mxu0 0.0
      %156 = vmatpush1.xpose.msra.mxu0 0.0
      %157 = vmatprep.subr.mxu0 0.0
      %158 = vmatpush1.xpose.msra.mxu0 0.0
      %159 = vmatprep.subr.mxu0 0.0
      %160 = vmatpush1.xpose.msra.mxu0 0.0
      %161 = vmatprep.subr.mxu0 0.0
      %162 = vmatpush1.xpose.msra.mxu0 0.0
      %163 = vmatprep.subr.mxu0 0.0
      %164 = vmatpush1.xpose.msra.mxu0 0.0
      %165 = vmatprep.subr.mxu0 0.0
      %166 = vmatpush1.xpose.msra.mxu0 0.0
      %167 = vmatprep.subr.mxu0 0.0
      %168 = vmatpush1.xpose.msra.mxu0 0.0
      %169 = vmatprep.subr.mxu0 0.0
      %170 = vmatpush1.xpose.msra.mxu0 0.0
      %171 = vmatprep.subr.mxu0 0.0
      %172 = vmatpush1.xpose.msra.mxu0 0.0
      %173 = vmatprep.subr.mxu0 0.0
      %174 = vmatpush1.xpose.msra.mxu0 0.0
      %175 = vmatprep.subr.mxu0 0.0
      %176 = vmatpush1.xpose.msra.mxu0 0.0
      %177 = vmatprep.subr.mxu0 0.0
      %178 = vmatpush1.xpose.msra.mxu0 0.0
      %179 = vmatprep.subr.mxu0 0.0
      %180 = vmatpush1.xpose.msra.mxu0 0.0
      %181 = vmatprep.subr.mxu0 0.0
      %182 = vmatpush1.xpose.msra.mxu0 0.0
      %183 = vmatprep.subr.mxu0 0.0
      %184 = vmatpush1.xpose.msra.mxu0 %v151
      %185 = vmatprep.subr.mxu0 0.0
      %186 = vmatpush2.xpose.msra.mxu0 0.0
      %187 = vmatprep.subr.mxu0 0.0
      %188 = vmatpush2.xpose.msra.mxu0 0.0
      %189 = vmatprep.subr.mxu0 0.0
      %190 = vmatpush2.xpose.msra.mxu0 0.0
      %191 = vmatprep.subr.mxu0 0.0
      %192 = vmatpush2.xpose.msra.mxu0 0.0
      %193 = vmatprep.subr.mxu0 0.0
      %194 = vmatpush2.xpose.msra.mxu0 0.0
      %195 = vmatprep.subr.mxu0 0.0
      %196 = vmatpush2.xpose.msra.mxu0 0.0
      %197 = vmatprep.subr.mxu0 0.0
      %198 = vmatpush2.xpose.msra.mxu0 0.0
      %199 = vmatprep.subr.mxu0 0.0
      %200 = vmatpush2.xpose.msra.mxu0 0.0
      %201 = vmatprep.subr.mxu0 0.0
      %202 = vmatpush2.xpose.msra.mxu0 0.0
      %203 = vmatprep.subr.mxu0 0.0
      %204 = vmatpush2.xpose.msra.mxu0 0.0
      %205 = vmatprep.subr.mxu0 0.0
      %206 = vmatpush2.xpose.msra.mxu0 0.0
      %207 = vmatprep.subr.mxu0 0.0
      %208 = vmatpush2.xpose.msra.mxu0 0.0
      %209 = vmatprep.subr.mxu0 0.0
      %210 = vmatpush2.xpose.msra.mxu0 0.0
      %211 = vmatprep.subr.mxu0 0.0
      %212 = vmatpush2.xpose.msra.mxu0 0.0
      %213 = vmatprep.subr.mxu0 0.0
      %214 = vmatpush2.xpose.msra.mxu0 0.0
      %215 = vmatprep.subr.mxu0 0.0
      %216 = vmatpush2.xpose.msra.mxu0 0.0
      %217 = vmatprep.mubr.f32.mxu0 0.0
      %218 = vmatmul.mubr.f32.gmra.mxu0 %v148
      %v219 = vpop.f32.mrf.mxu0
      %v220 = vadd.f32 0.0, %v219
      %v221 = vpop.f32.mrf.mxu0
      %222 = vdwg.mxu0
      %v223 = vmul.f32 %v220, 0.17677669
      %vm224 = vcmp.ne.s32.totalorder %v145, 0
      %v225 = vsel %vm224, %v223, -1e+09
      %vm226 = vcmask 64512
      %v227 = vsel %vm226, %v225, -inf
      %228 = vmax.xlane.f32.xlu0 %v227
      %v229 = vpop.xlane.xlu0 %228
      %v230 = vsub.f32 %v225, %v229
      %v231 = vmul.f32 %v230, 1.442695
      %v232 = vpow.pop %v231
      %v233 = vsel %vm226, %v232, 0.0
      %234 = vadd.xlane.f32.xlu0 %v233
      %v235 = vpop.xlane.xlu0 %234
      %v236 = vrcp.pop %v235
      %v237 = vmul.f32 %v232, %v236
      %v239 = vsel %vm226, %v237, 0
      %241 = vmatprep.subr.mxu0 0.0
      %242 = vmatpush1.msra.mxu0 0.0
      %243 = vmatprep.subr.mxu0 0.0
      %244 = vmatpush1.msra.mxu0 0.0
      %245 = vmatprep.subr.mxu0 0.0
      %246 = vmatpush1.msra.mxu0 0.0
      %247 = vmatprep.subr.mxu0 0.0
      %248 = vmatpush1.msra.mxu0 0.0
      %249 = vmatprep.subr.mxu0 0.0
      %250 = vmatpush1.msra.mxu0 0.0
      %251 = vmatprep.subr.mxu0 0.0
      %252 = vmatpush1.msra.mxu0 0.0
      %253 = vmatprep.subr.mxu0 0.0
      %254 = vmatpush1.msra.mxu0 0.0
      %255 = vmatprep.subr.mxu0 0.0
      %256 = vmatpush1.msra.mxu0 0.0
      %257 = vmatprep.subr.mxu0 0.0
      %258 = vmatpush1.msra.mxu0 0.0
      %259 = vmatprep.subr.mxu0 0.0
      %260 = vmatpush1.msra.mxu0 0.0
      %261 = vmatprep.subr.mxu0 0.0
      %262 = vmatpush1.msra.mxu0 0.0
      %263 = vmatprep.subr.mxu0 0.0
      %264 = vmatpush1.msra.mxu0 0.0
      %265 = vmatprep.subr.mxu0 0.0
      %266 = vmatpush1.msra.mxu0 0.0
      %267 = vmatprep.subr.mxu0 0.0
      %268 = vmatpush1.msra.mxu0 0.0
      %269 = vmatprep.subr.mxu0 0.0
      %270 = vmatpush1.msra.mxu0 0.0
      %271 = vmatprep.subr.mxu0 0.0
      %272 = vmatpush1.msra.mxu0 %v144
      %273 = vmatprep.subr.mxu0 0.0
      %274 = vmatpush2.msra.mxu0 0.0
      %275 = vmatprep.subr.mxu0 0.0
      %276 = vmatpush2.msra.mxu0 0.0
      %277 = vmatprep.subr.mxu0 0.0
      %278 = vmatpush2.msra.mxu0 0.0
      %279 = vmatprep.subr.mxu0 0.0
      %280 = vmatpush2.msra.mxu0 0.0
      %281 = vmatprep.subr.mxu0 0.0
      %282 = vmatpush2.msra.mxu0 0.0
      %283 = vmatprep.subr.mxu0 0.0
      %284 = vmatpush2.msra.mxu0 0.0
      %285 = vmatprep.subr.mxu0 0.0
      %286 = vmatpush2.msra.mxu0 0.0
      %287 = vmatprep.subr.mxu0 0.0
      %288 = vmatpush2.msra.mxu0 0.0
      %289 = vmatprep.subr.mxu0 0.0
      %290 = vmatpush2.msra.mxu0 0.0
      %291 = vmatprep.subr.mxu0 0.0
      %292 = vmatpush2.msra.mxu0 0.0
      %293 = vmatprep.subr.mxu0 0.0
      %294 = vmatpush2.msra.mxu0 0.0
      %295 = vmatprep.subr.mxu0 0.0
      %296 = vmatpush2.msra.mxu0 0.0
      %297 = vmatprep.subr.mxu0 0.0
      %298 = vmatpush2.msra.mxu0 0.0
      %299 = vmatprep.subr.mxu0 0.0
      %300 = vmatpush2.msra.mxu0 0.0
      %301 = vmatprep.subr.mxu0 0.0
      %302 = vmatpush2.msra.mxu0 0.0
      %303 = vmatprep.subr.mxu0 0.0
      %304 = vmatpush2.msra.mxu0 0.0
      %305 = vmatprep.mubr.f32.mxu0 0.0
      %306 = vmatmul.mubr.f32.gmra.mxu0 %v239
      %v307 = vpop.f32.mrf.mxu0
      %v308 = vadd.f32 0.0, %v307
      %v309 = vpop.f32.mrf.mxu0
      %310 = vdwg.mxu0
      %311 = vrot.lane.b32.xlu0 %v142, 96
      %v312 = vpop.permute.xlu0 %311
      %313 = vrot.lane.b32.xlu0 %v143, 96
      %v314 = vpop.permute.xlu0 %313
      %v315 = vsel %vm146, %v312, 0
      %v317 = vsel %vm146, %v314, 0
      %319 = vmatprep.subr.mxu0 0.0
      %320 = vmatpush1.xpose.msra.mxu0 0.0
      %321 = vmatprep.subr.mxu0 0.0
      %322 = vmatpush1.xpose.msra.mxu0 0.0
      %323 = vmatprep.subr.mxu0 0.0
      %324 = vmatpush1.xpose.msra.mxu0 0.0
      %325 = vmatprep.subr.mxu0 0.0
      %326 = vmatpush1.xpose.msra.mxu0 0.0
      %327 = vmatprep.subr.mxu0 0.0
      %328 = vmatpush1.xpose.msra.mxu0 0.0
      %329 = vmatprep.subr.mxu0 0.0
      %330 = vmatpush1.xpose.msra.mxu0 0.0
      %331 = vmatprep.subr.mxu0 0.0
      %332 = vmatpush1.xpose.msra.mxu0 0.0
      %333 = vmatprep.subr.mxu0 0.0
      %334 = vmatpush1.xpose.msra.mxu0 0.0
      %335 = vmatprep.subr.mxu0 0.0
      %336 = vmatpush1.xpose.msra.mxu0 0.0
      %337 = vmatprep.subr.mxu0 0.0
      %338 = vmatpush1.xpose.msra.mxu0 0.0
      %339 = vmatprep.subr.mxu0 0.0
      %340 = vmatpush1.xpose.msra.mxu0 0.0
      %341 = vmatprep.subr.mxu0 0.0
      %342 = vmatpush1.xpose.msra.mxu0 0.0
      %343 = vmatprep.subr.mxu0 0.0
      %344 = vmatpush1.xpose.msra.mxu0 0.0
      %345 = vmatprep.subr.mxu0 0.0
      %346 = vmatpush1.xpose.msra.mxu0 0.0
      %347 = vmatprep.subr.mxu0 0.0
      %348 = vmatpush1.xpose.msra.mxu0 0.0
      %349 = vmatprep.subr.mxu0 0.0
      %350 = vmatpush1.xpose.msra.mxu0 %v317
      %351 = vmatprep.subr.mxu0 0.0
      %352 = vmatpush2.xpose.msra.mxu0 0.0
      %353 = vmatprep.subr.mxu0 0.0
      %354 = vmatpush2.xpose.msra.mxu0 0.0
      %355 = vmatprep.subr.mxu0 0.0
      %356 = vmatpush2.xpose.msra.mxu0 0.0
      %357 = vmatprep.subr.mxu0 0.0
      %358 = vmatpush2.xpose.msra.mxu0 0.0
      %359 = vmatprep.subr.mxu0 0.0
      %360 = vmatpush2.xpose.msra.mxu0 0.0
      %361 = vmatprep.subr.mxu0 0.0
      %362 = vmatpush2.xpose.msra.mxu0 0.0
      %363 = vmatprep.subr.mxu0 0.0
      %364 = vmatpush2.xpose.msra.mxu0 0.0
      %365 = vmatprep.subr.mxu0 0.0
      %366 = vmatpush2.xpose.msra.mxu0 0.0
      %367 = vmatprep.subr.mxu0 0.0
      %368 = vmatpush2.xpose.msra.mxu0 0.0
      %369 = vmatprep.subr.mxu0 0.0
      %370 = vmatpush2.xpose.msra.mxu0 0.0
      %371 = vmatprep.subr.mxu0 0.0
      %372 = vmatpush2.xpose.msra.mxu0 0.0
      %373 = vmatprep.subr.mxu0 0.0
      %374 = vmatpush2.xpose.msra.mxu0 0.0
      %375 = vmatprep.subr.mxu0 0.0
      %376 = vmatpush2.xpose.msra.mxu0 0.0
      %377 = vmatprep.subr.mxu0 0.0
      %378 = vmatpush2.xpose.msra.mxu0 0.0
      %379 = vmatprep.subr.mxu0 0.0
      %380 = vmatpush2.xpose.msra.mxu0 0.0
      %381 = vmatprep.subr.mxu0 0.0
      %382 = vmatpush2.xpose.msra.mxu0 0.0
      %383 = vmatprep.mubr.f32.mxu0 0.0
      %384 = vmatmul.mubr.f32.gmra.mxu0 %v315
      %v385 = vpop.f32.mrf.mxu0
      %v386 = vadd.f32 0.0, %v385
      %v387 = vpop.f32.mrf.mxu0
      %388 = vdwg.mxu0
      %v389 = vmul.f32 %v386, 0.17677669
      %v390 = vsel %vm224, %v389, -1e+09
      %v391 = vsel %vm226, %v390, -inf
      %392 = vmax.xlane.f32.xlu0 %v391
      %v393 = vpop.xlane.xlu0 %392
      %v394 = vsub.f32 %v390, %v393
      %v395 = vmul.f32 %v394, 1.442695
      %v396 = vpow.pop %v395
      %v397 = vsel %vm226, %v396, 0.0
      %398 = vadd.xlane.f32.xlu0 %v397
      %v399 = vpop.xlane.xlu0 %398
      %v400 = vrcp.pop %v399
      %v401 = vmul.f32 %v396, %v400
      %403 = vrot.lane.b32.xlu0 %v144, 96
      %v404 = vpop.permute.xlu0 %403
      %v407 = vsel %vm226, %v401, 0
      %409 = vmatprep.subr.mxu0 0.0
      %410 = vmatpush1.msra.mxu0 0.0
      %411 = vmatprep.subr.mxu0 0.0
      %412 = vmatpush1.msra.mxu0 0.0
      %413 = vmatprep.subr.mxu0 0.0
      %414 = vmatpush1.msra.mxu0 0.0
      %415 = vmatprep.subr.mxu0 0.0
      %416 = vmatpush1.msra.mxu0 0.0
      %417 = vmatprep.subr.mxu0 0.0
      %418 = vmatpush1.msra.mxu0 0.0
      %419 = vmatprep.subr.mxu0 0.0
      %420 = vmatpush1.msra.mxu0 0.0
      %421 = vmatprep.subr.mxu0 0.0
      %422 = vmatpush1.msra.mxu0 0.0
      %423 = vmatprep.subr.mxu0 0.0
      %424 = vmatpush1.msra.mxu0 0.0
      %425 = vmatprep.subr.mxu0 0.0
      %426 = vmatpush1.msra.mxu0 0.0
      %427 = vmatprep.subr.mxu0 0.0
      %428 = vmatpush1.msra.mxu0 0.0
      %429 = vmatprep.subr.mxu0 0.0
      %430 = vmatpush1.msra.mxu0 0.0
      %431 = vmatprep.subr.mxu0 0.0
      %432 = vmatpush1.msra.mxu0 0.0
      %433 = vmatprep.subr.mxu0 0.0
      %434 = vmatpush1.msra.mxu0 0.0
      %435 = vmatprep.subr.mxu0 0.0
      %436 = vmatpush1.msra.mxu0 0.0
      %437 = vmatprep.subr.mxu0 0.0
      %438 = vmatpush1.msra.mxu0 0.0
      %439 = vmatprep.subr.mxu0 0.0
      %440 = vmatpush1.msra.mxu0 %v404
      %441 = vmatprep.subr.mxu0 0.0
      %442 = vmatpush2.msra.mxu0 0.0
      %443 = vmatprep.subr.mxu0 0.0
      %444 = vmatpush2.msra.mxu0 0.0
      %445 = vmatprep.subr.mxu0 0.0
      %446 = vmatpush2.msra.mxu0 0.0
      %447 = vmatprep.subr.mxu0 0.0
      %448 = vmatpush2.msra.mxu0 0.0
      %449 = vmatprep.subr.mxu0 0.0
      %450 = vmatpush2.msra.mxu0 0.0
      %451 = vmatprep.subr.mxu0 0.0
      %452 = vmatpush2.msra.mxu0 0.0
      %453 = vmatprep.subr.mxu0 0.0
      %454 = vmatpush2.msra.mxu0 0.0
      %455 = vmatprep.subr.mxu0 0.0
      %456 = vmatpush2.msra.mxu0 0.0
      %457 = vmatprep.subr.mxu0 0.0
      %458 = vmatpush2.msra.mxu0 0.0
      %459 = vmatprep.subr.mxu0 0.0
      %460 = vmatpush2.msra.mxu0 0.0
      %461 = vmatprep.subr.mxu0 0.0
      %462 = vmatpush2.msra.mxu0 0.0
      %463 = vmatprep.subr.mxu0 0.0
      %464 = vmatpush2.msra.mxu0 0.0
      %465 = vmatprep.subr.mxu0 0.0
      %466 = vmatpush2.msra.mxu0 0.0
      %467 = vmatprep.subr.mxu0 0.0
      %468 = vmatpush2.msra.mxu0 0.0
      %469 = vmatprep.subr.mxu0 0.0
      %470 = vmatpush2.msra.mxu0 0.0
      %471 = vmatprep.subr.mxu0 0.0
      %472 = vmatpush2.msra.mxu0 0.0
      %473 = vmatprep.mubr.f32.mxu0 0.0
      %474 = vmatmul.mubr.f32.gmra.mxu0 %v407
      %v475 = vpop.f32.mrf.mxu0
      %v476 = vadd.f32 0.0, %v475
      %v477 = vpop.f32.mrf.mxu0
      %478 = vdwg.mxu0
      %479 = vrot.lane.b32.xlu0 %v142, 64
      %v480 = vpop.permute.xlu0 %479
      %481 = vrot.lane.b32.xlu0 %v143, 64
      %v482 = vpop.permute.xlu0 %481
      %v483 = vsel %vm146, %v480, 0
      %v485 = vsel %vm146, %v482, 0
      %487 = vmatprep.subr.mxu0 0.0
      %488 = vmatpush1.xpose.msra.mxu0 0.0
      %489 = vmatprep.subr.mxu0 0.0
      %490 = vmatpush1.xpose.msra.mxu0 0.0
      %491 = vmatprep.subr.mxu0 0.0
      %492 = vmatpush1.xpose.msra.mxu0 0.0
      %493 = vmatprep.subr.mxu0 0.0
      %494 = vmatpush1.xpose.msra.mxu0 0.0
      %495 = vmatprep.subr.mxu0 0.0
      %496 = vmatpush1.xpose.msra.mxu0 0.0
      %497 = vmatprep.subr.mxu0 0.0
      %498 = vmatpush1.xpose.msra.mxu0 0.0
      %499 = vmatprep.subr.mxu0 0.0
      %500 = vmatpush1.xpose.msra.mxu0 0.0
      %501 = vmatprep.subr.mxu0 0.0
      %502 = vmatpush1.xpose.msra.mxu0 0.0
      %503 = vmatprep.subr.mxu0 0.0
      %504 = vmatpush1.xpose.msra.mxu0 0.0
      %505 = vmatprep.subr.mxu0 0.0
      %506 = vmatpush1.xpose.msra.mxu0 0.0
      %507 = vmatprep.subr.mxu0 0.0
      %508 = vmatpush1.xpose.msra.mxu0 0.0
      %509 = vmatprep.subr.mxu0 0.0
      %510 = vmatpush1.xpose.msra.mxu0 0.0
      %511 = vmatprep.subr.mxu0 0.0
      %512 = vmatpush1.xpose.msra.mxu0 0.0
      %513 = vmatprep.subr.mxu0 0.0
      %514 = vmatpush1.xpose.msra.mxu0 0.0
      %515 = vmatprep.subr.mxu0 0.0
      %516 = vmatpush1.xpose.msra.mxu0 0.0
      %517 = vmatprep.subr.mxu0 0.0
      %518 = vmatpush1.xpose.msra.mxu0 %v485
      %519 = vmatprep.subr.mxu0 0.0
      %520 = vmatpush2.xpose.msra.mxu0 0.0
      %521 = vmatprep.subr.mxu0 0.0
      %522 = vmatpush2.xpose.msra.mxu0 0.0
      %523 = vmatprep.subr.mxu0 0.0
      %524 = vmatpush2.xpose.msra.mxu0 0.0
      %525 = vmatprep.subr.mxu0 0.0
      %526 = vmatpush2.xpose.msra.mxu0 0.0
      %527 = vmatprep.subr.mxu0 0.0
      %528 = vmatpush2.xpose.msra.mxu0 0.0
      %529 = vmatprep.subr.mxu0 0.0
      %530 = vmatpush2.xpose.msra.mxu0 0.0
      %531 = vmatprep.subr.mxu0 0.0
      %532 = vmatpush2.xpose.msra.mxu0 0.0
      %533 = vmatprep.subr.mxu0 0.0
      %534 = vmatpush2.xpose.msra.mxu0 0.0
      %535 = vmatprep.subr.mxu0 0.0
      %536 = vmatpush2.xpose.msra.mxu0 0.0
      %537 = vmatprep.subr.mxu0 0.0
      %538 = vmatpush2.xpose.msra.mxu0 0.0
      %539 = vmatprep.subr.mxu0 0.0
      %540 = vmatpush2.xpose.msra.mxu0 0.0
      %541 = vmatprep.subr.mxu0 0.0
      %542 = vmatpush2.xpose.msra.mxu0 0.0
      %543 = vmatprep.subr.mxu0 0.0
      %544 = vmatpush2.xpose.msra.mxu0 0.0
      %545 = vmatprep.subr.mxu0 0.0
      %546 = vmatpush2.xpose.msra.mxu0 0.0
      %547 = vmatprep.subr.mxu0 0.0
      %548 = vmatpush2.xpose.msra.mxu0 0.0
      %549 = vmatprep.subr.mxu0 0.0
      %550 = vmatpush2.xpose.msra.mxu0 0.0
      %551 = vmatprep.mubr.f32.mxu0 0.0
      %552 = vmatmul.mubr.f32.gmra.mxu0 %v483
      %v553 = vpop.f32.mrf.mxu0
      %v554 = vadd.f32 0.0, %v553
      %v555 = vpop.f32.mrf.mxu0
      %556 = vdwg.mxu0
      %v557 = vmul.f32 %v554, 0.17677669
      %v558 = vsel %vm224, %v557, -1e+09
      %v559 = vsel %vm226, %v558, -inf
      %560 = vmax.xlane.f32.xlu0 %v559
      %v561 = vpop.xlane.xlu0 %560
      %v562 = vsub.f32 %v558, %v561
      %v563 = vmul.f32 %v562, 1.442695
      %v564 = vpow.pop %v563
      %v565 = vsel %vm226, %v564, 0.0
      %566 = vadd.xlane.f32.xlu0 %v565
      %v567 = vpop.xlane.xlu0 %566
      %v568 = vrcp.pop %v567
      %v569 = vmul.f32 %v564, %v568
      %570 = vrot.lane.b32.xlu0 %v144, 64
      %v571 = vpop.permute.xlu0 %570
      %v574 = vsel %vm226, %v569, 0
      %576 = vmatprep.subr.mxu0 0.0
      %577 = vmatpush1.msra.mxu0 0.0
      %578 = vmatprep.subr.mxu0 0.0
      %579 = vmatpush1.msra.mxu0 0.0
      %580 = vmatprep.subr.mxu0 0.0
      %581 = vmatpush1.msra.mxu0 0.0
      %582 = vmatprep.subr.mxu0 0.0
      %583 = vmatpush1.msra.mxu0 0.0
      %584 = vmatprep.subr.mxu0 0.0
      %585 = vmatpush1.msra.mxu0 0.0
      %586 = vmatprep.subr.mxu0 0.0
      %587 = vmatpush1.msra.mxu0 0.0
      %588 = vmatprep.subr.mxu0 0.0
      %589 = vmatpush1.msra.mxu0 0.0
      %590 = vmatprep.subr.mxu0 0.0
      %591 = vmatpush1.msra.mxu0 0.0
      %592 = vmatprep.subr.mxu0 0.0
      %593 = vmatpush1.msra.mxu0 0.0
      %594 = vmatprep.subr.mxu0 0.0
      %595 = vmatpush1.msra.mxu0 0.0
      %596 = vmatprep.subr.mxu0 0.0
      %597 = vmatpush1.msra.mxu0 0.0
      %598 = vmatprep.subr.mxu0 0.0
      %599 = vmatpush1.msra.mxu0 0.0
      %600 = vmatprep.subr.mxu0 0.0
      %601 = vmatpush1.msra.mxu0 0.0
      %602 = vmatprep.subr.mxu0 0.0
      %603 = vmatpush1.msra.mxu0 0.0
      %604 = vmatprep.subr.mxu0 0.0
      %605 = vmatpush1.msra.mxu0 0.0
      %606 = vmatprep.subr.mxu0 0.0
      %607 = vmatpush1.msra.mxu0 %v571
      %608 = vmatprep.subr.mxu0 0.0
      %609 = vmatpush2.msra.mxu0 0.0
      %610 = vmatprep.subr.mxu0 0.0
      %611 = vmatpush2.msra.mxu0 0.0
      %612 = vmatprep.subr.mxu0 0.0
      %613 = vmatpush2.msra.mxu0 0.0
      %614 = vmatprep.subr.mxu0 0.0
      %615 = vmatpush2.msra.mxu0 0.0
      %616 = vmatprep.subr.mxu0 0.0
      %617 = vmatpush2.msra.mxu0 0.0
      %618 = vmatprep.subr.mxu0 0.0
      %619 = vmatpush2.msra.mxu0 0.0
      %620 = vmatprep.subr.mxu0 0.0
      %621 = vmatpush2.msra.mxu0 0.0
      %622 = vmatprep.subr.mxu0 0.0
      %623 = vmatpush2.msra.mxu0 0.0
      %624 = vmatprep.subr.mxu0 0.0
      %625 = vmatpush2.msra.mxu0 0.0
      %626 = vmatprep.subr.mxu0 0.0
      %627 = vmatpush2.msra.mxu0 0.0
      %628 = vmatprep.subr.mxu0 0.0
      %629 = vmatpush2.msra.mxu0 0.0
      %630 = vmatprep.subr.mxu0 0.0
      %631 = vmatpush2.msra.mxu0 0.0
      %632 = vmatprep.subr.mxu0 0.0
      %633 = vmatpush2.msra.mxu0 0.0
      %634 = vmatprep.subr.mxu0 0.0
      %635 = vmatpush2.msra.mxu0 0.0
      %636 = vmatprep.subr.mxu0 0.0
      %637 = vmatpush2.msra.mxu0 0.0
      %638 = vmatprep.subr.mxu0 0.0
      %639 = vmatpush2.msra.mxu0 0.0
      %640 = vmatprep.mubr.f32.mxu0 0.0
      %641 = vmatmul.mubr.f32.gmra.mxu0 %v574
      %v642 = vpop.f32.mrf.mxu0
      %v643 = vadd.f32 0.0, %v642
      %v644 = vpop.f32.mrf.mxu0
      %645 = vdwg.mxu0
      %646 = vrot.lane.b32.xlu0 %v142, 32
      %v647 = vpop.permute.xlu0 %646
      %648 = vrot.lane.b32.xlu0 %v143, 32
      %v649 = vpop.permute.xlu0 %648
      %v650 = vsel %vm146, %v647, 0
      %v652 = vsel %vm146, %v649, 0
      %654 = vmatprep.subr.mxu0 0.0
      %655 = vmatpush1.xpose.msra.mxu0 0.0
      %656 = vmatprep.subr.mxu0 0.0
      %657 = vmatpush1.xpose.msra.mxu0 0.0
      %658 = vmatprep.subr.mxu0 0.0
      %659 = vmatpush1.xpose.msra.mxu0 0.0
      %660 = vmatprep.subr.mxu0 0.0
      %661 = vmatpush1.xpose.msra.mxu0 0.0
      %662 = vmatprep.subr.mxu0 0.0
      %663 = vmatpush1.xpose.msra.mxu0 0.0
      %664 = vmatprep.subr.mxu0 0.0
      %665 = vmatpush1.xpose.msra.mxu0 0.0
      %666 = vmatprep.subr.mxu0 0.0
      %667 = vmatpush1.xpose.msra.mxu0 0.0
      %668 = vmatprep.subr.mxu0 0.0
      %669 = vmatpush1.xpose.msra.mxu0 0.0
      %670 = vmatprep.subr.mxu0 0.0
      %671 = vmatpush1.xpose.msra.mxu0 0.0
      %672 = vmatprep.subr.mxu0 0.0
      %673 = vmatpush1.xpose.msra.mxu0 0.0
      %674 = vmatprep.subr.mxu0 0.0
      %675 = vmatpush1.xpose.msra.mxu0 0.0
      %676 = vmatprep.subr.mxu0 0.0
      %677 = vmatpush1.xpose.msra.mxu0 0.0
      %678 = vmatprep.subr.mxu0 0.0
      %679 = vmatpush1.xpose.msra.mxu0 0.0
      %680 = vmatprep.subr.mxu0 0.0
      %681 = vmatpush1.xpose.msra.mxu0 0.0
      %682 = vmatprep.subr.mxu0 0.0
      %683 = vmatpush1.xpose.msra.mxu0 0.0
      %684 = vmatprep.subr.mxu0 0.0
      %685 = vmatpush1.xpose.msra.mxu0 %v652
      %686 = vmatprep.subr.mxu0 0.0
      %687 = vmatpush2.xpose.msra.mxu0 0.0
      %688 = vmatprep.subr.mxu0 0.0
      %689 = vmatpush2.xpose.msra.mxu0 0.0
      %690 = vmatprep.subr.mxu0 0.0
      %691 = vmatpush2.xpose.msra.mxu0 0.0
      %692 = vmatprep.subr.mxu0 0.0
      %693 = vmatpush2.xpose.msra.mxu0 0.0
      %694 = vmatprep.subr.mxu0 0.0
      %695 = vmatpush2.xpose.msra.mxu0 0.0
      %696 = vmatprep.subr.mxu0 0.0
      %697 = vmatpush2.xpose.msra.mxu0 0.0
      %698 = vmatprep.subr.mxu0 0.0
      %699 = vmatpush2.xpose.msra.mxu0 0.0
      %700 = vmatprep.subr.mxu0 0.0
      %701 = vmatpush2.xpose.msra.mxu0 0.0
      %702 = vmatprep.subr.mxu0 0.0
      %703 = vmatpush2.xpose.msra.mxu0 0.0
      %704 = vmatprep.subr.mxu0 0.0
      %705 = vmatpush2.xpose.msra.mxu0 0.0
      %706 = vmatprep.subr.mxu0 0.0
      %707 = vmatpush2.xpose.msra.mxu0 0.0
      %708 = vmatprep.subr.mxu0 0.0
      %709 = vmatpush2.xpose.msra.mxu0 0.0
      %710 = vmatprep.subr.mxu0 0.0
      %711 = vmatpush2.xpose.msra.mxu0 0.0
      %712 = vmatprep.subr.mxu0 0.0
      %713 = vmatpush2.xpose.msra.mxu0 0.0
      %714 = vmatprep.subr.mxu0 0.0
      %715 = vmatpush2.xpose.msra.mxu0 0.0
      %716 = vmatprep.subr.mxu0 0.0
      %717 = vmatpush2.xpose.msra.mxu0 0.0
      %718 = vmatprep.mubr.f32.mxu0 0.0
      %719 = vmatmul.mubr.f32.gmra.mxu0 %v650
      %v720 = vpop.f32.mrf.mxu0
      %v721 = vadd.f32 0.0, %v720
      %v722 = vpop.f32.mrf.mxu0
      %723 = vdwg.mxu0
      %v724 = vmul.f32 %v721, 0.17677669
      %v725 = vsel %vm224, %v724, -1e+09
      %v726 = vsel %vm226, %v725, -inf
      %727 = vmax.xlane.f32.xlu0 %v726
      %v728 = vpop.xlane.xlu0 %727
      %v729 = vsub.f32 %v725, %v728
      %v730 = vmul.f32 %v729, 1.442695
      %v731 = vpow.pop %v730
      %v732 = vsel %vm226, %v731, 0.0
      %733 = vadd.xlane.f32.xlu0 %v732
      %v734 = vpop.xlane.xlu0 %733
      %v735 = vrcp.pop %v734
      %v736 = vmul.f32 %v731, %v735
      %737 = vrot.lane.b32.xlu0 %v144, 32
      %v738 = vpop.permute.xlu0 %737
      %v741 = vsel %vm226, %v736, 0
      %743 = vmatprep.subr.mxu0 0.0
      %744 = vmatpush1.msra.mxu0 0.0
      %745 = vmatprep.subr.mxu0 0.0
      %746 = vmatpush1.msra.mxu0 0.0
      %747 = vmatprep.subr.mxu0 0.0
      %748 = vmatpush1.msra.mxu0 0.0
      %749 = vmatprep.subr.mxu0 0.0
      %750 = vmatpush1.msra.mxu0 0.0
      %751 = vmatprep.subr.mxu0 0.0
      %752 = vmatpush1.msra.mxu0 0.0
      %753 = vmatprep.subr.mxu0 0.0
      %754 = vmatpush1.msra.mxu0 0.0
      %755 = vmatprep.subr.mxu0 0.0
      %756 = vmatpush1.msra.mxu0 0.0
      %757 = vmatprep.subr.mxu0 0.0
      %758 = vmatpush1.msra.mxu0 0.0
      %759 = vmatprep.subr.mxu0 0.0
      %760 = vmatpush1.msra.mxu0 0.0
      %761 = vmatprep.subr.mxu0 0.0
      %762 = vmatpush1.msra.mxu0 0.0
      %763 = vmatprep.subr.mxu0 0.0
      %764 = vmatpush1.msra.mxu0 0.0
      %765 = vmatprep.subr.mxu0 0.0
      %766 = vmatpush1.msra.mxu0 0.0
      %767 = vmatprep.subr.mxu0 0.0
      %768 = vmatpush1.msra.mxu0 0.0
      %769 = vmatprep.subr.mxu0 0.0
      %770 = vmatpush1.msra.mxu0 0.0
      %771 = vmatprep.subr.mxu0 0.0
      %772 = vmatpush1.msra.mxu0 0.0
      %773 = vmatprep.subr.mxu0 0.0
      %774 = vmatpush1.msra.mxu0 %v738
      %775 = vmatprep.subr.mxu0 0.0
      %776 = vmatpush2.msra.mxu0 0.0
      %777 = vmatprep.subr.mxu0 0.0
      %778 = vmatpush2.msra.mxu0 0.0
      %779 = vmatprep.subr.mxu0 0.0
      %780 = vmatpush2.msra.mxu0 0.0
      %781 = vmatprep.subr.mxu0 0.0
      %782 = vmatpush2.msra.mxu0 0.0
      %783 = vmatprep.subr.mxu0 0.0
      %784 = vmatpush2.msra.mxu0 0.0
      %785 = vmatprep.subr.mxu0 0.0
      %786 = vmatpush2.msra.mxu0 0.0
      %787 = vmatprep.subr.mxu0 0.0
      %788 = vmatpush2.msra.mxu0 0.0
      %789 = vmatprep.subr.mxu0 0.0
      %790 = vmatpush2.msra.mxu0 0.0
      %791 = vmatprep.subr.mxu0 0.0
      %792 = vmatpush2.msra.mxu0 0.0
      %793 = vmatprep.subr.mxu0 0.0
      %794 = vmatpush2.msra.mxu0 0.0
      %795 = vmatprep.subr.mxu0 0.0
      %796 = vmatpush2.msra.mxu0 0.0
      %797 = vmatprep.subr.mxu0 0.0
      %798 = vmatpush2.msra.mxu0 0.0
      %799 = vmatprep.subr.mxu0 0.0
      %800 = vmatpush2.msra.mxu0 0.0
      %801 = vmatprep.subr.mxu0 0.0
      %802 = vmatpush2.msra.mxu0 0.0
      %803 = vmatprep.subr.mxu0 0.0
      %804 = vmatpush2.msra.mxu0 0.0
      %805 = vmatprep.subr.mxu0 0.0
      %806 = vmatpush2.msra.mxu0 0.0
      %807 = vmatprep.mubr.f32.mxu0 0.0
      %808 = vmatmul.mubr.f32.gmra.mxu0 %v741
      %v809 = vpop.f32.mrf.mxu0
      %v810 = vadd.f32 0.0, %v809
      %v811 = vpop.f32.mrf.mxu0
      %812 = vdwg.mxu0
      %814 = vrot.lane.b32.xlu0 %v476, 32
      %v815 = vpop.permute.xlu0 %814
      %818 = vrot.lane.b32.xlu0 %v643, 64
      %v819 = vpop.permute.xlu0 %818
      %822 = vrot.lane.b32.xlu0 %v810, 96
      %v823 = vpop.permute.xlu0 %822
      %v825 = vsel %vm146, %v308, %v815
      %vm826 = vcmask 523264
      %v827 = vsel %vm826, %v825, %v819
      %vm828 = vcmask 785408
      %v829 = vsel %vm828, %v827, %v823
      %830 = vst [vmem:[%s141] sm:$0xff] %v829
      %p831 = scmp.lt.s32.totalorder %s13, 1
      %s832 = scalar_select %p831, %s13, 1
      %s833 = smul.addr %s832, 8
      %s834 = scalar_lea.vmem %s2, %s833
      // Predicated region
      $region29: #{decoder_layer_forward.17} parent=27 // pred_check
        %p835 = pneg %p78
      $region30: #{decoder_layer_forward.17} parent=27 // pred_check_branch
        %837 = sbr.rel (%p835) target = $region32
      $region31: #{decoder_layer_forward.17} parent=27 // pred_region
        _
      $region32: #{decoder_layer_forward.17} parent=27 // pred_fallthru
        _
    $region28: #{decoder_layer_forward.17} parent=5 // pred_fallthru
      _
    %p838 = scmp.le.s32.totalorder 2, %s8
    // Predicated region
    $region33: #{decoder_layer_forward.17} parent=5 // pred_check
      %p839 = pneg %p838
    $region34: #{decoder_layer_forward.17} parent=5 // pred_check_branch
      %841 = sbr.rel (%p839) target = $region36
    $region35: #{decoder_layer_forward.17} parent=5 // pred_region
      %s842 = ssub.s32 %s8, 2
      // Predicated region
      $region37: #{decoder_layer_forward.17} parent=35 // pred_check
        %p843 = pneg %p84
      $region38: #{decoder_layer_forward.17} parent=35 // pred_check_branch
        %845 = sbr.rel (%p843) target = $region40
      $region39: #{decoder_layer_forward.17} parent=35 // pred_region
        %p846 = scmp.lt.s32.totalorder %s14, 1
        %s847 = scalar_select %p846, %s14, 1
        %s848 = smul.addr %s847, 8
        %s849 = scalar_lea.vmem %s2, %s848
      $region40: #{decoder_layer_forward.17} parent=35 // pred_fallthru
        _
    $region36: #{decoder_layer_forward.17} parent=5 // pred_fallthru
      _
  $region6: #{decoder_layer_forward.17} parent=0 // loop_footer
    %s12 = sadd.s32 1, %s8
  $region7: #{decoder_layer_forward.17} parent=0 // loop_footer_branch
    %7 = sbr.rel target = $region3
  $region8: #{decoder_layer_forward.17} parent=0 // loop_exit
    _

// kernel: decoder_layer_forward.29
$region0: #{decoder_layer_forward.29}
  #allocation0 [shape = 'u32[]', space=smem, size = 0x4, offset = 0x4, fixed_abs, tag = 'smem constant byte address 0x4 - core index']
  #allocation1 [shape = 'u32[144,128]{1,0:T(1,128)}', space=vmem, size = 0x12000, scoped, tag = 'internal scratch']
  %s0 = inlined_call_operand.vmem [shape: f32[2,8,128], index: 0, kind: input, shape index: {}]
  %s1 = inlined_call_operand.vmem [shape: f32[2,8,256], index: 1, kind: input, shape index: {}]
  %s2 = inlined_call_operand.vmem [shape: s32[2,1,8], index: 2, kind: input, shape index: {}]
  %s3 = inlined_call_operand.vmem [shape: f32[2,8,128], index: 3, kind: output, shape index: {}]
  %s4 = sld [smem:[#allocation0]]
  $region45: #{decoder_layer_forward.29} parent=0
    _
  %s6 = ssub.s32 1, %s4
  %s7 = scalar_select 0, %s6, %s4
  loop: start=0, step=1, limit=4
  $region2: #{decoder_layer_forward.29} parent=0 // loop_pre_header
    _
  $region3: #{decoder_layer_forward.29} parent=0 // loop_header
    %s9 = sphi 0, %s13
    %p10 = scmp.ge.s32.totalorder %s9, 4
    %s19 = sphi 0, %s21
    %s22 = sphi 0, %s19
    %s23 = sphi 0, %s22
    %s39 = sphi 0, %s23
    %s45 = sphi 0, %s47
    %s48 = sphi 0, %s45
    %s49 = sphi 0, %s48
    %s65 = sphi 0, %s49
    %s71 = sphi 0, %s73
    %s74 = sphi 0, %s71
    %s75 = sphi 0, %s74
    %s91 = sphi 0, %s75
    %s97 = sphi 0, %s99
    %s100 = sphi 0, %s97
    %s101 = sphi 0, %s100
    %s117 = sphi 0, %s101
  $region4: #{decoder_layer_forward.29} parent=0 // loop_header_branch
    %12 = sbr.rel (%p10) target = $region8
  $region5: #{decoder_layer_forward.29} parent=0 // loop_body
    %s14 = ssub.s32 %s9, 1
    %s15 = ssub.s32 %s9, 2
    %s16 = sadd.s32 %s9, 1
    %s17 = ssub.s32 %s9, %s16
    %p18 = scmp.eq.s32.totalorder %s17, 0
    %s20 = sadd.s32 %s19, 1
    %s21 = scalar_select %p18, %s19, %s20
    %p24 = pneg %p18
    %p25 = scmp.eq.s32.totalorder %s9, 1
    %p26 = por %p24, %p25
    %p27 = scmp.ne.s32.totalorder %s19, %s22
    %p28 = scmp.eq.s32.totalorder %s9, 0
    %p29 = por %p27, %p28
    %p30 = scmp.ne.s32.totalorder %s19, %s22
    %p31 = scmp.eq.s32.totalorder %s14, 1
    %p32 = por %p30, %p31
    %p33 = scmp.ne.s32.totalorder %s22, %s23
    %p34 = scmp.eq.s32.totalorder %s14, 0
    %p35 = por %p33, %p34
    %p36 = scmp.ne.s32.totalorder %s22, %s23
    %p37 = scmp.eq.s32.totalorder %s15, 1
    %p38 = por %p36, %p37
    %p40 = scmp.ne.s32.totalorder %s23, %s39
    %p41 = scmp.eq.s32.totalorder %s15, 0
    %p42 = por %p40, %p41
    %s43 = ssub.s32 %s9, %s16
    %p44 = scmp.eq.s32.totalorder %s43, 0
    %s46 = sadd.s32 %s45, 1
    %s47 = scalar_select %p44, %s45, %s46
    %p50 = pneg %p44
    %p51 = scmp.eq.s32.totalorder %s9, 1
    %p52 = por %p50, %p51
    %p53 = scmp.ne.s32.totalorder %s45, %s48
    %p54 = scmp.eq.s32.totalorder %s9, 0
    %p55 = por %p53, %p54
    %p56 = scmp.ne.s32.totalorder %s45, %s48
    %p57 = scmp.eq.s32.totalorder %s14, 1
    %p58 = por %p56, %p57
    %p59 = scmp.ne.s32.totalorder %s48, %s49
    %p60 = scmp.eq.s32.totalorder %s14, 0
    %p61 = por %p59, %p60
    %p62 = scmp.ne.s32.totalorder %s48, %s49
    %p63 = scmp.eq.s32.totalorder %s15, 1
    %p64 = por %p62, %p63
    %p66 = scmp.ne.s32.totalorder %s49, %s65
    %p67 = scmp.eq.s32.totalorder %s15, 0
    %p68 = por %p66, %p67
    %s69 = ssub.s32 %s9, %s16
    %p70 = scmp.eq.s32.totalorder %s69, 0
    %s72 = sadd.s32 %s71, 1
    %s73 = scalar_select %p70, %s71, %s72
    %p76 = pneg %p70
    %p77 = scmp.eq.s32.totalorder %s9, 1
    %p78 = por %p76, %p77
    %p79 = scmp.ne.s32.totalorder %s71, %s74
    %p80 = scmp.eq.s32.totalorder %s9, 0
    %p81 = por %p79, %p80
    %p82 = scmp.ne.s32.totalorder %s71, %s74
    %p83 = scmp.eq.s32.totalorder %s14, 1
    %p84 = por %p82, %p83
    %p85 = scmp.ne.s32.totalorder %s74, %s75
    %p86 = scmp.eq.s32.totalorder %s14, 0
    %p87 = por %p85, %p86
    %p88 = scmp.ne.s32.totalorder %s74, %s75
    %p89 = scmp.eq.s32.totalorder %s15, 1
    %p90 = por %p88, %p89
    %p92 = scmp.ne.s32.totalorder %s75, %s91
    %p93 = scmp.eq.s32.totalorder %s15, 0
    %p94 = por %p92, %p93
    %s95 = ssub.s32 %s9, %s16
    %p96 = scmp.eq.s32.totalorder %s95, 0
    %s98 = sadd.s32 %s97, 1
    %s99 = scalar_select %p96, %s97, %s98
    %p102 = pneg %p96
    %p103 = scmp.eq.s32.totalorder %s9, 1
    %p104 = por %p102, %p103
    %p105 = scmp.ne.s32.totalorder %s97, %s100
    %p106 = scmp.eq.s32.totalorder %s9, 0
    %p107 = por %p105, %p106
    %p108 = scmp.ne.s32.totalorder %s97, %s100
    %p109 = scmp.eq.s32.totalorder %s14, 1
    %p110 = por %p108, %p109
    %p111 = scmp.ne.s32.totalorder %s100, %s101
    %p112 = scmp.eq.s32.totalorder %s14, 0
    %p113 = por %p111, %p112
    %p114 = scmp.ne.s32.totalorder %s100, %s101
    %p115 = scmp.eq.s32.totalorder %s15, 1
    %p116 = por %p114, %p115
    %p118 = scmp.ne.s32.totalorder %s101, %s117
    %p119 = scmp.eq.s32.totalorder %s15, 0
    %p120 = por %p118, %p119
    %p121 = scmp.le.s32.totalorder 1, %s9
    %p122 = scmp.lt.s32.totalorder %s9, 3
    %p123 = pnand %p121, %p122
    %p124 = pneg %p123
    // Predicated region
    $region9: #{decoder_layer_forward.29} parent=5 // pred_check
      _
    $region10: #{decoder_layer_forward.29} parent=5 // pred_check_branch
      %126 = sbr.rel (%p123) target = $region12
    $region11: #{decoder_layer_forward.29} parent=5 // pred_region
      %s127 = ssub.s32 %s9, 1
    $region12: #{decoder_layer_forward.29} parent=5 // pred_fallthru
      _
    %p128 = scmp.lt.s32.totalorder %s9, 2
    // Predicated region
    $region13: #{decoder_layer_forward.29} parent=5 // pred_check
      %p129 = pneg %p128
    $region14: #{decoder_layer_forward.29} parent=5 // pred_check_branch
      %131 = sbr.rel (%p129) target = $region16
    $region15: #{decoder_layer_forward.29} parent=5 // pred_region
      // Predicated region
      $region17: #{decoder_layer_forward.29} parent=15 // pred_check
        %p132 = pneg %p29
      $region18: #{decoder_layer_forward.29} parent=15 // pred_check_branch
        %134 = sbr.rel (%p132) target = $region20
      $region19: #{decoder_layer_forward.29} parent=15 // pred_region
        %p135 = scmp.lt.s32.totalorder %s9, 1
        %s136 = scalar_select %p135, %s9, 1
        %s137 = smul.addr %s136, 8
        %s138 = scalar_lea.vmem %s0, %s137
      $region20: #{decoder_layer_forward.29} parent=15 // pred_fallthru
        _
      // Predicated region
      $region21: #{decoder_layer_forward.29} parent=15 // pred_check
        %p139 = pneg %p55
      $region22: #{decoder_layer_forward.29} parent=15 // pred_check_branch
        %141 = sbr.rel (%p139) target = $region24
      $region23: #{decoder_layer_forward.29} parent=15 // pred_region
        %p142 = scmp.lt.s32.totalorder %s9, 1
        %s143 = scalar_select %p142, %s9, 1
        %s144 = smul.addr %s143, 2
        %s145 = smul.addr %s144, 8
        %s146 = scalar_lea.vmem %s1, %s145
      $region24: #{decoder_layer_forward.29} parent=15 // pred_fallthru
        _
      // Predicated region
      $region25: #{decoder_layer_forward.29} parent=15 // pred_check
        %p147 = pneg %p81
      $region26: #{decoder_layer_forward.29} parent=15 // pred_check_branch
        %149 = sbr.rel (%p147) target = $region28
      $region27: #{decoder_layer_forward.29} parent=15 // pred_region
        %p150 = scmp.lt.s32.totalorder %s9, 1
        %s151 = scalar_select %p150, %s9, 1
        %s152 = scalar_lea.vmem %s2, %s151
      $region28: #{decoder_layer_forward.29} parent=15 // pred_fallthru
        _
    $region16: #{decoder_layer_forward.29} parent=5 // pred_fallthru
      _
    %p153 = scmp.le.s32.totalorder 1, %s9
    %p154 = scmp.lt.s32.totalorder %s9, 3
    %p155 = pnand %p153, %p154
    %p156 = pneg %p155
    // Predicated region
    $region29: #{decoder_layer_forward.29} parent=5 // pred_check
      _
    $region30: #{decoder_layer_forward.29} parent=5 // pred_check_branch
      %158 = sbr.rel (%p155) target = $region32
    $region31: #{decoder_layer_forward.29} parent=5 // pred_region
      %s159 = ssub.s32 %s9, 1
      %p160 = scmp.lt.s32.totalorder %s14, 1
      %s161 = scalar_select %p160, %s14, 1
      %s162 = smul.addr %s161, 8
      %s163 = scalar_lea.vmem %s0, %s162
      %p164 = pneg %p35
      %p165 = pneg %p32
      %p166 = scmp.lt.s32.totalorder %s14, 1
      %s167 = scalar_select %p166, %s14, 1
      %s168 = smul.addr %s167, 2
      %s169 = smul.addr %s168, 8
      %s170 = scalar_lea.vmem %s1, %s169
      %p171 = pneg %p61
      %p172 = pneg %p58
      %p173 = scmp.lt.s32.totalorder %s14, 1
      %s174 = scalar_select %p173, %s14, 1
      %s175 = scalar_lea.vmem %s2, %s174
      %p176 = pneg %p87
      %p177 = pneg %p84
      %p178 = pneg %p113
      %p179 = pneg %p110
      %p180 = scmp.lt.s32.totalorder %s14, 1
      %s181 = scalar_select %p180, %s14, 1
      %s182 = smul.addr %s181, 8
      %s183 = scalar_lea.vmem %s3, %s182
      %p184 = scmp.lt.s32.totalorder %s14, 1
      %s185 = scalar_select %p184, %s14, 1
      %s186 = smul.addr %s185, 8
      %s187 = scalar_lea.vmem %s0, %s186
      %p188 = scmp.lt.s32.totalorder %s14, 1
      %s189 = scalar_select %p188, %s14, 1
      %s190 = smul.addr %s189, 2
      %s191 = smul.addr %s190, 8
      %s192 = scalar_lea.vmem %s1, %s191
      %p193 = scmp.lt.s32.totalorder %s14, 1
      %s194 = scalar_select %p193, %s14, 1
      %s195 = scalar_lea.vmem %s2, %s194
      %p196 = scmp.lt.s32.totalorder %s14, 1
      %s197 = scalar_select %p196, %s14, 1
      %s198 = smul.addr %s197, 8
      %s199 = scalar_lea.vmem %s3, %s198
      %v200 = vld [vmem:[%s187] sm:$0xff]
      %v201 = vld [vmem:[%s192] sm:$0xff]
      %v202 = vld [vmem:[%s192 + $0x8] sm:$0xff]
      %v203 = vld [vmem:[%s195] sm:$0x1]
      %vm204 = vcmask 261120
      %v206 = vsel %vm204, %v200, 0
      %v209 = vsel %vm204, %v201, 0
      %211 = vmatprep.subr.mxu0 0.0
      %212 = vmatpush1.xpose.msra.mxu0 0.0
      %213 = vmatprep.subr.mxu0 0.0
      %214 = vmatpush1.xpose.msra.mxu0 0.0
      %215 = vmatprep.subr.mxu0 0.0
      %216 = vmatpush1.xpose.msra.mxu0 0.0
      %217 = vmatprep.subr.mxu0 0.0
      %218 = vmatpush1.xpose.msra.mxu0 0.0
      %219 = vmatprep.subr.mxu0 0.0
      %220 = vmatpush1.xpose.msra.mxu0 0.0
      %221 = vmatprep.subr.mxu0 0.0
      %222 = vmatpush1.xpose.msra.mxu0 0.0
      %223 = vmatprep.subr.mxu0 0.0
      %224 = vmatpush1.xpose.msra.mxu0 0.0
      %225 = vmatprep.subr.mxu0 0.0
      %226 = vmatpush1.xpose.msra.mxu0 0.0
      %227 = vmatprep.subr.mxu0 0.0
      %228 = vmatpush1.xpose.msra.mxu0 0.0
      %229 = vmatprep.subr.mxu0 0.0
      %230 = vmatpush1.xpose.msra.mxu0 0.0
      %231 = vmatprep.subr.mxu0 0.0
      %232 = vmatpush1.xpose.msra.mxu0 0.0
      %233 = vmatprep.subr.mxu0 0.0
      %234 = vmatpush1.xpose.msra.mxu0 0.0
      %235 = vmatprep.subr.mxu0 0.0
      %236 = vmatpush1.xpose.msra.mxu0 0.0
      %237 = vmatprep.subr.mxu0 0.0
      %238 = vmatpush1.xpose.msra.mxu0 0.0
      %239 = vmatprep.subr.mxu0 0.0
      %240 = vmatpush1.xpose.msra.mxu0 0.0
      %241 = vmatprep.subr.mxu0 0.0
      %242 = vmatpush1.xpose.msra.mxu0 %v209
      %243 = vmatprep.subr.mxu0 0.0
      %244 = vmatpush2.xpose.msra.mxu0 0.0
      %245 = vmatprep.subr.mxu0 0.0
      %246 = vmatpush2.xpose.msra.mxu0 0.0
      %247 = vmatprep.subr.mxu0 0.0
      %248 = vmatpush2.xpose.msra.mxu0 0.0
      %249 = vmatprep.subr.mxu0 0.0
      %250 = vmatpush2.xpose.msra.mxu0 0.0
      %251 = vmatprep.subr.mxu0 0.0
      %252 = vmatpush2.xpose.msra.mxu0 0.0
      %253 = vmatprep.subr.mxu0 0.0
      %254 = vmatpush2.xpose.msra.mxu0 0.0
      %255 = vmatprep.subr.mxu0 0.0
      %256 = vmatpush2.xpose.msra.mxu0 0.0
      %257 = vmatprep.subr.mxu0 0.0
      %258 = vmatpush2.xpose.msra.mxu0 0.0
      %259 = vmatprep.subr.mxu0 0.0
      %260 = vmatpush2.xpose.msra.mxu0 0.0
      %261 = vmatprep.subr.mxu0 0.0
      %262 = vmatpush2.xpose.msra.mxu0 0.0
      %263 = vmatprep.subr.mxu0 0.0
      %264 = vmatpush2.xpose.msra.mxu0 0.0
      %265 = vmatprep.subr.mxu0 0.0
      %266 = vmatpush2.xpose.msra.mxu0 0.0
      %267 = vmatprep.subr.mxu0 0.0
      %268 = vmatpush2.xpose.msra.mxu0 0.0
      %269 = vmatprep.subr.mxu0 0.0
      %270 = vmatpush2.xpose.msra.mxu0 0.0
      %271 = vmatprep.subr.mxu0 0.0
      %272 = vmatpush2.xpose.msra.mxu0 0.0
      %273 = vmatprep.subr.mxu0 0.0
      %274 = vmatpush2.xpose.msra.mxu0 0.0
      %275 = vmatprep.mubr.f32.mxu0 0.0
      %276 = vmatmul.mubr.f32.gmra.mxu0 %v206
      %v277 = vpop.f32.mrf.mxu0
      %v278 = vadd.f32 0.0, %v277
      %v279 = vpop.f32.mrf.mxu0
      %280 = vdwg.mxu0
      %v281 = vmul.f32 %v278, 0.17677669
      %vm282 = vcmp.ne.s32.totalorder %v203, 0
      %v283 = vsel %vm282, 1, 0
      %v284 = vlaneseq
      %v285 = vshrl.u32 %v284, 7
      %v286 = vsub.s32 0, %v285
      %v287 = vrot.slane %v283, %v286
      %vm288 = vcmp.eq.s32.totalorder %v287, 1
      %v289 = vsel %vm288, %v281, -1e+09
      %vm290 = vcmask 64512
      %v291 = vsel %vm290, %v289, -inf
      %292 = vmax.xlane.f32.xlu0 %v291
      %v293 = vpop.xlane.xlu0 %292
      %v294 = vsub.f32 %v289, %v293
      %v295 = vmul.f32 %v294, 1.442695
      %v296 = vpow.pop %v295
      %v297 = vsel %vm290, %v296, 0.0
      %298 = vadd.xlane.f32.xlu0 %v297
      %v299 = vpop.xlane.xlu0 %298
      %v300 = vrcp.pop %v299
      %v301 = vmul.f32 %v296, %v300
      %v303 = vsel %vm290, %v301, 0
      %305 = vmatprep.subr.mxu0 0.0
      %306 = vmatpush1.msra.mxu0 0.0
      %307 = vmatprep.subr.mxu0 0.0
      %308 = vmatpush1.msra.mxu0 0.0
      %309 = vmatprep.subr.mxu0 0.0
      %310 = vmatpush1.msra.mxu0 0.0
      %311 = vmatprep.subr.mxu0 0.0
      %312 = vmatpush1.msra.mxu0 0.0
      %313 = vmatprep.subr.mxu0 0.0
      %314 = vmatpush1.msra.mxu0 0.0
      %315 = vmatprep.subr.mxu0 0.0
      %316 = vmatpush1.msra.mxu0 0.0
      %317 = vmatprep.subr.mxu0 0.0
      %318 = vmatpush1.msra.mxu0 0.0
      %319 = vmatprep.subr.mxu0 0.0
      %320 = vmatpush1.msra.mxu0 0.0
      %321 = vmatprep.subr.mxu0 0.0
      %322 = vmatpush1.msra.mxu0 0.0
      %323 = vmatprep.subr.mxu0 0.0
      %324 = vmatpush1.msra.mxu0 0.0
      %325 = vmatprep.subr.mxu0 0.0
      %326 = vmatpush1.msra.mxu0 0.0
      %327 = vmatprep.subr.mxu0 0.0
      %328 = vmatpush1.msra.mxu0 0.0
      %329 = vmatprep.subr.mxu0 0.0
      %330 = vmatpush1.msra.mxu0 0.0
      %331 = vmatprep.subr.mxu0 0.0
      %332 = vmatpush1.msra.mxu0 0.0
      %333 = vmatprep.subr.mxu0 0.0
      %334 = vmatpush1.msra.mxu0 0.0
      %335 = vmatprep.subr.mxu0 0.0
      %336 = vmatpush1.msra.mxu0 %v202
      %337 = vmatprep.subr.mxu0 0.0
      %338 = vmatpush2.msra.mxu0 0.0
      %339 = vmatprep.subr.mxu0 0.0
      %340 = vmatpush2.msra.mxu0 0.0
      %341 = vmatprep.subr.mxu0 0.0
      %342 = vmatpush2.msra.mxu0 0.0
      %343 = vmatprep.subr.mxu0 0.0
      %344 = vmatpush2.msra.mxu0 0.0
      %345 = vmatprep.subr.mxu0 0.0
      %346 = vmatpush2.msra.mxu0 0.0
      %347 = vmatprep.subr.mxu0 0.0
      %348 = vmatpush2.msra.mxu0 0.0
      %349 = vmatprep.subr.mxu0 0.0
      %350 = vmatpush2.msra.mxu0 0.0
      %351 = vmatprep.subr.mxu0 0.0
      %352 = vmatpush2.msra.mxu0 0.0
      %353 = vmatprep.subr.mxu0 0.0
      %354 = vmatpush2.msra.mxu0 0.0
      %355 = vmatprep.subr.mxu0 0.0
      %356 = vmatpush2.msra.mxu0 0.0
      %357 = vmatprep.subr.mxu0 0.0
      %358 = vmatpush2.msra.mxu0 0.0
      %359 = vmatprep.subr.mxu0 0.0
      %360 = vmatpush2.msra.mxu0 0.0
      %361 = vmatprep.subr.mxu0 0.0
      %362 = vmatpush2.msra.mxu0 0.0
      %363 = vmatprep.subr.mxu0 0.0
      %364 = vmatpush2.msra.mxu0 0.0
      %365 = vmatprep.subr.mxu0 0.0
      %366 = vmatpush2.msra.mxu0 0.0
      %367 = vmatprep.subr.mxu0 0.0
      %368 = vmatpush2.msra.mxu0 0.0
      %369 = vmatprep.mubr.f32.mxu0 0.0
      %370 = vmatmul.mubr.f32.gmra.mxu0 %v303
      %v371 = vpop.f32.mrf.mxu0
      %v372 = vadd.f32 0.0, %v371
      %v373 = vpop.f32.mrf.mxu0
      %374 = vdwg.mxu0
      %375 = vrot.lane.b32.xlu0 %v200, 96
      %v376 = vpop.permute.xlu0 %375
      %377 = vrot.lane.b32.xlu0 %v201, 96
      %v378 = vpop.permute.xlu0 %377
      %v379 = vsel %vm204, %v376, 0
      %v381 = vsel %vm204, %v378, 0
      %383 = vmatprep.subr.mxu0 0.0
      %384 = vmatpush1.xpose.msra.mxu0 0.0
      %385 = vmatprep.subr.mxu0 0.0
      %386 = vmatpush1.xpose.msra.mxu0 0.0
      %387 = vmatprep.subr.mxu0 0.0
      %388 = vmatpush1.xpose.msra.mxu0 0.0
      %389 = vmatprep.subr.mxu0 0.0
      %390 = vmatpush1.xpose.msra.mxu0 0.0
      %391 = vmatprep.subr.mxu0 0.0
      %392 = vmatpush1.xpose.msra.mxu0 0.0
      %393 = vmatprep.subr.mxu0 0.0
      %394 = vmatpush1.xpose.msra.mxu0 0.0
      %395 = vmatprep.subr.mxu0 0.0
      %396 = vmatpush1.xpose.msra.mxu0 0.0
      %397 = vmatprep.subr.mxu0 0.0
      %398 = vmatpush1.xpose.msra.mxu0 0.0
      %399 = vmatprep.subr.mxu0 0.0
      %400 = vmatpush1.xpose.msra.mxu0 0.0
      %401 = vmatprep.subr.mxu0 0.0
      %402 = vmatpush1.xpose.msra.mxu0 0.0
      %403 = vmatprep.subr.mxu0 0.0
      %404 = vmatpush1.xpose.msra.mxu0 0.0
      %405 = vmatprep.subr.mxu0 0.0
      %406 = vmatpush1.xpose.msra.mxu0 0.0
      %407 = vmatprep.subr.mxu0 0.0
      %408 = vmatpush1.xpose.msra.mxu0 0.0
      %409 = vmatprep.subr.mxu0 0.0
      %410 = vmatpush1.xpose.msra.mxu0 0.0
      %411 = vmatprep.subr.mxu0 0.0
      %412 = vmatpush1.xpose.msra.mxu0 0.0
      %413 = vmatprep.subr.mxu0 0.0
      %414 = vmatpush1.xpose.msra.mxu0 %v381
      %415 = vmatprep.subr.mxu0 0.0
      %416 = vmatpush2.xpose.msra.mxu0 0.0
      %417 = vmatprep.subr.mxu0 0.0
      %418 = vmatpush2.xpose.msra.mxu0 0.0
      %419 = vmatprep.subr.mxu0 0.0
      %420 = vmatpush2.xpose.msra.mxu0 0.0
      %421 = vmatprep.subr.mxu0 0.0
      %422 = vmatpush2.xpose.msra.mxu0 0.0
      %423 = vmatprep.subr.mxu0 0.0
      %424 = vmatpush2.xpose.msra.mxu0 0.0
      %425 = vmatprep.subr.mxu0 0.0
      %426 = vmatpush2.xpose.msra.mxu0 0.0
      %427 = vmatprep.subr.mxu0 0.0
      %428 = vmatpush2.xpose.msra.mxu0 0.0
      %429 = vmatprep.subr.mxu0 0.0
      %430 = vmatpush2.xpose.msra.mxu0 0.0
      %431 = vmatprep.subr.mxu0 0.0
      %432 = vmatpush2.xpose.msra.mxu0 0.0
      %433 = vmatprep.subr.mxu0 0.0
      %434 = vmatpush2.xpose.msra.mxu0 0.0
      %435 = vmatprep.subr.mxu0 0.0
      %436 = vmatpush2.xpose.msra.mxu0 0.0
      %437 = vmatprep.subr.mxu0 0.0
      %438 = vmatpush2.xpose.msra.mxu0 0.0
      %439 = vmatprep.subr.mxu0 0.0
      %440 = vmatpush2.xpose.msra.mxu0 0.0
      %441 = vmatprep.subr.mxu0 0.0
      %442 = vmatpush2.xpose.msra.mxu0 0.0
      %443 = vmatprep.subr.mxu0 0.0
      %444 = vmatpush2.xpose.msra.mxu0 0.0
      %445 = vmatprep.subr.mxu0 0.0
      %446 = vmatpush2.xpose.msra.mxu0 0.0
      %447 = vmatprep.mubr.f32.mxu0 0.0
      %448 = vmatmul.mubr.f32.gmra.mxu0 %v379
      %v449 = vpop.f32.mrf.mxu0
      %v450 = vadd.f32 0.0, %v449
      %v451 = vpop.f32.mrf.mxu0
      %452 = vdwg.mxu0
      %v453 = vmul.f32 %v450, 0.17677669
      %v454 = vsel %vm288, %v453, -1e+09
      %v455 = vsel %vm290, %v454, -inf
      %456 = vmax.xlane.f32.xlu0 %v455
      %v457 = vpop.xlane.xlu0 %456
      %v458 = vsub.f32 %v454, %v457
      %v459 = vmul.f32 %v458, 1.442695
      %v460 = vpow.pop %v459
      %v461 = vsel %vm290, %v460, 0.0
      %462 = vadd.xlane.f32.xlu0 %v461
      %v463 = vpop.xlane.xlu0 %462
      %v464 = vrcp.pop %v463
      %v465 = vmul.f32 %v460, %v464
      %467 = vrot.lane.b32.xlu0 %v202, 96
      %v468 = vpop.permute.xlu0 %467
      %v471 = vsel %vm290, %v465, 0
      %473 = vmatprep.subr.mxu0 0.0
      %474 = vmatpush1.msra.mxu0 0.0
      %475 = vmatprep.subr.mxu0 0.0
      %476 = vmatpush1.msra.mxu0 0.0
      %477 = vmatprep.subr.mxu0 0.0
      %478 = vmatpush1.msra.mxu0 0.0
      %479 = vmatprep.subr.mxu0 0.0
      %480 = vmatpush1.msra.mxu0 0.0
      %481 = vmatprep.subr.mxu0 0.0
      %482 = vmatpush1.msra.mxu0 0.0
      %483 = vmatprep.subr.mxu0 0.0
      %484 = vmatpush1.msra.mxu0 0.0
      %485 = vmatprep.subr.mxu0 0.0
      %486 = vmatpush1.msra.mxu0 0.0
      %487 = vmatprep.subr.mxu0 0.0
      %488 = vmatpush1.msra.mxu0 0.0
      %489 = vmatprep.subr.mxu0 0.0
      %490 = vmatpush1.msra.mxu0 0.0
      %491 = vmatprep.subr.mxu0 0.0
      %492 = vmatpush1.msra.mxu0 0.0
      %493 = vmatprep.subr.mxu0 0.0
      %494 = vmatpush1.msra.mxu0 0.0
      %495 = vmatprep.subr.mxu0 0.0
      %496 = vmatpush1.msra.mxu0 0.0
      %497 = vmatprep.subr.mxu0 0.0
      %498 = vmatpush1.msra.mxu0 0.0
      %499 = vmatprep.subr.mxu0 0.0
      %500 = vmatpush1.msra.mxu0 0.0
      %501 = vmatprep.subr.mxu0 0.0
      %502 = vmatpush1.msra.mxu0 0.0
      %503 = vmatprep.subr.mxu0 0.0
      %504 = vmatpush1.msra.mxu0 %v468
      %505 = vmatprep.subr.mxu0 0.0
      %506 = vmatpush2.msra.mxu0 0.0
      %507 = vmatprep.subr.mxu0 0.0
      %508 = vmatpush2.msra.mxu0 0.0
      %509 = vmatprep.subr.mxu0 0.0
      %510 = vmatpush2.msra.mxu0 0.0
      %511 = vmatprep.subr.mxu0 0.0
      %512 = vmatpush2.msra.mxu0 0.0
      %513 = vmatprep.subr.mxu0 0.0
      %514 = vmatpush2.msra.mxu0 0.0
      %515 = vmatprep.subr.mxu0 0.0
      %516 = vmatpush2.msra.mxu0 0.0
      %517 = vmatprep.subr.mxu0 0.0
      %518 = vmatpush2.msra.mxu0 0.0
      %519 = vmatprep.subr.mxu0 0.0
      %520 = vmatpush2.msra.mxu0 0.0
      %521 = vmatprep.subr.mxu0 0.0
      %522 = vmatpush2.msra.mxu0 0.0
      %523 = vmatprep.subr.mxu0 0.0
      %524 = vmatpush2.msra.mxu0 0.0
      %525 = vmatprep.subr.mxu0 0.0
      %526 = vmatpush2.msra.mxu0 0.0
      %527 = vmatprep.subr.mxu0 0.0
      %528 = vmatpush2.msra.mxu0 0.0
      %529 = vmatprep.subr.mxu0 0.0
      %530 = vmatpush2.msra.mxu0 0.0
      %531 = vmatprep.subr.mxu0 0.0
      %532 = vmatpush2.msra.mxu0 0.0
      %533 = vmatprep.subr.mxu0 0.0
      %534 = vmatpush2.msra.mxu0 0.0
      %535 = vmatprep.subr.mxu0 0.0
      %536 = vmatpush2.msra.mxu0 0.0
      %537 = vmatprep.mubr.f32.mxu0 0.0
      %538 = vmatmul.mubr.f32.gmra.mxu0 %v471
      %v539 = vpop.f32.mrf.mxu0
      %v540 = vadd.f32 0.0, %v539
      %v541 = vpop.f32.mrf.mxu0
      %542 = vdwg.mxu0
      %543 = vrot.lane.b32.xlu0 %v200, 64
      %v544 = vpop.permute.xlu0 %543
      %545 = vrot.lane.b32.xlu0 %v201, 64
      %v546 = vpop.permute.xlu0 %545
      %v547 = vsel %vm204, %v544, 0
      %v549 = vsel %vm204, %v546, 0
      %551 = vmatprep.subr.mxu0 0.0
      %552 = vmatpush1.xpose.msra.mxu0 0.0
      %553 = vmatprep.subr.mxu0 0.0
      %554 = vmatpush1.xpose.msra.mxu0 0.0
      %555 = vmatprep.subr.mxu0 0.0
      %556 = vmatpush1.xpose.msra.mxu0 0.0
      %557 = vmatprep.subr.mxu0 0.0
      %558 = vmatpush1.xpose.msra.mxu0 0.0
      %559 = vmatprep.subr.mxu0 0.0
      %560 = vmatpush1.xpose.msra.mxu0 0.0
      %561 = vmatprep.subr.mxu0 0.0
      %562 = vmatpush1.xpose.msra.mxu0 0.0
      %563 = vmatprep.subr.mxu0 0.0
      %564 = vmatpush1.xpose.msra.mxu0 0.0
      %565 = vmatprep.subr.mxu0 0.0
      %566 = vmatpush1.xpose.msra.mxu0 0.0
      %567 = vmatprep.subr.mxu0 0.0
      %568 = vmatpush1.xpose.msra.mxu0 0.0
      %569 = vmatprep.subr.mxu0 0.0
      %570 = vmatpush1.xpose.msra.mxu0 0.0
      %571 = vmatprep.subr.mxu0 0.0
      %572 = vmatpush1.xpose.msra.mxu0 0.0
      %573 = vmatprep.subr.mxu0 0.0
      %574 = vmatpush1.xpose.msra.mxu0 0.0
      %575 = vmatprep.subr.mxu0 0.0
      %576 = vmatpush1.xpose.msra.mxu0 0.0
      %577 = vmatprep.subr.mxu0 0.0
      %578 = vmatpush1.xpose.msra.mxu0 0.0
      %579 = vmatprep.subr.mxu0 0.0
      %580 = vmatpush1.xpose.msra.mxu0 0.0
      %581 = vmatprep.subr.mxu0 0.0
      %582 = vmatpush1.xpose.msra.mxu0 %v549
      %583 = vmatprep.subr.mxu0 0.0
      %584 = vmatpush2.xpose.msra.mxu0 0.0
      %585 = vmatprep.subr.mxu0 0.0
      %586 = vmatpush2.xpose.msra.mxu0 0.0
      %587 = vmatprep.subr.mxu0 0.0
      %588 = vmatpush2.xpose.msra.mxu0 0.0
      %589 = vmatprep.subr.mxu0 0.0
      %590 = vmatpush2.xpose.msra.mxu0 0.0
      %591 = vmatprep.subr.mxu0 0.0
      %592 = vmatpush2.xpose.msra.mxu0 0.0
      %593 = vmatprep.subr.mxu0 0.0
      %594 = vmatpush2.xpose.msra.mxu0 0.0
      %595 = vmatprep.subr.mxu0 0.0
      %596 = vmatpush2.xpose.msra.mxu0 0.0
      %597 = vmatprep.subr.mxu0 0.0
      %598 = vmatpush2.xpose.msra.mxu0 0.0
      %599 = vmatprep.subr.mxu0 0.0
      %600 = vmatpush2.xpose.msra.mxu0 0.0
      %601 = vmatprep.subr.mxu0 0.0
      %602 = vmatpush2.xpose.msra.mxu0 0.0
      %603 = vmatprep.subr.mxu0 0.0
      %604 = vmatpush2.xpose.msra.mxu0 0.0
      %605 = vmatprep.subr.mxu0 0.0
      %606 = vmatpush2.xpose.msra.mxu0 0.0
      %607 = vmatprep.subr.mxu0 0.0
      %608 = vmatpush2.xpose.msra.mxu0 0.0
      %609 = vmatprep.subr.mxu0 0.0
      %610 = vmatpush2.xpose.msra.mxu0 0.0
      %611 = vmatprep.subr.mxu0 0.0
      %612 = vmatpush2.xpose.msra.mxu0 0.0
      %613 = vmatprep.subr.mxu0 0.0
      %614 = vmatpush2.xpose.msra.mxu0 0.0
      %615 = vmatprep.mubr.f32.mxu0 0.0
      %616 = vmatmul.mubr.f32.gmra.mxu0 %v547
      %v617 = vpop.f32.mrf.mxu0
      %v618 = vadd.f32 0.0, %v617
      %v619 = vpop.f32.mrf.mxu0
      %620 = vdwg.mxu0
      %v621 = vmul.f32 %v618, 0.17677669
      %v622 = vsel %vm288, %v621, -1e+09
      %v623 = vsel %vm290, %v622, -inf
      %624 = vmax.xlane.f32.xlu0 %v623
      %v625 = vpop.xlane.xlu0 %624
      %v626 = vsub.f32 %v622, %v625
      %v627 = vmul.f32 %v626, 1.442695
      %v628 = vpow.pop %v627
      %v629 = vsel %vm290, %v628, 0.0
      %630 = vadd.xlane.f32.xlu0 %v629
      %v631 = vpop.xlane.xlu0 %630
      %v632 = vrcp.pop %v631
      %v633 = vmul.f32 %v628, %v632
      %634 = vrot.lane.b32.xlu0 %v202, 64
      %v635 = vpop.permute.xlu0 %634
      %v638 = vsel %vm290, %v633, 0
      %640 = vmatprep.subr.mxu0 0.0
      %641 = vmatpush1.msra.mxu0 0.0
      %642 = vmatprep.subr.mxu0 0.0
      %643 = vmatpush1.msra.mxu0 0.0
      %644 = vmatprep.subr.mxu0 0.0
      %645 = vmatpush1.msra.mxu0 0.0
      %646 = vmatprep.subr.mxu0 0.0
      %647 = vmatpush1.msra.mxu0 0.0
      %648 = vmatprep.subr.mxu0 0.0
      %649 = vmatpush1.msra.mxu0 0.0
      %650 = vmatprep.subr.mxu0 0.0
      %651 = vmatpush1.msra.mxu0 0.0
      %652 = vmatprep.subr.mxu0 0.0
      %653 = vmatpush1.msra.mxu0 0.0
      %654 = vmatprep.subr.mxu0 0.0
      %655 = vmatpush1.msra.mxu0 0.0
      %656 = vmatprep.subr.mxu0 0.0
      %657 = vmatpush1.msra.mxu0 0.0
      %658 = vmatprep.subr.mxu0 0.0
      %659 = vmatpush1.msra.mxu0 0.0
      %660 = vmatprep.subr.mxu0 0.0
      %661 = vmatpush1.msra.mxu0 0.0
      %662 = vmatprep.subr.mxu0 0.0
      %663 = vmatpush1.msra.mxu0 0.0
      %664 = vmatprep.subr.mxu0 0.0
      %665 = vmatpush1.msra.mxu0 0.0
      %666 = vmatprep.subr.mxu0 0.0
      %667 = vmatpush1.msra.mxu0 0.0
      %668 = vmatprep.subr.mxu0 0.0
      %669 = vmatpush1.msra.mxu0 0.0
      %670 = vmatprep.subr.mxu0 0.0
      %671 = vmatpush1.msra.mxu0 %v635
      %672 = vmatprep.subr.mxu0 0.0
      %673 = vmatpush2.msra.mxu0 0.0
      %674 = vmatprep.subr.mxu0 0.0
      %675 = vmatpush2.msra.mxu0 0.0
      %676 = vmatprep.subr.mxu0 0.0
      %677 = vmatpush2.msra.mxu0 0.0
      %678 = vmatprep.subr.mxu0 0.0
      %679 = vmatpush2.msra.mxu0 0.0
      %680 = vmatprep.subr.mxu0 0.0
      %681 = vmatpush2.msra.mxu0 0.0
      %682 = vmatprep.subr.mxu0 0.0
      %683 = vmatpush2.msra.mxu0 0.0
      %684 = vmatprep.subr.mxu0 0.0
      %685 = vmatpush2.msra.mxu0 0.0
      %686 = vmatprep.subr.mxu0 0.0
      %687 = vmatpush2.msra.mxu0 0.0
      %688 = vmatprep.subr.mxu0 0.0
      %689 = vmatpush2.msra.mxu0 0.0
      %690 = vmatprep.subr.mxu0 0.0
      %691 = vmatpush2.msra.mxu0 0.0
      %692 = vmatprep.subr.mxu0 0.0
      %693 = vmatpush2.msra.mxu0 0.0
      %694 = vmatprep.subr.mxu0 0.0
      %695 = vmatpush2.msra.mxu0 0.0
      %696 = vmatprep.subr.mxu0 0.0
      %697 = vmatpush2.msra.mxu0 0.0
      %698 = vmatprep.subr.mxu0 0.0
      %699 = vmatpush2.msra.mxu0 0.0
      %700 = vmatprep.subr.mxu0 0.0
      %701 = vmatpush2.msra.mxu0 0.0
      %702 = vmatprep.subr.mxu0 0.0
      %703 = vmatpush2.msra.mxu0 0.0
      %704 = vmatprep.mubr.f32.mxu0 0.0
      %705 = vmatmul.mubr.f32.gmra.mxu0 %v638
      %v706 = vpop.f32.mrf.mxu0
      %v707 = vadd.f32 0.0, %v706
      %v708 = vpop.f32.mrf.mxu0
      %709 = vdwg.mxu0
      %710 = vrot.lane.b32.xlu0 %v200, 32
      %v711 = vpop.permute.xlu0 %710
      %712 = vrot.lane.b32.xlu0 %v201, 32
      %v713 = vpop.permute.xlu0 %712
      %v714 = vsel %vm204, %v711, 0
      %v716 = vsel %vm204, %v713, 0
      %718 = vmatprep.subr.mxu0 0.0
      %719 = vmatpush1.xpose.msra.mxu0 0.0
      %720 = vmatprep.subr.mxu0 0.0
      %721 = vmatpush1.xpose.msra.mxu0 0.0
      %722 = vmatprep.subr.mxu0 0.0
      %723 = vmatpush1.xpose.msra.mxu0 0.0
      %724 = vmatprep.subr.mxu0 0.0
      %725 = vmatpush1.xpose.msra.mxu0 0.0
      %726 = vmatprep.subr.mxu0 0.0
      %727 = vmatpush1.xpose.msra.mxu0 0.0
      %728 = vmatprep.subr.mxu0 0.0
      %729 = vmatpush1.xpose.msra.mxu0 0.0
      %730 = vmatprep.subr.mxu0 0.0
      %731 = vmatpush1.xpose.msra.mxu0 0.0
      %732 = vmatprep.subr.mxu0 0.0
      %733 = vmatpush1.xpose.msra.mxu0 0.0
      %734 = vmatprep.subr.mxu0 0.0
      %735 = vmatpush1.xpose.msra.mxu0 0.0
      %736 = vmatprep.subr.mxu0 0.0
      %737 = vmatpush1.xpose.msra.mxu0 0.0
      %738 = vmatprep.subr.mxu0 0.0
      %739 = vmatpush1.xpose.msra.mxu0 0.0
      %740 = vmatprep.subr.mxu0 0.0
      %741 = vmatpush1.xpose.msra.mxu0 0.0
      %742 = vmatprep.subr.mxu0 0.0
      %743 = vmatpush1.xpose.msra.mxu0 0.0
      %744 = vmatprep.subr.mxu0 0.0
      %745 = vmatpush1.xpose.msra.mxu0 0.0
      %746 = vmatprep.subr.mxu0 0.0
      %747 = vmatpush1.xpose.msra.mxu0 0.0
      %748 = vmatprep.subr.mxu0 0.0
      %749 = vmatpush1.xpose.msra.mxu0 %v716
      %750 = vmatprep.subr.mxu0 0.0
      %751 = vmatpush2.xpose.msra.mxu0 0.0
      %752 = vmatprep.subr.mxu0 0.0
      %753 = vmatpush2.xpose.msra.mxu0 0.0
      %754 = vmatprep.subr.mxu0 0.0
      %755 = vmatpush2.xpose.msra.mxu0 0.0
      %756 = vmatprep.subr.mxu0 0.0
      %757 = vmatpush2.xpose.msra.mxu0 0.0
      %758 = vmatprep.subr.mxu0 0.0
      %759 = vmatpush2.xpose.msra.mxu0 0.0
      %760 = vmatprep.subr.mxu0 0.0
      %761 = vmatpush2.xpose.msra.mxu0 0.0
      %762 = vmatprep.subr.mxu0 0.0
      %763 = vmatpush2.xpose.msra.mxu0 0.0
      %764 = vmatprep.subr.mxu0 0.0
      %765 = vmatpush2.xpose.msra.mxu0 0.0
      %766 = vmatprep.subr.mxu0 0.0
      %767 = vmatpush2.xpose.msra.mxu0 0.0
      %768 = vmatprep.subr.mxu0 0.0
      %769 = vmatpush2.xpose.msra.mxu0 0.0
      %770 = vmatprep.subr.mxu0 0.0
      %771 = vmatpush2.xpose.msra.mxu0 0.0
      %772 = vmatprep.subr.mxu0 0.0
      %773 = vmatpush2.xpose.msra.mxu0 0.0
      %774 = vmatprep.subr.mxu0 0.0
      %775 = vmatpush2.xpose.msra.mxu0 0.0
      %776 = vmatprep.subr.mxu0 0.0
      %777 = vmatpush2.xpose.msra.mxu0 0.0
      %778 = vmatprep.subr.mxu0 0.0
      %779 = vmatpush2.xpose.msra.mxu0 0.0
      %780 = vmatprep.subr.mxu0 0.0
      %781 = vmatpush2.xpose.msra.mxu0 0.0
      %782 = vmatprep.mubr.f32.mxu0 0.0
      %783 = vmatmul.mubr.f32.gmra.mxu0 %v714
      %v784 = vpop.f32.mrf.mxu0
      %v785 = vadd.f32 0.0, %v784
      %v786 = vpop.f32.mrf.mxu0
      %787 = vdwg.mxu0
      %v788 = vmul.f32 %v785, 0.17677669
      %v789 = vsel %vm288, %v788, -1e+09
      %v790 = vsel %vm290, %v789, -inf
      %791 = vmax.xlane.f32.xlu0 %v790
      %v792 = vpop.xlane.xlu0 %791
      %v793 = vsub.f32 %v789, %v792
      %v794 = vmul.f32 %v793, 1.442695
      %v795 = vpow.pop %v794
      %v796 = vsel %vm290, %v795, 0.0
      %797 = vadd.xlane.f32.xlu0 %v796
      %v798 = vpop.xlane.xlu0 %797
      %v799 = vrcp.pop %v798
      %v800 = vmul.f32 %v795, %v799
      %801 = vrot.lane.b32.xlu0 %v202, 32
      %v802 = vpop.permute.xlu0 %801
      %v805 = vsel %vm290, %v800, 0
      %807 = vmatprep.subr.mxu0 0.0
      %808 = vmatpush1.msra.mxu0 0.0
      %809 = vmatprep.subr.mxu0 0.0
      %810 = vmatpush1.msra.mxu0 0.0
      %811 = vmatprep.subr.mxu0 0.0
      %812 = vmatpush1.msra.mxu0 0.0
      %813 = vmatprep.subr.mxu0 0.0
      %814 = vmatpush1.msra.mxu0 0.0
      %815 = vmatprep.subr.mxu0 0.0
      %816 = vmatpush1.msra.mxu0 0.0
      %817 = vmatprep.subr.mxu0 0.0
      %818 = vmatpush1.msra.mxu0 0.0
      %819 = vmatprep.subr.mxu0 0.0
      %820 = vmatpush1.msra.mxu0 0.0
      %821 = vmatprep.subr.mxu0 0.0
      %822 = vmatpush1.msra.mxu0 0.0
      %823 = vmatprep.subr.mxu0 0.0
      %824 = vmatpush1.msra.mxu0 0.0
      %825 = vmatprep.subr.mxu0 0.0
      %826 = vmatpush1.msra.mxu0 0.0
      %827 = vmatprep.subr.mxu0 0.0
      %828 = vmatpush1.msra.mxu0 0.0
      %829 = vmatprep.subr.mxu0 0.0
      %830 = vmatpush1.msra.mxu0 0.0
      %831 = vmatprep.subr.mxu0 0.0
      %832 = vmatpush1.msra.mxu0 0.0
      %833 = vmatprep.subr.mxu0 0.0
      %834 = vmatpush1.msra.mxu0 0.0
      %835 = vmatprep.subr.mxu0 0.0
      %836 = vmatpush1.msra.mxu0 0.0
      %837 = vmatprep.subr.mxu0 0.0
      %838 = vmatpush1.msra.mxu0 %v802
      %839 = vmatprep.subr.mxu0 0.0
      %840 = vmatpush2.msra.mxu0 0.0
      %841 = vmatprep.subr.mxu0 0.0
      %842 = vmatpush2.msra.mxu0 0.0
      %843 = vmatprep.subr.mxu0 0.0
      %844 = vmatpush2.msra.mxu0 0.0
      %845 = vmatprep.subr.mxu0 0.0
      %846 = vmatpush2.msra.mxu0 0.0
      %847 = vmatprep.subr.mxu0 0.0
      %848 = vmatpush2.msra.mxu0 0.0
      %849 = vmatprep.subr.mxu0 0.0
      %850 = vmatpush2.msra.mxu0 0.0
      %851 = vmatprep.subr.mxu0 0.0
      %852 = vmatpush2.msra.mxu0 0.0
      %853 = vmatprep.subr.mxu0 0.0
      %854 = vmatpush2.msra.mxu0 0.0
      %855 = vmatprep.subr.mxu0 0.0
      %856 = vmatpush2.msra.mxu0 0.0
      %857 = vmatprep.subr.mxu0 0.0
      %858 = vmatpush2.msra.mxu0 0.0
      %859 = vmatprep.subr.mxu0 0.0
      %860 = vmatpush2.msra.mxu0 0.0
      %861 = vmatprep.subr.mxu0 0.0
      %862 = vmatpush2.msra.mxu0 0.0
      %863 = vmatprep.subr.mxu0 0.0
      %864 = vmatpush2.msra.mxu0 0.0
      %865 = vmatprep.subr.mxu0 0.0
      %866 = vmatpush2.msra.mxu0 0.0
      %867 = vmatprep.subr.mxu0 0.0
      %868 = vmatpush2.msra.mxu0 0.0
      %869 = vmatprep.subr.mxu0 0.0
      %870 = vmatpush2.msra.mxu0 0.0
      %871 = vmatprep.mubr.f32.mxu0 0.0
      %872 = vmatmul.mubr.f32.gmra.mxu0 %v805
      %v873 = vpop.f32.mrf.mxu0
      %v874 = vadd.f32 0.0, %v873
      %v875 = vpop.f32.mrf.mxu0
      %876 = vdwg.mxu0
      %878 = vrot.lane.b32.xlu0 %v540, 32
      %v879 = vpop.permute.xlu0 %878
      %882 = vrot.lane.b32.xlu0 %v707, 64
      %v883 = vpop.permute.xlu0 %882
      %886 = vrot.lane.b32.xlu0 %v874, 96
      %v887 = vpop.permute.xlu0 %886
      %v889 = vsel %vm204, %v372, %v879
      %vm890 = vcmask 523264
      %v891 = vsel %vm890, %v889, %v883
      %vm892 = vcmask 785408
      %v893 = vsel %vm892, %v891, %v887
      %894 = vst [vmem:[%s199] sm:$0xff] %v893
      %p895 = scmp.lt.s32.totalorder %s14, 1
      %s896 = scalar_select %p895, %s14, 1
      %s897 = smul.addr %s896, 8
      %s898 = scalar_lea.vmem %s3, %s897
      // Predicated region
      $region33: #{decoder_layer_forward.29} parent=31 // pred_check
        %p899 = pneg %p110
      $region34: #{decoder_layer_forward.29} parent=31 // pred_check_branch
        %901 = sbr.rel (%p899) target = $region36
      $region35: #{decoder_layer_forward.29} parent=31 // pred_region
        _
      $region36: #{decoder_layer_forward.29} parent=31 // pred_fallthru
        _
    $region32: #{decoder_layer_forward.29} parent=5 // pred_fallthru
      _
    %p902 = scmp.le.s32.totalorder 2, %s9
    // Predicated region
    $region37: #{decoder_layer_forward.29} parent=5 // pred_check
      %p903 = pneg %p902
    $region38: #{decoder_layer_forward.29} parent=5 // pred_check_branch
      %905 = sbr.rel (%p903) target = $region40
    $region39: #{decoder_layer_forward.29} parent=5 // pred_region
      %s906 = ssub.s32 %s9, 2
      // Predicated region
      $region41: #{decoder_layer_forward.29} parent=39 // pred_check
        %p907 = pneg %p116
      $region42: #{decoder_layer_forward.29} parent=39 // pred_check_branch
        %909 = sbr.rel (%p907) target = $region44
      $region43: #{decoder_layer_forward.29} parent=39 // pred_region
        %p910 = scmp.lt.s32.totalorder %s15, 1
        %s911 = scalar_select %p910, %s15, 1
        %s912 = smul.addr %s911, 8
        %s913 = scalar_lea.vmem %s3, %s912
      $region44: #{decoder_layer_forward.29} parent=39 // pred_fallthru
        _
    $region40: #{decoder_layer_forward.29} parent=5 // pred_fallthru
      _
  $region6: #{decoder_layer_forward.29} parent=0 // loop_footer
    %s13 = sadd.s32 1, %s9
  $region7: #{decoder_layer_forward.29} parent=0 // loop_footer_branch
    %8 = sbr.rel target = $region3
  $region8: #{decoder_layer_forward.29} parent=0 // loop_exit
    _

// kernel: decoder_layer_forward.31
$region0: #{decoder_layer_forward.31}
  #allocation0 [shape = 'u32[]', space=smem, size = 0x4, offset = 0x4, fixed_abs, tag = 'smem constant byte address 0x4 - core index']
  #allocation1 [shape = 'u32[144,128]{1,0:T(1,128)}', space=vmem, size = 0x12000, scoped, tag = 'internal scratch']
  #allocation2 [shape = 'f32[16,128]{1,0:T(8,128)}', space=vmem, size = 0x2000, scoped, tag = 'scratch operand']
  #allocation3 [shape = 'f32[16,128]{1,0:T(8,128)}', space=vmem, size = 0x2000, scoped, tag = 'scratch operand']
  #allocation4 [shape = 'f32[16,128]{1,0:T(8,128)}', space=vmem, size = 0x2000, scoped, tag = 'scratch operand']
  %s0 = inlined_call_operand.vmem [shape: f32[16,128], index: 0, kind: input, shape index: {}]
  %s1 = inlined_call_operand.vmem [shape: f32[16,128], index: 1, kind: input, shape index: {}]
  %s2 = inlined_call_operand.vmem [shape: f32[16,128], index: 2, kind: input, shape index: {}]
  %s3 = inlined_call_operand.vmem [shape: f32[16,128], index: 3, kind: input, shape index: {}]
  %s4 = inlined_call_operand.vmem [shape: f32[1,128], index: 4, kind: input, shape index: {}]
  %s5 = inlined_call_operand.vmem [shape: f32[1,128], index: 5, kind: input, shape index: {}]
  %s6 = inlined_call_operand.vmem [shape: f32[128,256], index: 6, kind: input, shape index: {}]
  %s7 = inlined_call_operand.vmem [shape: f32[1,256], index: 7, kind: input, shape index: {}]
  %s8 = inlined_call_operand.vmem [shape: f32[256,128], index: 8, kind: input, shape index: {}]
  %s9 = inlined_call_operand.vmem [shape: f32[1,128], index: 9, kind: input, shape index: {}]
  %s10 = inlined_call_operand.hbm [shape: f32[16,128], index: 10, kind: output, shape index: {}]
  %s11 = sld [smem:[#allocation0]]
  $region58: #{decoder_layer_forward.31} parent=0
    _
  %s13 = ssub.s32 1, %s11
  %s14 = scalar_select 0, %s13, %s11
  $region1: #{decoder_layer_forward.31} parent=0
    #allocation5 [shape = 'u8[8192]{0}', space=vmem, size = 0x2000, scoped, tag = 'output window, operand 0, single buffered']
    #allocation6 [shape = 's32[1]{0}', space=sflag, size = 0x4, scoped, tag = 'scoped memory for decoder_layer_forward.31']
    %15 = vsyncpa [#allocation6], 0
    // Predicated region
    $region2: #{decoder_layer_forward.31} parent=1 // pred_check
      _
    $region3: #{decoder_layer_forward.31} parent=1 // pred_check_branch
      %17 = sbr.rel (0) target = $region5
    $region4: #{decoder_layer_forward.31} parent=1 // pred_region
      _
    $region5: #{decoder_layer_forward.31} parent=1 // pred_fallthru
      _
    // Predicated region
    $region6: #{decoder_layer_forward.31} parent=1 // pred_check
      _
    $region7: #{decoder_layer_forward.31} parent=1 // pred_check_branch
      %19 = sbr.rel (0) target = $region9
    $region8: #{decoder_layer_forward.31} parent=1 // pred_region
      _
    $region9: #{decoder_layer_forward.31} parent=1 // pred_fallthru
      _
    // Predicated region
    $region10: #{decoder_layer_forward.31} parent=1 // pred_check
      _
    $region11: #{decoder_layer_forward.31} parent=1 // pred_check_branch
      %21 = sbr.rel (0) target = $region13
    $region12: #{decoder_layer_forward.31} parent=1 // pred_region
      _
    $region13: #{decoder_layer_forward.31} parent=1 // pred_fallthru
      _
    // Predicated region
    $region14: #{decoder_layer_forward.31} parent=1 // pred_check
      _
    $region15: #{decoder_layer_forward.31} parent=1 // pred_check_branch
      %23 = sbr.rel (0) target = $region17
    $region16: #{decoder_layer_forward.31} parent=1 // pred_region
      _
    $region17: #{decoder_layer_forward.31} parent=1 // pred_fallthru
      _
    // Predicated region
    $region18: #{decoder_layer_forward.31} parent=1 // pred_check
      _
    $region19: #{decoder_layer_forward.31} parent=1 // pred_check_branch
      %25 = sbr.rel (0) target = $region21
    $region20: #{decoder_layer_forward.31} parent=1 // pred_region
      _
    $region21: #{decoder_layer_forward.31} parent=1 // pred_fallthru
      _
    // Predicated region
    $region22: #{decoder_layer_forward.31} parent=1 // pred_check
      _
    $region23: #{decoder_layer_forward.31} parent=1 // pred_check_branch
      %27 = sbr.rel (0) target = $region25
    $region24: #{decoder_layer_forward.31} parent=1 // pred_region
      _
    $region25: #{decoder_layer_forward.31} parent=1 // pred_fallthru
      _
    // Predicated region
    $region26: #{decoder_layer_forward.31} parent=1 // pred_check
      _
    $region27: #{decoder_layer_forward.31} parent=1 // pred_check_branch
      %29 = sbr.rel (0) target = $region29
    $region28: #{decoder_layer_forward.31} parent=1 // pred_region
      _
    $region29: #{decoder_layer_forward.31} parent=1 // pred_fallthru
      _
    // Predicated region
    $region30: #{decoder_layer_forward.31} parent=1 // pred_check
      _
    $region31: #{decoder_layer_forward.31} parent=1 // pred_check_branch
      %31 = sbr.rel (0) target = $region33
    $region32: #{decoder_layer_forward.31} parent=1 // pred_region
      _
    $region33: #{decoder_layer_forward.31} parent=1 // pred_fallthru
      _
    // Predicated region
    $region34: #{decoder_layer_forward.31} parent=1 // pred_check
      _
    $region35: #{decoder_layer_forward.31} parent=1 // pred_check_branch
      %33 = sbr.rel (0) target = $region37
    $region36: #{decoder_layer_forward.31} parent=1 // pred_region
      _
    $region37: #{decoder_layer_forward.31} parent=1 // pred_fallthru
      _
    // Predicated region
    $region38: #{decoder_layer_forward.31} parent=1 // pred_check
      _
    $region39: #{decoder_layer_forward.31} parent=1 // pred_check_branch
      %35 = sbr.rel (0) target = $region41
    $region40: #{decoder_layer_forward.31} parent=1 // pred_region
      _
    $region41: #{decoder_layer_forward.31} parent=1 // pred_fallthru
      _
    %p36 = scmp.eq.s32.totalorder 0, 0
    // Predicated region
    $region42: #{decoder_layer_forward.31} parent=1 // pred_check
      %p37 = pneg %p36
    $region43: #{decoder_layer_forward.31} parent=1 // pred_check_branch
      %39 = sbr.rel (%p37) target = $region45
    $region44: #{decoder_layer_forward.31} parent=1 // pred_region
      %v40 = vld [vmem:[%s3] sm:$0xff]
      %v41 = vld [vmem:[%s3 + $0x8] sm:$0xff]
      %v42 = vld [vmem:[%s0] sm:$0xff]
      %v43 = vld [vmem:[%s0 + $0x8] sm:$0xff]
      %v44 = vld [vmem:[%s1] sm:$0xff]
      %v45 = vld [vmem:[%s1 + $0x8] sm:$0xff]
      %v46 = vld [vmem:[%s2] sm:$0xff]
      %v47 = vld [vmem:[%s2 + $0x8] sm:$0xff]
      %v48 = vmul.f32 %v40, %v42
      %v49 = vmul.f32 %v41, %v43
      %50 = vadd.xlane.f32.xlu0 %v48
      %v51 = vpop.xlane.xlu0 %50
      %52 = vadd.xlane.f32.xlu0 %v49
      %v53 = vpop.xlane.xlu0 %52
      %v54 = vmul.f32 %v51, 0.088388346
      %v55 = vmul.f32 %v53, 0.088388346
      %v56 = vmul.f32 %v40, %v44
      %v57 = vmul.f32 %v41, %v45
      %58 = vadd.xlane.f32.xlu0 %v56
      %v59 = vpop.xlane.xlu0 %58
      %60 = vadd.xlane.f32.xlu0 %v57
      %v61 = vpop.xlane.xlu0 %60
      %v62 = vmul.f32 %v59, 0.088388346
      %v63 = vmul.f32 %v61, 0.088388346
      %v64 = vmul.f32 %v40, %v46
      %v65 = vmul.f32 %v41, %v47
      %66 = vadd.xlane.f32.xlu0 %v64
      %v67 = vpop.xlane.xlu0 %66
      %68 = vadd.xlane.f32.xlu0 %v65
      %v69 = vpop.xlane.xlu0 %68
      %v70 = vmul.f32 %v67, 0.088388346
      %v71 = vmul.f32 %v69, 0.088388346
      %v72 = vmax.f32 %v54, %v62
      %v73 = vmax.f32 %v55, %v63
      %v74 = vmax.f32 %v72, %v70
      %v75 = vmax.f32 %v73, %v71
      %v76 = vsub.f32 %v54, %v74
      %v77 = vsub.f32 %v55, %v75
      %v78 = vmul.f32 %v76, 1.442695
      %v79 = vpow.pop %v78
      %v80 = vmul.f32 %v77, 1.442695
      %v81 = vpow.pop %v80
      %v82 = vsub.f32 %v62, %v74
      %v83 = vsub.f32 %v63, %v75
      %v84 = vmul.f32 %v82, 1.442695
      %v85 = vpow.pop %v84
      %v86 = vmul.f32 %v83, 1.442695
      %v87 = vpow.pop %v86
      %v88 = vsub.f32 %v70, %v74
      %v89 = vsub.f32 %v71, %v75
      %v90 = vmul.f32 %v88, 1.442695
      %v91 = vpow.pop %v90
      %v92 = vmul.f32 %v89, 1.442695
      %v93 = vpow.pop %v92
      %v94 = vadd.f32 %v79, %v85
      %v95 = vadd.f32 %v81, %v87
      %v96 = vadd.f32 %v94, %v91
      %v97 = vadd.f32 %v95, %v93
      %v98 = vrcp.pop %v96
      %v99 = vmul.f32 1.0, %v98
      %v100 = vrcp.pop %v97
      %v101 = vmul.f32 1.0, %v100
      %v102 = vmul.f32 %v79, %v99
      %v103 = vmul.f32 %v81, %v101
      %v104 = vmul.f32 %v42, %v102
      %v105 = vmul.f32 %v43, %v103
      %v106 = vmul.f32 %v85, %v99
      %v107 = vmul.f32 %v87, %v101
      %v108 = vmul.f32 %v44, %v106
      %v109 = vmul.f32 %v45, %v107
      %v110 = vadd.f32 %v104, %v108
      %v111 = vadd.f32 %v105, %v109
      %v112 = vmul.f32 %v91, %v99
      %v113 = vmul.f32 %v93, %v101
      %v114 = vmul.f32 %v46, %v112
      %v115 = vmul.f32 %v47, %v113
      %v116 = vadd.f32 %v110, %v114
      %v117 = vadd.f32 %v111, %v115
      %118 = vst [vmem:[#allocation3] sm:$0xff] %v116
      %119 = vst [vmem:[#allocation3 + $0x8] sm:$0xff] %v117
      %v120 = vld [vmem:[%s4] sm:$0x1]
      %v121 = vld [vmem:[%s5] sm:$0x1]
      %122 = vadd.xlane.f32.xlu0 %v116
      %v123 = vpop.xlane.xlu0 %122
      %124 = vadd.xlane.f32.xlu0 %v117
      %v125 = vpop.xlane.xlu0 %124
      %v126 = vrcp.pop 128.0
      %v127 = vmul.f32 %v123, %v126
      %v128 = vmul.f32 %v125, %v126
      %v129 = vsub.f32 %v116, %v127
      %v130 = vsub.f32 %v117, %v128
      %v131 = vmul.f32 %v129, %v129
      %v132 = vmul.f32 %v130, %v130
      %133 = vadd.xlane.f32.xlu0 %v131
      %v134 = vpop.xlane.xlu0 %133
      %135 = vadd.xlane.f32.xlu0 %v132
      %v136 = vpop.xlane.xlu0 %135
      %v137 = vrcp.pop 127.0
      %v138 = vmul.f32 %v134, %v137
      %v139 = vmul.f32 %v136, %v137
      %v141 = vlaneseq
      %v142 = vshrl.u32 %v141, 7
      %v143 = vsub.s32 0, %v142
      %v144 = vrot.slane %v120, %v143
      %v146 = vmul.f32 %v144, %v129
      %v147 = vmul.f32 %v144, %v130
      %v148 = vrsqrt.pop %v138
      %v149 = vmul.f32 %v138, %v148
      %vm150 = vcmp.eq.f32.partialorder %v138, inf
      %v151 = vsel %vm150, %v138, %v149
      %vm152 = vcmp.eq.f32.partialorder %v138, 0.0
      %v153 = vand.u32 %v138, 2147483648
      %v154 = vsel %vm152, %v153, %v151
      %v155 = vrsqrt.pop %v139
      %v156 = vmul.f32 %v139, %v155
      %vm157 = vcmp.eq.f32.partialorder %v139, inf
      %v158 = vsel %vm157, %v139, %v156
      %vm159 = vcmp.eq.f32.partialorder %v139, 0.0
      %v160 = vand.u32 %v139, 2147483648
      %v161 = vsel %vm159, %v160, %v158
      %v162 = vadd.f32 %v154, 1e-06
      %v163 = vadd.f32 %v161, 1e-06
      %v164 = vrcp.pop %v162
      %v165 = vmul.f32 %v146, %v164
      %v166 = vrcp.pop %v163
      %v167 = vmul.f32 %v147, %v166
      %v169 = vlaneseq
      %v170 = vshrl.u32 %v169, 7
      %v171 = vsub.s32 0, %v170
      %v172 = vrot.slane %v121, %v171
      %v174 = vadd.f32 %v165, %v172
      %v175 = vadd.f32 %v167, %v172
      %176 = vst [vmem:[#allocation2] sm:$0xff] %v174
      %177 = vst [vmem:[#allocation2 + $0x8] sm:$0xff] %v175
      %178 = vst [vmem:[#allocation4] sm:$0xff] 0.0
      %179 = vst [vmem:[#allocation4 + $0x8] sm:$0xff] 0.0
    $region45: #{decoder_layer_forward.31} parent=1 // pred_fallthru
      _
    %v180 = vld [vmem:[#allocation2] sm:$0xff]
    %v181 = vld [vmem:[#allocation2 + $0x8] sm:$0xff]
    %v182 = vld [vmem:[%s6] sm:$0xff]
    %v183 = vld [vmem:[%s6 + $0x8] sm:$0xff]
    %v184 = vld [vmem:[%s6 + $0x10] sm:$0xff]
    %v185 = vld [vmem:[%s6 + $0x18] sm:$0xff]
    %v186 = vld [vmem:[%s6 + $0x20] sm:$0xff]
    %v187 = vld [vmem:[%s6 + $0x28] sm:$0xff]
    %v188 = vld [vmem:[%s6 + $0x30] sm:$0xff]
    %v189 = vld [vmem:[%s6 + $0x38] sm:$0xff]
    %v190 = vld [vmem:[%s6 + $0x40] sm:$0xff]
    %v191 = vld [vmem:[%s6 + $0x48] sm:$0xff]
    %v192 = vld [vmem:[%s6 + $0x50] sm:$0xff]
    %v193 = vld [vmem:[%s6 + $0x58] sm:$0xff]
    %v194 = vld [vmem:[%s6 + $0x60] sm:$0xff]
    %v195 = vld [vmem:[%s6 + $0x68] sm:$0xff]
    %v196 = vld [vmem:[%s6 + $0x70] sm:$0xff]
    %v197 = vld [vmem:[%s6 + $0x78] sm:$0xff]
    %v198 = vld [vmem:[%s6 + $0x80] sm:$0xff]
    %v199 = vld [vmem:[%s6 + $0x88] sm:$0xff]
    %v200 = vld [vmem:[%s6 + $0x90] sm:$0xff]
    %v201 = vld [vmem:[%s6 + $0x98] sm:$0xff]
    %v202 = vld [vmem:[%s6 + $0xa0] sm:$0xff]
    %v203 = vld [vmem:[%s6 + $0xa8] sm:$0xff]
    %v204 = vld [vmem:[%s6 + $0xb0] sm:$0xff]
    %v205 = vld [vmem:[%s6 + $0xb8] sm:$0xff]
    %v206 = vld [vmem:[%s6 + $0xc0] sm:$0xff]
    %v207 = vld [vmem:[%s6 + $0xc8] sm:$0xff]
    %v208 = vld [vmem:[%s6 + $0xd0] sm:$0xff]
    %v209 = vld [vmem:[%s6 + $0xd8] sm:$0xff]
    %v210 = vld [vmem:[%s6 + $0xe0] sm:$0xff]
    %v211 = vld [vmem:[%s6 + $0xe8] sm:$0xff]
    %v212 = vld [vmem:[%s6 + $0xf0] sm:$0xff]
    %v213 = vld [vmem:[%s6 + $0xf8] sm:$0xff]
    %v214 = vld [vmem:[%s7] sm:$0x3]
    %v216 = vlaneseq
    %v217 = vshrl.u32 %v216, 7
    %v218 = vsub.s32 0, %v217
    %v219 = vrot.slane %v214, %v218
    %v220 = vlaneseq
    %v221 = vshrl.u32 %v220, 7
    %v222 = vsub.s32 1, %v221
    %v223 = vrot.slane %v214, %v222
    %226 = vmatprep.subr.mxu0 %v213
    %227 = vmatpush1.msra.mxu0 %v212
    %228 = vmatprep.subr.mxu0 %v211
    %229 = vmatpush1.msra.mxu0 %v210
    %230 = vmatprep.subr.mxu0 %v209
    %231 = vmatpush1.msra.mxu0 %v208
    %232 = vmatprep.subr.mxu0 %v207
    %233 = vmatpush1.msra.mxu0 %v206
    %234 = vmatprep.subr.mxu0 %v205
    %235 = vmatpush1.msra.mxu0 %v204
    %236 = vmatprep.subr.mxu0 %v203
    %237 = vmatpush1.msra.mxu0 %v202
    %238 = vmatprep.subr.mxu0 %v201
    %239 = vmatpush1.msra.mxu0 %v200
    %240 = vmatprep.subr.mxu0 %v199
    %241 = vmatpush1.msra.mxu0 %v198
    %242 = vmatprep.subr.mxu0 %v197
    %243 = vmatpush1.msra.mxu0 %v196
    %244 = vmatprep.subr.mxu0 %v195
    %245 = vmatpush1.msra.mxu0 %v194
    %246 = vmatprep.subr.mxu0 %v193
    %247 = vmatpush1.msra.mxu0 %v192
    %248 = vmatprep.subr.mxu0 %v191
    %249 = vmatpush1.msra.mxu0 %v190
    %250 = vmatprep.subr.mxu0 %v189
    %251 = vmatpush1.msra.mxu0 %v188
    %252 = vmatprep.subr.mxu0 %v187
    %253 = vmatpush1.msra.mxu0 %v186
    %254 = vmatprep.subr.mxu0 %v185
    %255 = vmatpush1.msra.mxu0 %v184
    %256 = vmatprep.subr.mxu0 %v183
    %257 = vmatpush1.msra.mxu0 %v182
    %258 = vmatprep.subr.mxu0 0.0
    %259 = vmatpush2.msra.mxu0 0.0
    %260 = vmatprep.subr.mxu0 0.0
    %261 = vmatpush2.msra.mxu0 0.0
    %262 = vmatprep.subr.mxu0 0.0
    %263 = vmatpush2.msra.mxu0 0.0
    %264 = vmatprep.subr.mxu0 0.0
    %265 = vmatpush2.msra.mxu0 0.0
    %266 = vmatprep.subr.mxu0 0.0
    %267 = vmatpush2.msra.mxu0 0.0
    %268 = vmatprep.subr.mxu0 0.0
    %269 = vmatpush2.msra.mxu0 0.0
    %270 = vmatprep.subr.mxu0 0.0
    %271 = vmatpush2.msra.mxu0 0.0
    %272 = vmatprep.subr.mxu0 0.0
    %273 = vmatpush2.msra.mxu0 0.0
    %274 = vmatprep.subr.mxu0 0.0
    %275 = vmatpush2.msra.mxu0 0.0
    %276 = vmatprep.subr.mxu0 0.0
    %277 = vmatpush2.msra.mxu0 0.0
    %278 = vmatprep.subr.mxu0 0.0
    %279 = vmatpush2.msra.mxu0 0.0
    %280 = vmatprep.subr.mxu0 0.0
    %281 = vmatpush2.msra.mxu0 0.0
    %282 = vmatprep.subr.mxu0 0.0
    %283 = vmatpush2.msra.mxu0 0.0
    %284 = vmatprep.subr.mxu0 0.0
    %285 = vmatpush2.msra.mxu0 0.0
    %286 = vmatprep.subr.mxu0 0.0
    %287 = vmatpush2.msra.mxu0 0.0
    %288 = vmatprep.subr.mxu0 0.0
    %289 = vmatpush2.msra.mxu0 0.0
    %290 = vmatprep.mubr.f32.mxu0 0.0
    %291 = vmatmul.mubr.f32.gmra.mxu0 %v180
    %v292 = vpop.f32.mrf.mxu0
    %v293 = vadd.f32 %v219, %v292
    %v294 = vpop.f32.mrf.mxu0
    %v295 = vadd.f32 %v223, %v294
    %296 = vmatprep.mubr.f32.mxu0 0.0
    %297 = vmatmul.mubr.f32.gmra.mxu0 %v181
    %v298 = vpop.f32.mrf.mxu0
    %v299 = vadd.f32 %v219, %v298
    %v300 = vpop.f32.mrf.mxu0
    %v301 = vadd.f32 %v223, %v300
    %302 = vdwg.mxu0
    %v303 = vmax.f32 %v293, 0.0
    %v304 = vmax.f32 %v295, 0.0
    %v305 = vmax.f32 %v299, 0.0
    %v306 = vmax.f32 %v301, 0.0
    %v307 = vld [vmem:[#allocation4] sm:$0xff]
    %v308 = vld [vmem:[#allocation4 + $0x8] sm:$0xff]
    %v309 = vld [vmem:[%s8] sm:$0xff]
    %v310 = vld [vmem:[%s8 + $0x8] sm:$0xff]
    %v311 = vld [vmem:[%s8 + $0x10] sm:$0xff]
    %v312 = vld [vmem:[%s8 + $0x18] sm:$0xff]
    %v313 = vld [vmem:[%s8 + $0x20] sm:$0xff]
    %v314 = vld [vmem:[%s8 + $0x28] sm:$0xff]
    %v315 = vld [vmem:[%s8 + $0x30] sm:$0xff]
    %v316 = vld [vmem:[%s8 + $0x38] sm:$0xff]
    %v317 = vld [vmem:[%s8 + $0x40] sm:$0xff]
    %v318 = vld [vmem:[%s8 + $0x48] sm:$0xff]
    %v319 = vld [vmem:[%s8 + $0x50] sm:$0xff]
    %v320 = vld [vmem:[%s8 + $0x58] sm:$0xff]
    %v321 = vld [vmem:[%s8 + $0x60] sm:$0xff]
    %v322 = vld [vmem:[%s8 + $0x68] sm:$0xff]
    %v323 = vld [vmem:[%s8 + $0x70] sm:$0xff]
    %v324 = vld [vmem:[%s8 + $0x78] sm:$0xff]
    %v325 = vld [vmem:[%s8 + $0x80] sm:$0xff]
    %v326 = vld [vmem:[%s8 + $0x88] sm:$0xff]
    %v327 = vld [vmem:[%s8 + $0x90] sm:$0xff]
    %v328 = vld [vmem:[%s8 + $0x98] sm:$0xff]
    %v329 = vld [vmem:[%s8 + $0xa0] sm:$0xff]
    %v330 = vld [vmem:[%s8 + $0xa8] sm:$0xff]
    %v331 = vld [vmem:[%s8 + $0xb0] sm:$0xff]
    %v332 = vld [vmem:[%s8 + $0xb8] sm:$0xff]
    %v333 = vld [vmem:[%s8 + $0xc0] sm:$0xff]
    %v334 = vld [vmem:[%s8 + $0xc8] sm:$0xff]
    %v335 = vld [vmem:[%s8 + $0xd0] sm:$0xff]
    %v336 = vld [vmem:[%s8 + $0xd8] sm:$0xff]
    %v337 = vld [vmem:[%s8 + $0xe0] sm:$0xff]
    %v338 = vld [vmem:[%s8 + $0xe8] sm:$0xff]
    %v339 = vld [vmem:[%s8 + $0xf0] sm:$0xff]
    %v340 = vld [vmem:[%s8 + $0xf8] sm:$0xff]
    %341 = vmatprep.subr.mxu0 0.0
    %342 = vmatpush1.msra.mxu0 %v324
    %343 = vmatprep.subr.mxu0 0.0
    %344 = vmatpush1.msra.mxu0 %v323
    %345 = vmatprep.subr.mxu0 0.0
    %346 = vmatpush1.msra.mxu0 %v322
    %347 = vmatprep.subr.mxu0 0.0
    %348 = vmatpush1.msra.mxu0 %v321
    %349 = vmatprep.subr.mxu0 0.0
    %350 = vmatpush1.msra.mxu0 %v320
    %351 = vmatprep.subr.mxu0 0.0
    %352 = vmatpush1.msra.mxu0 %v319
    %353 = vmatprep.subr.mxu0 0.0
    %354 = vmatpush1.msra.mxu0 %v318
    %355 = vmatprep.subr.mxu0 0.0
    %356 = vmatpush1.msra.mxu0 %v317
    %357 = vmatprep.subr.mxu0 0.0
    %358 = vmatpush1.msra.mxu0 %v316
    %359 = vmatprep.subr.mxu0 0.0
    %360 = vmatpush1.msra.mxu0 %v315
    %361 = vmatprep.subr.mxu0 0.0
    %362 = vmatpush1.msra.mxu0 %v314
    %363 = vmatprep.subr.mxu0 0.0
    %364 = vmatpush1.msra.mxu0 %v313
    %365 = vmatprep.subr.mxu0 0.0
    %366 = vmatpush1.msra.mxu0 %v312
    %367 = vmatprep.subr.mxu0 0.0
    %368 = vmatpush1.msra.mxu0 %v311
    %369 = vmatprep.subr.mxu0 0.0
    %370 = vmatpush1.msra.mxu0 %v310
    %371 = vmatprep.subr.mxu0 0.0
    %372 = vmatpush1.msra.mxu0 %v309
    %373 = vmatprep.subr.mxu0 0.0
    %374 = vmatpush2.msra.mxu0 %v340
    %375 = vmatprep.subr.mxu0 0.0
    %376 = vmatpush2.msra.mxu0 %v339
    %377 = vmatprep.subr.mxu0 0.0
    %378 = vmatpush2.msra.mxu0 %v338
    %379 = vmatprep.subr.mxu0 0.0
    %380 = vmatpush2.msra.mxu0 %v337
    %381 = vmatprep.subr.mxu0 0.0
    %382 = vmatpush2.msra.mxu0 %v336
    %383 = vmatprep.subr.mxu0 0.0
    %384 = vmatpush2.msra.mxu0 %v335
    %385 = vmatprep.subr.mxu0 0.0
    %386 = vmatpush2.msra.mxu0 %v334
    %387 = vmatprep.subr.mxu0 0.0
    %388 = vmatpush2.msra.mxu0 %v333
    %389 = vmatprep.subr.mxu0 0.0
    %390 = vmatpush2.msra.mxu0 %v332
    %391 = vmatprep.subr.mxu0 0.0
    %392 = vmatpush2.msra.mxu0 %v331
    %393 = vmatprep.subr.mxu0 0.0
    %394 = vmatpush2.msra.mxu0 %v330
    %395 = vmatprep.subr.mxu0 0.0
    %396 = vmatpush2.msra.mxu0 %v329
    %397 = vmatprep.subr.mxu0 0.0
    %398 = vmatpush2.msra.mxu0 %v328
    %399 = vmatprep.subr.mxu0 0.0
    %400 = vmatpush2.msra.mxu0 %v327
    %401 = vmatprep.subr.mxu0 0.0
    %402 = vmatpush2.msra.mxu0 %v326
    %403 = vmatprep.subr.mxu0 0.0
    %404 = vmatpush2.msra.mxu0 %v325
    %405 = vmatprep.mubr.f32.mxu0 %v304
    %406 = vmatmul.mubr.f32.gmra.mxu0 %v303
    %v407 = vpop.f32.mrf.mxu0
    %v408 = vadd.f32 0.0, %v407
    %v409 = vpop.f32.mrf.mxu0
    %410 = vmatprep.mubr.f32.mxu0 %v306
    %411 = vmatmul.mubr.f32.gmra.mxu0 %v305
    %v412 = vpop.f32.mrf.mxu0
    %v413 = vadd.f32 0.0, %v412
    %v414 = vpop.f32.mrf.mxu0
    %415 = vdwg.mxu0
    %v416 = vadd.f32 %v307, %v408
    %v417 = vadd.f32 %v308, %v413
    %418 = vst [vmem:[#allocation4] sm:$0xff] %v416
    %419 = vst [vmem:[#allocation4 + $0x8] sm:$0xff] %v417
    // Predicated region
    $region46: #{decoder_layer_forward.31} parent=1 // pred_check
      %p420 = pneg %p36
    $region47: #{decoder_layer_forward.31} parent=1 // pred_check_branch
      %422 = sbr.rel (%p420) target = $region49
    $region48: #{decoder_layer_forward.31} parent=1 // pred_region
      %v423 = vld [vmem:[#allocation4] sm:$0xff]
      %v424 = vld [vmem:[#allocation4 + $0x8] sm:$0xff]
      %v425 = vld [vmem:[%s9] sm:$0x1]
      %v427 = vlaneseq
      %v428 = vshrl.u32 %v427, 7
      %v429 = vsub.s32 0, %v428
      %v430 = vrot.slane %v425, %v429
      %v432 = vadd.f32 %v423, %v430
      %v433 = vadd.f32 %v424, %v430
      %v434 = vld [vmem:[#allocation3] sm:$0xff]
      %v435 = vld [vmem:[#allocation3 + $0x8] sm:$0xff]
      %v436 = vadd.f32 %v432, %v434
      %v437 = vadd.f32 %v433, %v435
      %438 = vst [vmem:[#allocation5] sm:$0xff] %v436
      %439 = vst [vmem:[#allocation5 + $0x8] sm:$0xff] %v437
    $region49: #{decoder_layer_forward.31} parent=1 // pred_fallthru
      _
    // Predicated region
    $region50: #{decoder_layer_forward.31} parent=1 // pred_check
      _
    $region51: #{decoder_layer_forward.31} parent=1 // pred_check_branch
      %441 = sbr.rel (0) target = $region53
    $region52: #{decoder_layer_forward.31} parent=1 // pred_region
      %s443 = ssub.s32 256, 256
      %444 = vsyncadd [#allocation6], %s443
      %s445 = sshll.u32 [#allocation5], 4
      %s446 = int_to_ptr.vmem [resolvable:$true] %s445
      %451 = dma.vmem_to_hbm [thread:$0]  %s446, 256, %s10, [#allocation6], 128, 128, 8
    $region53: #{decoder_layer_forward.31} parent=1 // pred_fallthru
      _
    // Predicated region
    $region54: #{decoder_layer_forward.31} parent=1 // pred_check
      _
    $region55: #{decoder_layer_forward.31} parent=1 // pred_check_branch
      %453 = sbr.rel (0) target = $region57
    $region56: #{decoder_layer_forward.31} parent=1 // pred_region
      %454 = dma.done [#allocation6], 256
    $region57: #{decoder_layer_forward.31} parent=1 // pred_fallthru
      _
    %455 = vsyncpa [#allocation6], 1

// kernel: decoder_layer_forward.28
$region0: #{decoder_layer_forward.28}
  #allocation0 [shape = 'u32[]', space=smem, size = 0x4, offset = 0x4, fixed_abs, tag = 'smem constant byte address 0x4 - core index']
  #allocation1 [shape = 'u32[144,128]{1,0:T(1,128)}', space=vmem, size = 0x12000, scoped, tag = 'internal scratch']
  %s0 = inlined_call_operand.vmem [shape: f32[16,128], index: 0, kind: input, shape index: {}]
  %s1 = inlined_call_operand.vmem [shape: f32[128,256], index: 1, kind: input, shape index: {}]
  %s2 = inlined_call_operand.vmem [shape: f32[1,256], index: 2, kind: input, shape index: {}]
  %s3 = inlined_call_operand.vmem [shape: f32[16,256], index: 3, kind: output, shape index: {}]
  %s4 = sld [smem:[#allocation0]]
  $region22: #{decoder_layer_forward.28} parent=0
    _
  %s6 = ssub.s32 1, %s4
  %s7 = scalar_select 0, %s6, %s4
  // Predicated region
  $region2: #{decoder_layer_forward.28} parent=0 // pred_check
    _
  $region3: #{decoder_layer_forward.28} parent=0 // pred_check_branch
    %9 = sbr.rel (0) target = $region5
  $region4: #{decoder_layer_forward.28} parent=0 // pred_region
    _
  $region5: #{decoder_layer_forward.28} parent=0 // pred_fallthru
    _
  // Predicated region
  $region6: #{decoder_layer_forward.28} parent=0 // pred_check
    _
  $region7: #{decoder_layer_forward.28} parent=0 // pred_check_branch
    %11 = sbr.rel (0) target = $region9
  $region8: #{decoder_layer_forward.28} parent=0 // pred_region
    _
  $region9: #{decoder_layer_forward.28} parent=0 // pred_fallthru
    _
  // Predicated region
  $region10: #{decoder_layer_forward.28} parent=0 // pred_check
    _
  $region11: #{decoder_layer_forward.28} parent=0 // pred_check_branch
    %13 = sbr.rel (0) target = $region13
  $region12: #{decoder_layer_forward.28} parent=0 // pred_region
    _
  $region13: #{decoder_layer_forward.28} parent=0 // pred_fallthru
    _
  %v14 = vld [vmem:[%s0] sm:$0xff]
  %v15 = vld [vmem:[%s0 + $0x8] sm:$0xff]
  %v16 = vld [vmem:[%s1] sm:$0xff]
  %v17 = vld [vmem:[%s1 + $0x8] sm:$0xff]
  %v18 = vld [vmem:[%s1 + $0x10] sm:$0xff]
  %v19 = vld [vmem:[%s1 + $0x18] sm:$0xff]
  %v20 = vld [vmem:[%s1 + $0x20] sm:$0xff]
  %v21 = vld [vmem:[%s1 + $0x28] sm:$0xff]
  %v22 = vld [vmem:[%s1 + $0x30] sm:$0xff]
  %v23 = vld [vmem:[%s1 + $0x38] sm:$0xff]
  %v24 = vld [vmem:[%s1 + $0x40] sm:$0xff]
  %v25 = vld [vmem:[%s1 + $0x48] sm:$0xff]
  %v26 = vld [vmem:[%s1 + $0x50] sm:$0xff]
  %v27 = vld [vmem:[%s1 + $0x58] sm:$0xff]
  %v28 = vld [vmem:[%s1 + $0x60] sm:$0xff]
  %v29 = vld [vmem:[%s1 + $0x68] sm:$0xff]
  %v30 = vld [vmem:[%s1 + $0x70] sm:$0xff]
  %v31 = vld [vmem:[%s1 + $0x78] sm:$0xff]
  %v32 = vld [vmem:[%s1 + $0x80] sm:$0xff]
  %v33 = vld [vmem:[%s1 + $0x88] sm:$0xff]
  %v34 = vld [vmem:[%s1 + $0x90] sm:$0xff]
  %v35 = vld [vmem:[%s1 + $0x98] sm:$0xff]
  %v36 = vld [vmem:[%s1 + $0xa0] sm:$0xff]
  %v37 = vld [vmem:[%s1 + $0xa8] sm:$0xff]
  %v38 = vld [vmem:[%s1 + $0xb0] sm:$0xff]
  %v39 = vld [vmem:[%s1 + $0xb8] sm:$0xff]
  %v40 = vld [vmem:[%s1 + $0xc0] sm:$0xff]
  %v41 = vld [vmem:[%s1 + $0xc8] sm:$0xff]
  %v42 = vld [vmem:[%s1 + $0xd0] sm:$0xff]
  %v43 = vld [vmem:[%s1 + $0xd8] sm:$0xff]
  %v44 = vld [vmem:[%s1 + $0xe0] sm:$0xff]
  %v45 = vld [vmem:[%s1 + $0xe8] sm:$0xff]
  %v46 = vld [vmem:[%s1 + $0xf0] sm:$0xff]
  %v47 = vld [vmem:[%s1 + $0xf8] sm:$0xff]
  %v48 = vld [vmem:[%s2] sm:$0x3]
  %v50 = vlaneseq
  %v51 = vshrl.u32 %v50, 7
  %v52 = vsub.s32 0, %v51
  %v53 = vrot.slane %v48, %v52
  %v54 = vlaneseq
  %v55 = vshrl.u32 %v54, 7
  %v56 = vsub.s32 1, %v55
  %v57 = vrot.slane %v48, %v56
  %60 = vmatprep.subr.mxu0 %v47
  %61 = vmatpush1.msra.mxu0 %v46
  %62 = vmatprep.subr.mxu0 %v45
  %63 = vmatpush1.msra.mxu0 %v44
  %64 = vmatprep.subr.mxu0 %v43
  %65 = vmatpush1.msra.mxu0 %v42
  %66 = vmatprep.subr.mxu0 %v41
  %67 = vmatpush1.msra.mxu0 %v40
  %68 = vmatprep.subr.mxu0 %v39
  %69 = vmatpush1.msra.mxu0 %v38
  %70 = vmatprep.subr.mxu0 %v37
  %71 = vmatpush1.msra.mxu0 %v36
  %72 = vmatprep.subr.mxu0 %v35
  %73 = vmatpush1.msra.mxu0 %v34
  %74 = vmatprep.subr.mxu0 %v33
  %75 = vmatpush1.msra.mxu0 %v32
  %76 = vmatprep.subr.mxu0 %v31
  %77 = vmatpush1.msra.mxu0 %v30
  %78 = vmatprep.subr.mxu0 %v29
  %79 = vmatpush1.msra.mxu0 %v28
  %80 = vmatprep.subr.mxu0 %v27
  %81 = vmatpush1.msra.mxu0 %v26
  %82 = vmatprep.subr.mxu0 %v25
  %83 = vmatpush1.msra.mxu0 %v24
  %84 = vmatprep.subr.mxu0 %v23
  %85 = vmatpush1.msra.mxu0 %v22
  %86 = vmatprep.subr.mxu0 %v21
  %87 = vmatpush1.msra.mxu0 %v20
  %88 = vmatprep.subr.mxu0 %v19
  %89 = vmatpush1.msra.mxu0 %v18
  %90 = vmatprep.subr.mxu0 %v17
  %91 = vmatpush1.msra.mxu0 %v16
  %92 = vmatprep.subr.mxu0 0.0
  %93 = vmatpush2.msra.mxu0 0.0
  %94 = vmatprep.subr.mxu0 0.0
  %95 = vmatpush2.msra.mxu0 0.0
  %96 = vmatprep.subr.mxu0 0.0
  %97 = vmatpush2.msra.mxu0 0.0
  %98 = vmatprep.subr.mxu0 0.0
  %99 = vmatpush2.msra.mxu0 0.0
  %100 = vmatprep.subr.mxu0 0.0
  %101 = vmatpush2.msra.mxu0 0.0
  %102 = vmatprep.subr.mxu0 0.0
  %103 = vmatpush2.msra.mxu0 0.0
  %104 = vmatprep.subr.mxu0 0.0
  %105 = vmatpush2.msra.mxu0 0.0
  %106 = vmatprep.subr.mxu0 0.0
  %107 = vmatpush2.msra.mxu0 0.0
  %108 = vmatprep.subr.mxu0 0.0
  %109 = vmatpush2.msra.mxu0 0.0
  %110 = vmatprep.subr.mxu0 0.0
  %111 = vmatpush2.msra.mxu0 0.0
  %112 = vmatprep.subr.mxu0 0.0
  %113 = vmatpush2.msra.mxu0 0.0
  %114 = vmatprep.subr.mxu0 0.0
  %115 = vmatpush2.msra.mxu0 0.0
  %116 = vmatprep.subr.mxu0 0.0
  %117 = vmatpush2.msra.mxu0 0.0
  %118 = vmatprep.subr.mxu0 0.0
  %119 = vmatpush2.msra.mxu0 0.0
  %120 = vmatprep.subr.mxu0 0.0
  %121 = vmatpush2.msra.mxu0 0.0
  %122 = vmatprep.subr.mxu0 0.0
  %123 = vmatpush2.msra.mxu0 0.0
  %124 = vmatprep.mubr.f32.mxu0 0.0
  %125 = vmatmul.mubr.f32.gmra.mxu0 %v14
  %v126 = vpop.f32.mrf.mxu0
  %v127 = vadd.f32 %v53, %v126
  %v128 = vpop.f32.mrf.mxu0
  %v129 = vadd.f32 %v57, %v128
  %130 = vmatprep.mubr.f32.mxu0 0.0
  %131 = vmatmul.mubr.f32.gmra.mxu0 %v15
  %v132 = vpop.f32.mrf.mxu0
  %v133 = vadd.f32 %v53, %v132
  %v134 = vpop.f32.mrf.mxu0
  %v135 = vadd.f32 %v57, %v134
  %136 = vdwg.mxu0
  %137 = vst [vmem:[%s3] sm:$0xff] %v127
  %138 = vst [vmem:[%s3 + $0x8] sm:$0xff] %v129
  %139 = vst [vmem:[%s3 + $0x10] sm:$0xff] %v133
  %140 = vst [vmem:[%s3 + $0x18] sm:$0xff] %v135
  // Predicated region
  $region14: #{decoder_layer_forward.28} parent=0 // pred_check
    _
  $region15: #{decoder_layer_forward.28} parent=0 // pred_check_branch
    %142 = sbr.rel (0) target = $region17
  $region16: #{decoder_layer_forward.28} parent=0 // pred_region
    _
  $region17: #{decoder_layer_forward.28} parent=0 // pred_fallthru
    _
  // Predicated region
  $region18: #{decoder_layer_forward.28} parent=0 // pred_check
    _
  $region19: #{decoder_layer_forward.28} parent=0 // pred_check_branch
    %144 = sbr.rel (0) target = $region21
  $region20: #{decoder_layer_forward.28} parent=0 // pred_region
    _
  $region21: #{decoder_layer_forward.28} parent=0 // pred_fallthru
    _

</llo_original>
